<compile_context>
chip_gen: v7x
topology: tpu7x:2x2x1
jax: 0.10.0
libtpu: 0.0.40
codegen_flags: <defaults>
</compile_context>

<pallas_src>
import functools

import jax
import jax.numpy as jnp
from jax.experimental import pallas as pl
from jax.experimental.pallas import tpu as pltpu

KH = KW = 7
STRIDE = 2
PAD = 2
BN_EPS = 1e-5


# ----------------------------------------------------------------------------
# Pallas kernel: conv-as-matmul + bias (folded) + activation + BatchNorm(eval)
# ----------------------------------------------------------------------------
def _conv_mm_kernel(w_ref, p_ref, ss_ref, o_ref, *, activation):
    """out_T = W(Cout, K+1) @ patches_T(K+1, TM) on the MXU (bf16 in, f32 acc), then
    activation + BatchNorm(eval) affine epilogue in f32.  The conv bias rides along as the
    last weight column multiplying the ones row of the patch matrix."""
    z = jnp.dot(w_ref[...], p_ref[...], preferred_element_type=jnp.float32)  # (Cout, TM) f32
    if activation == "ReLU":
        a = jnp.maximum(z, 0.0)
    elif activation == "Sigmoid":
        a = jax.nn.sigmoid(z)
    else:  # 'tanh'
        a = jnp.tanh(z)
    ss = ss_ref[...]                                    # (Cout, 2) f32: [:,0]=scale [:,1]=shift
    o_ref[...] = (a * ss[:, 0:1] + ss[:, 1:2]).astype(o_ref.dtype)


def _conv_mm_pallas(patches, wb, scale_shift, activation):
    """patches: (K+1, M) bf16 (last row = ones); wb: (Cout, K+1) bf16 (last col = bias);
    scale_shift: (Cout, 2) f32.  Returns (Cout, M) bf16."""
    Kb, M = patches.shape
    Cout = wb.shape[0]

    if M >= 2048:
        # Two lane-aligned tiles: one grid step per v7x TensorCore, only 2 steps on v5e/v6e.
        TM = pl.cdiv(M, 2 * 128) * 128
        Mp = 2 * TM
        grid = (2,)
        if Mp != M:
            patches = jnp.pad(patches, ((0, 0), (0, Mp - M)))   # ~4% pad at stage 1
    else:
        # Small stages: single step, full (unpadded) array as the block.
        TM = M
        Mp = M
        grid = (1,)

    out = pl.pallas_call(
        functools.partial(_conv_mm_kernel, activation=activation),
        out_shape=jax.ShapeDtypeStruct((Cout, Mp), jnp.bfloat16),
        grid=grid,
        in_specs=[
            pl.BlockSpec((Cout, Kb), lambda i: (0, 0)),   # weights + bias column (resident)
            pl.BlockSpec((Kb, TM), lambda i: (0, i)),     # patch tile (with ones row)
            pl.BlockSpec((Cout, 2), lambda i: (0, 0)),    # BN scale/shift
        ],
        out_specs=pl.BlockSpec((Cout, TM), lambda i: (0, i)),
        compiler_params=pltpu.CompilerParams(dimension_semantics=("parallel",)),
    )(wb, patches, scale_shift)
    return out[:, :M] if Mp != M else out


# ----------------------------------------------------------------------------
# Per-stage wrappers (channels-major activations)
# ----------------------------------------------------------------------------
def _conv_act_bn(x_cm, stage_params, activation):
    """Conv2d(k=7,s=2,p=2) + activation + BatchNorm2d(eval) on channels-major input.

    x_cm: (Cin, N, H, W) bf16 -> (Cout, N, OH, OW) bf16.
    """
    wb, scale_shift = stage_params
    Cin, N, H, W = x_cm.shape
    Cout = wb.shape[0]
    OH = (H + 2 * PAD - KH) // STRIDE + 1
    OW = (W + 2 * PAD - KW) // STRIDE + 1
    M = N * OH * OW

    xp = jnp.pad(x_cm, ((0, 0), (0, 0), (PAD, PAD), (PAD, PAD)))
    cols = []
    for kh in range(KH):
        hs = slice(kh, kh + STRIDE * (OH - 1) + 1, STRIDE)
        for kw in range(KW):
            ws = slice(kw, kw + STRIDE * (OW - 1) + 1, STRIDE)
            cols.append(xp[:, :, hs, ws])                 # (Cin, N, OH, OW)
    # (Cin, KH*KW, N, OH, OW) -> (Cin*KH*KW, M); feature order (cin, kh, kw) matches
    # w.reshape(Cout, Cin*KH*KW) in channels-major layout -- no transpose needed.
    pat = jnp.stack(cols, axis=1).reshape(Cin * KH * KW, M)
    # Ones row that pairs with the folded bias column of the weight matrix.
    pat = jnp.concatenate([pat, jnp.ones((1, M), pat.dtype)], axis=0)   # (K+1, M)

    out2d = _conv_mm_pallas(pat, wb, scale_shift, activation)
    return out2d.reshape(Cout, N, OH, OW)


def _maxpool2x2_cm(x):
    """MaxPool2d(2,2), floor mode, on channels-major (C, N, H, W) -- plain (fused) XLA.

    Per review: the pooled intermediates are tiny and the stage-2/3 minor dims (50, 2) are
    far below 128 lanes, so a Pallas pool is pure launch/gather overhead."""
    C, N, H, W = x.shape
    Hp, Wp = H // 2, W // 2
    xt = x[:, :, : 2 * Hp, : 2 * Wp].reshape(C, N, Hp, 2, Wp, 2)
    return xt.max(axis=(3, 5))


def cnn_forward(x, prepared_params, activation="ReLU"):
    """x: (N, C, H, W) f32 (PyTorch layout) -> (N, 64, H', W') f32."""
    y = jnp.transpose(x, (1, 0, 2, 3)).astype(jnp.bfloat16)   # channels-major, bf16
    for stage_params in prepared_params:
        y = _conv_act_bn(y, stage_params, activation)
        # Dropout2d -> identity in eval mode.
        y = _maxpool2x2_cm(y)
    return jnp.transpose(y, (1, 0, 2, 3)).astype(jnp.float32)


# ----------------------------------------------------------------------------
# One-time parameter preparation (hoisted out of the per-forward path)
# ----------------------------------------------------------------------------
def prepare_params(params):
    prepared = []
    for (w, b, gamma, beta, mean, var) in params:
        cout, cin, kh, kw = w.shape
        K = cin * kh * kw
        w2d = w.reshape(cout, K)
        # Fold the conv bias in as an extra weight column (matched by the ones row in the
        # patch matrix).  No K padding: Mosaic handles the unaligned contraction in-vreg.
        wb = jnp.concatenate([w2d, b.reshape(cout, 1)], axis=1).astype(jnp.bfloat16)
        scale = gamma / jnp.sqrt(var + BN_EPS)
        shift = beta - mean * scale
        scale_shift = jnp.stack([scale, shift], axis=1).astype(jnp.float32)  # (Cout, 2)
        prepared.append((wb, scale_shift))
    return prepared


# ----------------------------------------------------------------------------
# Deterministic parameter init + pure-JAX reference
# ----------------------------------------------------------------------------
def init_params(key):
    stages = [(3, 16), (16, 32), (32, 64)]
    params = []
    for i, (cin, cout) in enumerate(stages):
        k = jax.random.fold_in(key, i)
        kw_, kb, kg, kbe, km, kv = jax.random.split(k, 6)
        fan_in = cin * KH * KW
        w = jax.random.normal(kw_, (cout, cin, KH, KW), jnp.float32) / jnp.sqrt(fan_in)
        b = 0.1 * jax.random.normal(kb, (cout,), jnp.float32)
        gamma = 1.0 + 0.1 * jax.random.normal(kg, (cout,), jnp.float32)
        beta = 0.1 * jax.random.normal(kbe, (cout,), jnp.float32)
        mean = 0.1 * jax.random.normal(km, (cout,), jnp.float32)
        var = jax.random.uniform(kv, (cout,), jnp.float32, minval=0.5, maxval=1.5)
        params.append((w, b, gamma, beta, mean, var))
    return params


def reference_forward(x, params, activation="ReLU"):
    act = {"ReLU": jax.nn.relu, "Sigmoid": jax.nn.sigmoid, "tanh": jnp.tanh}[activation]
    for (w, b, gamma, beta, mean, var) in params:
        y = jax.lax.conv_general_dilated(
            x, w, window_strides=(STRIDE, STRIDE),
            padding=((PAD, PAD), (PAD, PAD)),
            dimension_numbers=("NCHW", "OIHW", "NCHW"),
        )
        y = y + b[None, :, None, None]
        y = act(y)
        y = (gamma[None, :, None, None] * (y - mean[None, :, None, None])
             / jnp.sqrt(var[None, :, None, None] + BN_EPS)
             + beta[None, :, None, None])
        y = jax.lax.reduce_window(
            y, -jnp.inf, jax.lax.max, (1, 1, 2, 2), (1, 1, 2, 2), "VALID"
        )
        x = y
    return x


# ----------------------------------------------------------------------------
if __name__ == "__main__":
    key = jax.random.PRNGKey(0)
    kx, kp = jax.random.split(key)

    # Smallest spatial size that survives all three (conv s=2, pool 2x2) stages is ~85;
    # use 96 -> final output (N, 64, 1, 1).
    x = jax.random.normal(kx, (2, 3, 96, 96), jnp.float32)
    params = init_params(kp)
    activation = "ReLU"   # module also supports 'Sigmoid' / 'tanh'

    prepared = prepare_params(params)
    fwd = jax.jit(functools.partial(cnn_forward, activation=activation))

    y = jax.block_until_ready(fwd(x, prepared))
    assert y.shape == (2, 64, 1, 1), y.shape

    y_ref = jax.block_until_ready(reference_forward(x, params, activation))
    # bf16 MXU operands / bf16 inter-stage activations (f32 accumulation) -> loose tolerance.
    if not jnp.allclose(y, y_ref, rtol=2e-2, atol=2e-2):
        raise SystemExit(
            f"mismatch vs reference: max abs err {float(jnp.max(jnp.abs(y - y_ref)))}"
        )

    print("KERNEL_OK")
</pallas_src>

<mosaic_0001>
module attributes {stable_mosaic.version = 11 : i64} {
  func.func @_conv_mm_kernel(%arg0: i32, %arg1: memref<16x148xbf16, #tpu.memory_space<vmem>>, %arg2: memref<148x2304xbf16, #tpu.memory_space<vmem>>, %arg3: memref<16x2xf32, #tpu.memory_space<vmem>>, %arg4: memref<16x2304xbf16, #tpu.memory_space<vmem>>) attributes {dimension_semantics = [#tpu.dimension_semantics<parallel>], iteration_bounds = array<i64: 2>, scalar_prefetch = 0 : i64, scratch_operands = 0 : i64, tpu.core_type = #tpu.core_type<tc>, window_params = [{pipeline_mode = #tpu.pipeline_mode<synchronous>, transform_indices = @transform_0, window_bounds = array<i64: 16, 148>}, {transform_indices = @transform_1, window_bounds = array<i64: 148, 2304>}, {pipeline_mode = #tpu.pipeline_mode<synchronous>, transform_indices = @transform_2, window_bounds = array<i64: 16, 2>}, {transform_indices = @transform_3, window_bounds = array<i64: 16, 2304>}]} {
    %c0 = arith.constant 0 : index
    %c0_0 = arith.constant 0 : index
    %0 = vector.load %arg1[%c0, %c0_0] : memref<16x148xbf16, #tpu.memory_space<vmem>>, vector<16x148xbf16>
    %c0_1 = arith.constant 0 : index
    %c0_2 = arith.constant 0 : index
    %1 = vector.load %arg2[%c0_1, %c0_2] : memref<148x2304xbf16, #tpu.memory_space<vmem>>, vector<148x2304xbf16>
    %cst = arith.constant dense<0.000000e+00> : vector<16x2304xf32>
    %2 = tpu.matmul %0, %1, %cst {dimension_numbers = #tpu.dot_dimension_numbers<[1], [0], [0], [1], [0, 0, 1, 1], [], []>} : vector<16x148xbf16>, vector<148x2304xbf16>, vector<16x2304xf32> -> vector<16x2304xf32>
    %cst_3 = arith.constant 0.000000e+00 : f32
    %3 = vector.broadcast %cst_3 : f32 to vector<16x2304xf32>
    %4 = arith.maximumf %2, %3 : vector<16x2304xf32>
    %c0_4 = arith.constant 0 : index
    %c0_5 = arith.constant 0 : index
    %5 = vector.load %arg3[%c0_4, %c0_5] : memref<16x2xf32, #tpu.memory_space<vmem>>, vector<16x2xf32>
    %6 = vector.extract_strided_slice %5 {offsets = [0, 0], sizes = [16, 1], strides = [1, 1]} : vector<16x2xf32> to vector<16x1xf32>
    %7 = vector.broadcast %6 : vector<16x1xf32> to vector<16x2304xf32>
    %8 = arith.mulf %4, %7 : vector<16x2304xf32>
    %9 = vector.extract_strided_slice %5 {offsets = [0, 1], sizes = [16, 1], strides = [1, 1]} : vector<16x2xf32> to vector<16x1xf32>
    %10 = vector.broadcast %9 : vector<16x1xf32> to vector<16x2304xf32>
    %11 = arith.addf %8, %10 : vector<16x2304xf32>
    %12 = arith.truncf %11 : vector<16x2304xf32> to vector<16x2304xbf16>
    %c0_6 = arith.constant 0 : index
    %c0_7 = arith.constant 0 : index
    %13 = vector.load %arg4[%c0_6, %c0_7] : memref<16x2304xbf16, #tpu.memory_space<vmem>>, vector<16x2304xbf16>
    tpu.vector_store %arg4[%c0_6, %c0_7], %12 {strides = array<i32>} : memref<16x2304xbf16, #tpu.memory_space<vmem>>, vector<16x2304xbf16>,
    return
  }
  func.func @transform_0(%arg0: i32) -> (i32, i32) {
    %c0_i32 = arith.constant 0 : i32
    %c0_i32_0 = arith.constant 0 : i32
    %c0_i32_1 = arith.constant 0 : i32
    return %c0_i32, %c0_i32_0 : i32, i32
  }
  func.func @transform_1(%arg0: i32) -> (i32, i32) {
    %c0_i32 = arith.constant 0 : i32
    %c0_i32_0 = arith.constant 0 : i32
    return %c0_i32, %arg0 : i32, i32
  }
  func.func @transform_2(%arg0: i32) -> (i32, i32) {
    %c0_i32 = arith.constant 0 : i32
    %c0_i32_0 = arith.constant 0 : i32
    %c0_i32_1 = arith.constant 0 : i32
    return %c0_i32, %c0_i32_0 : i32, i32
  }
  func.func @transform_3(%arg0: i32) -> (i32, i32) {
    %c0_i32 = arith.constant 0 : i32
    %c0_i32_0 = arith.constant 0 : i32
    return %c0_i32, %arg0 : i32, i32
  }
}

module attributes {stable_mosaic.version = 11 : i64} {
  func.func @_conv_mm_kernel(%arg0: i32, %arg1: memref<32x785xbf16, #tpu.memory_space<vmem>>, %arg2: memref<785x242xbf16, #tpu.memory_space<vmem>>, %arg3: memref<32x2xf32, #tpu.memory_space<vmem>>, %arg4: memref<32x242xbf16, #tpu.memory_space<vmem>>) attributes {dimension_semantics = [#tpu.dimension_semantics<parallel>], iteration_bounds = array<i64: 1>, scalar_prefetch = 0 : i64, scratch_operands = 0 : i64, tpu.core_type = #tpu.core_type<tc>, window_params = [{pipeline_mode = #tpu.pipeline_mode<synchronous>, transform_indices = @transform_0, window_bounds = array<i64: 32, 785>}, {transform_indices = @transform_1, window_bounds = array<i64: 785, 242>}, {pipeline_mode = #tpu.pipeline_mode<synchronous>, transform_indices = @transform_2, window_bounds = array<i64: 32, 2>}, {transform_indices = @transform_3, window_bounds = array<i64: 32, 242>}]} {
    %c0 = arith.constant 0 : index
    %c0_0 = arith.constant 0 : index
    %0 = vector.load %arg1[%c0, %c0_0] : memref<32x785xbf16, #tpu.memory_space<vmem>>, vector<32x785xbf16>
    %c0_1 = arith.constant 0 : index
    %c0_2 = arith.constant 0 : index
    %1 = vector.load %arg2[%c0_1, %c0_2] : memref<785x242xbf16, #tpu.memory_space<vmem>>, vector<785x242xbf16>
    %cst = arith.constant dense<0.000000e+00> : vector<32x242xf32>
    %2 = tpu.matmul %0, %1, %cst {dimension_numbers = #tpu.dot_dimension_numbers<[1], [0], [0], [1], [0, 0, 1, 1], [], []>} : vector<32x785xbf16>, vector<785x242xbf16>, vector<32x242xf32> -> vector<32x242xf32>
    %cst_3 = arith.constant 0.000000e+00 : f32
    %3 = vector.broadcast %cst_3 : f32 to vector<32x242xf32>
    %4 = arith.maximumf %2, %3 : vector<32x242xf32>
    %c0_4 = arith.constant 0 : index
    %c0_5 = arith.constant 0 : index
    %5 = vector.load %arg3[%c0_4, %c0_5] : memref<32x2xf32, #tpu.memory_space<vmem>>, vector<32x2xf32>
    %6 = vector.extract_strided_slice %5 {offsets = [0, 0], sizes = [32, 1], strides = [1, 1]} : vector<32x2xf32> to vector<32x1xf32>
    %7 = vector.broadcast %6 : vector<32x1xf32> to vector<32x242xf32>
    %8 = arith.mulf %4, %7 : vector<32x242xf32>
    %9 = vector.extract_strided_slice %5 {offsets = [0, 1], sizes = [32, 1], strides = [1, 1]} : vector<32x2xf32> to vector<32x1xf32>
    %10 = vector.broadcast %9 : vector<32x1xf32> to vector<32x242xf32>
    %11 = arith.addf %8, %10 : vector<32x242xf32>
    %12 = arith.truncf %11 : vector<32x242xf32> to vector<32x242xbf16>
    %c0_6 = arith.constant 0 : index
    %c0_7 = arith.constant 0 : index
    %13 = vector.load %arg4[%c0_6, %c0_7] : memref<32x242xbf16, #tpu.memory_space<vmem>>, vector<32x242xbf16>
    tpu.vector_store %arg4[%c0_6, %c0_7], %12 {strides = array<i32>} : memref<32x242xbf16, #tpu.memory_space<vmem>>, vector<32x242xbf16>,
    return
  }
  func.func @transform_0(%arg0: i32) -> (i32, i32) {
    %c0_i32 = arith.constant 0 : i32
    %c0_i32_0 = arith.constant 0 : i32
    %c0_i32_1 = arith.constant 0 : i32
    return %c0_i32, %c0_i32_0 : i32, i32
  }
  func.func @transform_1(%arg0: i32) -> (i32, i32) {
    %c0_i32 = arith.constant 0 : i32
    %c0_i32_0 = arith.constant 0 : i32
    return %c0_i32, %arg0 : i32, i32
  }
  func.func @transform_2(%arg0: i32) -> (i32, i32) {
    %c0_i32 = arith.constant 0 : i32
    %c0_i32_0 = arith.constant 0 : i32
    %c0_i32_1 = arith.constant 0 : i32
    return %c0_i32, %c0_i32_0 : i32, i32
  }
  func.func @transform_3(%arg0: i32) -> (i32, i32) {
    %c0_i32 = arith.constant 0 : i32
    %c0_i32_0 = arith.constant 0 : i32
    return %c0_i32, %arg0 : i32, i32
  }
}

module attributes {stable_mosaic.version = 11 : i64} {
  func.func @_conv_mm_kernel(%arg0: i32, %arg1: memref<64x1569xbf16, #tpu.memory_space<vmem>>, %arg2: memref<1569x8xbf16, #tpu.memory_space<vmem>>, %arg3: memref<64x2xf32, #tpu.memory_space<vmem>>, %arg4: memref<64x8xbf16, #tpu.memory_space<vmem>>) attributes {dimension_semantics = [#tpu.dimension_semantics<parallel>], iteration_bounds = array<i64: 1>, scalar_prefetch = 0 : i64, scratch_operands = 0 : i64, tpu.core_type = #tpu.core_type<tc>, window_params = [{pipeline_mode = #tpu.pipeline_mode<synchronous>, transform_indices = @transform_0, window_bounds = array<i64: 64, 1569>}, {transform_indices = @transform_1, window_bounds = array<i64: 1569, 8>}, {pipeline_mode = #tpu.pipeline_mode<synchronous>, transform_indices = @transform_2, window_bounds = array<i64: 64, 2>}, {transform_indices = @transform_3, window_bounds = array<i64: 64, 8>}]} {
    %c0 = arith.constant 0 : index
    %c0_0 = arith.constant 0 : index
    %0 = vector.load %arg1[%c0, %c0_0] : memref<64x1569xbf16, #tpu.memory_space<vmem>>, vector<64x1569xbf16>
    %c0_1 = arith.constant 0 : index
    %c0_2 = arith.constant 0 : index
    %1 = vector.load %arg2[%c0_1, %c0_2] : memref<1569x8xbf16, #tpu.memory_space<vmem>>, vector<1569x8xbf16>
    %cst = arith.constant dense<0.000000e+00> : vector<64x8xf32>
    %2 = tpu.matmul %0, %1, %cst {dimension_numbers = #tpu.dot_dimension_numbers<[1], [0], [0], [1], [0, 0, 1, 1], [], []>} : vector<64x1569xbf16>, vector<1569x8xbf16>, vector<64x8xf32> -> vector<64x8xf32>
    %cst_3 = arith.constant 0.000000e+00 : f32
    %3 = vector.broadcast %cst_3 : f32 to vector<64x8xf32>
    %4 = arith.maximumf %2, %3 : vector<64x8xf32>
    %c0_4 = arith.constant 0 : index
    %c0_5 = arith.constant 0 : index
    %5 = vector.load %arg3[%c0_4, %c0_5] : memref<64x2xf32, #tpu.memory_space<vmem>>, vector<64x2xf32>
    %6 = vector.extract_strided_slice %5 {offsets = [0, 0], sizes = [64, 1], strides = [1, 1]} : vector<64x2xf32> to vector<64x1xf32>
    %7 = vector.broadcast %6 : vector<64x1xf32> to vector<64x8xf32>
    %8 = arith.mulf %4, %7 : vector<64x8xf32>
    %9 = vector.extract_strided_slice %5 {offsets = [0, 1], sizes = [64, 1], strides = [1, 1]} : vector<64x2xf32> to vector<64x1xf32>
    %10 = vector.broadcast %9 : vector<64x1xf32> to vector<64x8xf32>
    %11 = arith.addf %8, %10 : vector<64x8xf32>
    %12 = arith.truncf %11 : vector<64x8xf32> to vector<64x8xbf16>
    %c0_6 = arith.constant 0 : index
    %c0_7 = arith.constant 0 : index
    %13 = vector.load %arg4[%c0_6, %c0_7] : memref<64x8xbf16, #tpu.memory_space<vmem>>, vector<64x8xbf16>
    tpu.vector_store %arg4[%c0_6, %c0_7], %12 {strides = array<i32>} : memref<64x8xbf16, #tpu.memory_space<vmem>>, vector<64x8xbf16>,
    return
  }
  func.func @transform_0(%arg0: i32) -> (i32, i32) {
    %c0_i32 = arith.constant 0 : i32
    %c0_i32_0 = arith.constant 0 : i32
    %c0_i32_1 = arith.constant 0 : i32
    return %c0_i32, %c0_i32_0 : i32, i32
  }
  func.func @transform_1(%arg0: i32) -> (i32, i32) {
    %c0_i32 = arith.constant 0 : i32
    %c0_i32_0 = arith.constant 0 : i32
    return %c0_i32, %arg0 : i32, i32
  }
  func.func @transform_2(%arg0: i32) -> (i32, i32) {
    %c0_i32 = arith.constant 0 : i32
    %c0_i32_0 = arith.constant 0 : i32
    %c0_i32_1 = arith.constant 0 : i32
    return %c0_i32, %c0_i32_0 : i32, i32
  }
  func.func @transform_3(%arg0: i32) -> (i32, i32) {
    %c0_i32 = arith.constant 0 : i32
    %c0_i32_0 = arith.constant 0 : i32
    return %c0_i32, %arg0 : i32, i32
  }
}

</mosaic_0001>

<llo_original>
// kernel: cnn_forward.3
$region0: #{cnn_forward.3}
  #allocation0 [shape = 'u32[]', space=smem, size = 0x4, offset = 0x4, fixed_abs, tag = 'smem constant byte address 0x4 - core index']
  #allocation1 [shape = 'u32[144,128]{1,0:T(1,128)}', space=vmem, size = 0x12000, scoped, tag = 'internal scratch']
  %s0 = inlined_call_operand.vmem [shape: bf16[16,148], index: 0, kind: input, shape index: {}]
  %s1 = inlined_call_operand.vmem [shape: bf16[148,4608], index: 1, kind: input, shape index: {}]
  %s2 = inlined_call_operand.vmem [shape: f32[16,2], index: 2, kind: input, shape index: {}]
  %s3 = inlined_call_operand.vmem [shape: bf16[16,4608], index: 3, kind: output, shape index: {}]
  %s4 = sld [smem:[#allocation0]]
  $region87: #{cnn_forward.3} parent=0
    _
  %s6 = ssub.s32 1, %s4
  %s7 = scalar_select 0, %s6, %s4
  $region1: #{cnn_forward.3} parent=0
    #allocation2 [shape = 'u8[1400832]{0}', space=vmem, size = 0x156000, scoped, tag = 'input window, operand 1']
    #allocation3 [shape = 'u8[147456]{0}', space=vmem, size = 0x24000, scoped, tag = 'output window, operand 0']
    loop: start=0, step=1, limit=4
    $region2: #{cnn_forward.3} parent=1 // loop_pre_header
      _
    $region3: #{cnn_forward.3} parent=1 // loop_header
      %s9 = sphi 0, %s13
      %p10 = scmp.ge.s32.totalorder %s9, 4
      %s17 = sphi 0, %s17
      %s19 = sphi 0, %s17
      %s20 = sphi 0, %s19
      %s34 = sphi 0, %s20
      %s40 = sphi 0, %s42
      %s43 = sphi 0, %s40
      %s44 = sphi 0, %s43
      %s60 = sphi 0, %s44
      %s64 = sphi 0, %s64
      %s66 = sphi 0, %s64
      %s67 = sphi 0, %s66
      %s81 = sphi 0, %s67
      %s87 = sphi 0, %s89
      %s90 = sphi 0, %s87
      %s91 = sphi 0, %s90
      %s107 = sphi 0, %s91
    $region4: #{cnn_forward.3} parent=1 // loop_header_branch
      %12 = sbr.rel (%p10) target = $region8
    $region5: #{cnn_forward.3} parent=1 // loop_body
      %s14 = ssub.s32 %s9, 1
      %s15 = ssub.s32 %s9, 2
      %s16 = sadd.s32 %s9, 1
      %s18 = sadd.s32 %s17, 1
      %p21 = scmp.eq.s32.totalorder %s9, 1
      %p22 = scmp.ne.s32.totalorder %s17, %s19
      %p23 = scmp.eq.s32.totalorder %s9, 0
      %p24 = por %p22, %p23
      %p25 = scmp.ne.s32.totalorder %s17, %s19
      %p26 = scmp.eq.s32.totalorder %s14, 1
      %p27 = por %p25, %p26
      %p28 = scmp.ne.s32.totalorder %s19, %s20
      %p29 = scmp.eq.s32.totalorder %s14, 0
      %p30 = por %p28, %p29
      %p31 = scmp.ne.s32.totalorder %s19, %s20
      %p32 = scmp.eq.s32.totalorder %s15, 1
      %p33 = por %p31, %p32
      %p35 = scmp.ne.s32.totalorder %s20, %s34
      %p36 = scmp.eq.s32.totalorder %s15, 0
      %p37 = por %p35, %p36
      %s38 = ssub.s32 %s9, %s16
      %p39 = scmp.eq.s32.totalorder %s38, 0
      %s41 = sadd.s32 %s40, 1
      %s42 = scalar_select %p39, %s40, %s41
      %p45 = pneg %p39
      %p46 = scmp.eq.s32.totalorder %s9, 1
      %p47 = por %p45, %p46
      %p48 = scmp.ne.s32.totalorder %s40, %s43
      %p49 = scmp.eq.s32.totalorder %s9, 0
      %p50 = por %p48, %p49
      %p51 = scmp.ne.s32.totalorder %s40, %s43
      %p52 = scmp.eq.s32.totalorder %s14, 1
      %p53 = por %p51, %p52
      %p54 = scmp.ne.s32.totalorder %s43, %s44
      %p55 = scmp.eq.s32.totalorder %s14, 0
      %p56 = por %p54, %p55
      %p57 = scmp.ne.s32.totalorder %s43, %s44
      %p58 = scmp.eq.s32.totalorder %s15, 1
      %p59 = por %p57, %p58
      %p61 = scmp.ne.s32.totalorder %s44, %s60
      %p62 = scmp.eq.s32.totalorder %s15, 0
      %p63 = por %p61, %p62
      %s65 = sadd.s32 %s64, 1
      %p68 = scmp.eq.s32.totalorder %s9, 1
      %p69 = scmp.ne.s32.totalorder %s64, %s66
      %p70 = scmp.eq.s32.totalorder %s9, 0
      %p71 = por %p69, %p70
      %p72 = scmp.ne.s32.totalorder %s64, %s66
      %p73 = scmp.eq.s32.totalorder %s14, 1
      %p74 = por %p72, %p73
      %p75 = scmp.ne.s32.totalorder %s66, %s67
      %p76 = scmp.eq.s32.totalorder %s14, 0
      %p77 = por %p75, %p76
      %p78 = scmp.ne.s32.totalorder %s66, %s67
      %p79 = scmp.eq.s32.totalorder %s15, 1
      %p80 = por %p78, %p79
      %p82 = scmp.ne.s32.totalorder %s67, %s81
      %p83 = scmp.eq.s32.totalorder %s15, 0
      %p84 = por %p82, %p83
      %s85 = ssub.s32 %s9, %s16
      %p86 = scmp.eq.s32.totalorder %s85, 0
      %s88 = sadd.s32 %s87, 1
      %s89 = scalar_select %p86, %s87, %s88
      %p92 = pneg %p86
      %p93 = scmp.eq.s32.totalorder %s9, 1
      %p94 = por %p92, %p93
      %p95 = scmp.ne.s32.totalorder %s87, %s90
      %p96 = scmp.eq.s32.totalorder %s9, 0
      %p97 = por %p95, %p96
      %p98 = scmp.ne.s32.totalorder %s87, %s90
      %p99 = scmp.eq.s32.totalorder %s14, 1
      %p100 = por %p98, %p99
      %p101 = scmp.ne.s32.totalorder %s90, %s91
      %p102 = scmp.eq.s32.totalorder %s14, 0
      %p103 = por %p101, %p102
      %p104 = scmp.ne.s32.totalorder %s90, %s91
      %p105 = scmp.eq.s32.totalorder %s15, 1
      %p106 = por %p104, %p105
      %p108 = scmp.ne.s32.totalorder %s91, %s107
      %p109 = scmp.eq.s32.totalorder %s15, 0
      %p110 = por %p108, %p109
      %p111 = scmp.le.s32.totalorder 1, %s9
      %p112 = scmp.lt.s32.totalorder %s9, 3
      %p113 = pnand %p111, %p112
      %p114 = pneg %p113
      // Predicated region
      $region9: #{cnn_forward.3} parent=5 // pred_check
        _
      $region10: #{cnn_forward.3} parent=5 // pred_check_branch
        %116 = sbr.rel (%p113) target = $region12
      $region11: #{cnn_forward.3} parent=5 // pred_region
        %s117 = ssub.s32 %s9, 1
        // Predicated region
        $region13: #{cnn_forward.3} parent=11 // pred_check
          %p118 = pneg %p30
        $region14: #{cnn_forward.3} parent=11 // pred_check_branch
          %120 = sbr.rel (%p118) target = $region16
        $region15: #{cnn_forward.3} parent=11 // pred_region
          _
        $region16: #{cnn_forward.3} parent=11 // pred_fallthru
          _
        // Predicated region
        $region17: #{cnn_forward.3} parent=11 // pred_check
          %p121 = pneg %p77
        $region18: #{cnn_forward.3} parent=11 // pred_check_branch
          %123 = sbr.rel (%p121) target = $region20
        $region19: #{cnn_forward.3} parent=11 // pred_region
          _
        $region20: #{cnn_forward.3} parent=11 // pred_fallthru
          _
      $region12: #{cnn_forward.3} parent=5 // pred_fallthru
        _
      %p124 = scmp.lt.s32.totalorder %s9, 2
      // Predicated region
      $region21: #{cnn_forward.3} parent=5 // pred_check
        %p125 = pneg %p124
      $region22: #{cnn_forward.3} parent=5 // pred_check_branch
        %127 = sbr.rel (%p125) target = $region24
      $region23: #{cnn_forward.3} parent=5 // pred_region
        // Predicated region
        $region25: #{cnn_forward.3} parent=23 // pred_check
          %p128 = pneg %p50
        $region26: #{cnn_forward.3} parent=23 // pred_check_branch
          %130 = sbr.rel (%p128) target = $region28
        $region27: #{cnn_forward.3} parent=23 // pred_region
          %s131 = sand.u32 %s40, 1
          %s132 = sand.u32 %s40, 1
          %s133 = smul.addr %s132, 1368
          %s134 = scalar_lea.vmem [#allocation2], %s133
          %s135 = smul.u32 18, %s9
          %s136 = smul.addr %s135, 4
          %s137 = scalar_lea.vmem %s1, %s136
          // Predicated region
          $region29: #{cnn_forward.3} parent=27 // pred_check
            _
          $region30: #{cnn_forward.3} parent=27 // pred_check_branch
            %139 = sbr.rel (0) target = $region32
          $region31: #{cnn_forward.3} parent=27 // pred_region
            // Predicated region
            $region33: #{cnn_forward.3} parent=31 // pred_check
              _
            $region34: #{cnn_forward.3} parent=31 // pred_check_branch
              %141 = sbr.rel (0) target = $region36
            $region35: #{cnn_forward.3} parent=31 // pred_region
              loop: start=0, step=1, limit=1
              $region37: #{cnn_forward.3} parent=35 // loop_pre_header
                _
              $region38: #{cnn_forward.3} parent=35 // loop_header
                %s143 = sphi 0, %s147
                %p144 = scmp.ge.s32.totalorder %s143, 1
                %s148 = sphi %s137, %s137
                %s149 = sphi %s134, %s134
              $region39: #{cnn_forward.3} parent=35 // loop_header_branch
                %146 = sbr.rel (%p144) target = $region43
              $region40: #{cnn_forward.3} parent=35 // loop_body
                %v150 = vld [vmem:[%s148] sm:$0xff]
                %151 = vst [vmem:[%s149] sm:$0xff] %v150
                %v152 = vld [vmem:[%s148 + $0x8] sm:$0xff]
                %153 = vst [vmem:[%s149 + $0x8] sm:$0xff] %v152
                %v154 = vld [vmem:[%s148 + $0x10] sm:$0xff]
                %155 = vst [vmem:[%s149 + $0x10] sm:$0xff] %v154
                %v156 = vld [vmem:[%s148 + $0x18] sm:$0xff]
                %157 = vst [vmem:[%s149 + $0x18] sm:$0xff] %v156
                %v158 = vld [vmem:[%s148 + $0x20] sm:$0xff]
                %159 = vst [vmem:[%s149 + $0x20] sm:$0xff] %v158
                %v160 = vld [vmem:[%s148 + $0x28] sm:$0xff]
                %161 = vst [vmem:[%s149 + $0x28] sm:$0xff] %v160
                %v162 = vld [vmem:[%s148 + $0x30] sm:$0xff]
                %163 = vst [vmem:[%s149 + $0x30] sm:$0xff] %v162
                %v164 = vld [vmem:[%s148 + $0x38] sm:$0xff]
                %165 = vst [vmem:[%s149 + $0x38] sm:$0xff] %v164
                %v166 = vld [vmem:[%s148 + $0x40] sm:$0xff]
                %167 = vst [vmem:[%s149 + $0x40] sm:$0xff] %v166
                %v168 = vld [vmem:[%s148 + $0x90] sm:$0xff]
                %169 = vst [vmem:[%s149 + $0x48] sm:$0xff] %v168
                %v170 = vld [vmem:[%s148 + $0x98] sm:$0xff]
                %171 = vst [vmem:[%s149 + $0x50] sm:$0xff] %v170
                %v172 = vld [vmem:[%s148 + $0xa0] sm:$0xff]
                %173 = vst [vmem:[%s149 + $0x58] sm:$0xff] %v172
                %v174 = vld [vmem:[%s148 + $0xa8] sm:$0xff]
                %175 = vst [vmem:[%s149 + $0x60] sm:$0xff] %v174
                %v176 = vld [vmem:[%s148 + $0xb0] sm:$0xff]
                %177 = vst [vmem:[%s149 + $0x68] sm:$0xff] %v176
                %v178 = vld [vmem:[%s148 + $0xb8] sm:$0xff]
                %179 = vst [vmem:[%s149 + $0x70] sm:$0xff] %v178
                %v180 = vld [vmem:[%s148 + $0xc0] sm:$0xff]
                %181 = vst [vmem:[%s149 + $0x78] sm:$0xff] %v180
                %v182 = vld [vmem:[%s148 + $0xc8] sm:$0xff]
                %183 = vst [vmem:[%s149 + $0x80] sm:$0xff] %v182
                %v184 = vld [vmem:[%s148 + $0xd0] sm:$0xff]
                %185 = vst [vmem:[%s149 + $0x88] sm:$0xff] %v184
                %v186 = vld [vmem:[%s148 + $0x120] sm:$0xff]
                %187 = vst [vmem:[%s149 + $0x90] sm:$0xff] %v186
                %v188 = vld [vmem:[%s148 + $0x128] sm:$0xff]
                %189 = vst [vmem:[%s149 + $0x98] sm:$0xff] %v188
                %v190 = vld [vmem:[%s148 + $0x130] sm:$0xff]
                %191 = vst [vmem:[%s149 + $0xa0] sm:$0xff] %v190
                %v192 = vld [vmem:[%s148 + $0x138] sm:$0xff]
                %193 = vst [vmem:[%s149 + $0xa8] sm:$0xff] %v192
                %v194 = vld [vmem:[%s148 + $0x140] sm:$0xff]
                %195 = vst [vmem:[%s149 + $0xb0] sm:$0xff] %v194
                %v196 = vld [vmem:[%s148 + $0x148] sm:$0xff]
                %197 = vst [vmem:[%s149 + $0xb8] sm:$0xff] %v196
                %v198 = vld [vmem:[%s148 + $0x150] sm:$0xff]
                %199 = vst [vmem:[%s149 + $0xc0] sm:$0xff] %v198
                %v200 = vld [vmem:[%s148 + $0x158] sm:$0xff]
                %201 = vst [vmem:[%s149 + $0xc8] sm:$0xff] %v200
                %v202 = vld [vmem:[%s148 + $0x160] sm:$0xff]
                %203 = vst [vmem:[%s149 + $0xd0] sm:$0xff] %v202
                %v204 = vld [vmem:[%s148 + $0x1b0] sm:$0xff]
                %205 = vst [vmem:[%s149 + $0xd8] sm:$0xff] %v204
                %v206 = vld [vmem:[%s148 + $0x1b8] sm:$0xff]
                %207 = vst [vmem:[%s149 + $0xe0] sm:$0xff] %v206
                %v208 = vld [vmem:[%s148 + $0x1c0] sm:$0xff]
                %209 = vst [vmem:[%s149 + $0xe8] sm:$0xff] %v208
                %v210 = vld [vmem:[%s148 + $0x1c8] sm:$0xff]
                %211 = vst [vmem:[%s149 + $0xf0] sm:$0xff] %v210
                %v212 = vld [vmem:[%s148 + $0x1d0] sm:$0xff]
                %213 = vst [vmem:[%s149 + $0xf8] sm:$0xff] %v212
                %v214 = vld [vmem:[%s148 + $0x1d8] sm:$0xff]
                %215 = vst [vmem:[%s149 + $0x100] sm:$0xff] %v214
                %v216 = vld [vmem:[%s148 + $0x1e0] sm:$0xff]
                %217 = vst [vmem:[%s149 + $0x108] sm:$0xff] %v216
                %v218 = vld [vmem:[%s148 + $0x1e8] sm:$0xff]
                %219 = vst [vmem:[%s149 + $0x110] sm:$0xff] %v218
                %v220 = vld [vmem:[%s148 + $0x1f0] sm:$0xff]
                %221 = vst [vmem:[%s149 + $0x118] sm:$0xff] %v220
                %v222 = vld [vmem:[%s148 + $0x240] sm:$0xff]
                %223 = vst [vmem:[%s149 + $0x120] sm:$0xff] %v222
                %v224 = vld [vmem:[%s148 + $0x248] sm:$0xff]
                %225 = vst [vmem:[%s149 + $0x128] sm:$0xff] %v224
                %v226 = vld [vmem:[%s148 + $0x250] sm:$0xff]
                %227 = vst [vmem:[%s149 + $0x130] sm:$0xff] %v226
                %v228 = vld [vmem:[%s148 + $0x258] sm:$0xff]
                %229 = vst [vmem:[%s149 + $0x138] sm:$0xff] %v228
                %v230 = vld [vmem:[%s148 + $0x260] sm:$0xff]
                %231 = vst [vmem:[%s149 + $0x140] sm:$0xff] %v230
                %v232 = vld [vmem:[%s148 + $0x268] sm:$0xff]
                %233 = vst [vmem:[%s149 + $0x148] sm:$0xff] %v232
                %v234 = vld [vmem:[%s148 + $0x270] sm:$0xff]
                %235 = vst [vmem:[%s149 + $0x150] sm:$0xff] %v234
                %v236 = vld [vmem:[%s148 + $0x278] sm:$0xff]
                %237 = vst [vmem:[%s149 + $0x158] sm:$0xff] %v236
                %v238 = vld [vmem:[%s148 + $0x280] sm:$0xff]
                %239 = vst [vmem:[%s149 + $0x160] sm:$0xff] %v238
                %v240 = vld [vmem:[%s148 + $0x2d0] sm:$0xff]
                %241 = vst [vmem:[%s149 + $0x168] sm:$0xff] %v240
                %v242 = vld [vmem:[%s148 + $0x2d8] sm:$0xff]
                %243 = vst [vmem:[%s149 + $0x170] sm:$0xff] %v242
                %v244 = vld [vmem:[%s148 + $0x2e0] sm:$0xff]
                %245 = vst [vmem:[%s149 + $0x178] sm:$0xff] %v244
                %v246 = vld [vmem:[%s148 + $0x2e8] sm:$0xff]
                %247 = vst [vmem:[%s149 + $0x180] sm:$0xff] %v246
                %v248 = vld [vmem:[%s148 + $0x2f0] sm:$0xff]
                %249 = vst [vmem:[%s149 + $0x188] sm:$0xff] %v248
                %v250 = vld [vmem:[%s148 + $0x2f8] sm:$0xff]
                %251 = vst [vmem:[%s149 + $0x190] sm:$0xff] %v250
                %v252 = vld [vmem:[%s148 + $0x300] sm:$0xff]
                %253 = vst [vmem:[%s149 + $0x198] sm:$0xff] %v252
                %v254 = vld [vmem:[%s148 + $0x308] sm:$0xff]
                %255 = vst [vmem:[%s149 + $0x1a0] sm:$0xff] %v254
                %v256 = vld [vmem:[%s148 + $0x310] sm:$0xff]
                %257 = vst [vmem:[%s149 + $0x1a8] sm:$0xff] %v256
                %v258 = vld [vmem:[%s148 + $0x360] sm:$0xff]
                %259 = vst [vmem:[%s149 + $0x1b0] sm:$0xff] %v258
                %v260 = vld [vmem:[%s148 + $0x368] sm:$0xff]
                %261 = vst [vmem:[%s149 + $0x1b8] sm:$0xff] %v260
                %v262 = vld [vmem:[%s148 + $0x370] sm:$0xff]
                %263 = vst [vmem:[%s149 + $0x1c0] sm:$0xff] %v262
                %v264 = vld [vmem:[%s148 + $0x378] sm:$0xff]
                %265 = vst [vmem:[%s149 + $0x1c8] sm:$0xff] %v264
                %v266 = vld [vmem:[%s148 + $0x380] sm:$0xff]
                %267 = vst [vmem:[%s149 + $0x1d0] sm:$0xff] %v266
                %v268 = vld [vmem:[%s148 + $0x388] sm:$0xff]
                %269 = vst [vmem:[%s149 + $0x1d8] sm:$0xff] %v268
                %v270 = vld [vmem:[%s148 + $0x390] sm:$0xff]
                %271 = vst [vmem:[%s149 + $0x1e0] sm:$0xff] %v270
                %v272 = vld [vmem:[%s148 + $0x398] sm:$0xff]
                %273 = vst [vmem:[%s149 + $0x1e8] sm:$0xff] %v272
                %v274 = vld [vmem:[%s148 + $0x3a0] sm:$0xff]
                %275 = vst [vmem:[%s149 + $0x1f0] sm:$0xff] %v274
                %v276 = vld [vmem:[%s148 + $0x3f0] sm:$0xff]
                %277 = vst [vmem:[%s149 + $0x1f8] sm:$0xff] %v276
                %v278 = vld [vmem:[%s148 + $0x3f8] sm:$0xff]
                %279 = vst [vmem:[%s149 + $0x200] sm:$0xff] %v278
                %v280 = vld [vmem:[%s148 + $0x400] sm:$0xff]
                %281 = vst [vmem:[%s149 + $0x208] sm:$0xff] %v280
                %v282 = vld [vmem:[%s148 + $0x408] sm:$0xff]
                %283 = vst [vmem:[%s149 + $0x210] sm:$0xff] %v282
                %v284 = vld [vmem:[%s148 + $0x410] sm:$0xff]
                %285 = vst [vmem:[%s149 + $0x218] sm:$0xff] %v284
                %v286 = vld [vmem:[%s148 + $0x418] sm:$0xff]
                %287 = vst [vmem:[%s149 + $0x220] sm:$0xff] %v286
                %v288 = vld [vmem:[%s148 + $0x420] sm:$0xff]
                %289 = vst [vmem:[%s149 + $0x228] sm:$0xff] %v288
                %v290 = vld [vmem:[%s148 + $0x428] sm:$0xff]
                %291 = vst [vmem:[%s149 + $0x230] sm:$0xff] %v290
                %v292 = vld [vmem:[%s148 + $0x430] sm:$0xff]
                %293 = vst [vmem:[%s149 + $0x238] sm:$0xff] %v292
                %v294 = vld [vmem:[%s148 + $0x480] sm:$0xff]
                %295 = vst [vmem:[%s149 + $0x240] sm:$0xff] %v294
                %v296 = vld [vmem:[%s148 + $0x488] sm:$0xff]
                %297 = vst [vmem:[%s149 + $0x248] sm:$0xff] %v296
                %v298 = vld [vmem:[%s148 + $0x490] sm:$0xff]
                %299 = vst [vmem:[%s149 + $0x250] sm:$0xff] %v298
                %v300 = vld [vmem:[%s148 + $0x498] sm:$0xff]
                %301 = vst [vmem:[%s149 + $0x258] sm:$0xff] %v300
                %v302 = vld [vmem:[%s148 + $0x4a0] sm:$0xff]
                %303 = vst [vmem:[%s149 + $0x260] sm:$0xff] %v302
                %v304 = vld [vmem:[%s148 + $0x4a8] sm:$0xff]
                %305 = vst [vmem:[%s149 + $0x268] sm:$0xff] %v304
                %v306 = vld [vmem:[%s148 + $0x4b0] sm:$0xff]
                %307 = vst [vmem:[%s149 + $0x270] sm:$0xff] %v306
                %v308 = vld [vmem:[%s148 + $0x4b8] sm:$0xff]
                %309 = vst [vmem:[%s149 + $0x278] sm:$0xff] %v308
                %v310 = vld [vmem:[%s148 + $0x4c0] sm:$0xff]
                %311 = vst [vmem:[%s149 + $0x280] sm:$0xff] %v310
                %v312 = vld [vmem:[%s148 + $0x510] sm:$0xff]
                %313 = vst [vmem:[%s149 + $0x288] sm:$0xff] %v312
                %v314 = vld [vmem:[%s148 + $0x518] sm:$0xff]
                %315 = vst [vmem:[%s149 + $0x290] sm:$0xff] %v314
                %v316 = vld [vmem:[%s148 + $0x520] sm:$0xff]
                %317 = vst [vmem:[%s149 + $0x298] sm:$0xff] %v316
                %v318 = vld [vmem:[%s148 + $0x528] sm:$0xff]
                %319 = vst [vmem:[%s149 + $0x2a0] sm:$0xff] %v318
                %v320 = vld [vmem:[%s148 + $0x530] sm:$0xff]
                %321 = vst [vmem:[%s149 + $0x2a8] sm:$0xff] %v320
                %v322 = vld [vmem:[%s148 + $0x538] sm:$0xff]
                %323 = vst [vmem:[%s149 + $0x2b0] sm:$0xff] %v322
                %v324 = vld [vmem:[%s148 + $0x540] sm:$0xff]
                %325 = vst [vmem:[%s149 + $0x2b8] sm:$0xff] %v324
                %v326 = vld [vmem:[%s148 + $0x548] sm:$0xff]
                %327 = vst [vmem:[%s149 + $0x2c0] sm:$0xff] %v326
                %v328 = vld [vmem:[%s148 + $0x550] sm:$0xff]
                %329 = vst [vmem:[%s149 + $0x2c8] sm:$0xff] %v328
                %v330 = vld [vmem:[%s148 + $0x5a0] sm:$0xff]
                %331 = vst [vmem:[%s149 + $0x2d0] sm:$0xff] %v330
                %v332 = vld [vmem:[%s148 + $0x5a8] sm:$0xff]
                %333 = vst [vmem:[%s149 + $0x2d8] sm:$0xff] %v332
                %v334 = vld [vmem:[%s148 + $0x5b0] sm:$0xff]
                %335 = vst [vmem:[%s149 + $0x2e0] sm:$0xff] %v334
                %v336 = vld [vmem:[%s148 + $0x5b8] sm:$0xff]
                %337 = vst [vmem:[%s149 + $0x2e8] sm:$0xff] %v336
                %v338 = vld [vmem:[%s148 + $0x5c0] sm:$0xff]
                %339 = vst [vmem:[%s149 + $0x2f0] sm:$0xff] %v338
                %v340 = vld [vmem:[%s148 + $0x5c8] sm:$0xff]
                %341 = vst [vmem:[%s149 + $0x2f8] sm:$0xff] %v340
                %v342 = vld [vmem:[%s148 + $0x5d0] sm:$0xff]
                %343 = vst [vmem:[%s149 + $0x300] sm:$0xff] %v342
                %v344 = vld [vmem:[%s148 + $0x5d8] sm:$0xff]
                %345 = vst [vmem:[%s149 + $0x308] sm:$0xff] %v344
                %v346 = vld [vmem:[%s148 + $0x5e0] sm:$0xff]
                %347 = vst [vmem:[%s149 + $0x310] sm:$0xff] %v346
                %v348 = vld [vmem:[%s148 + $0x630] sm:$0xff]
                %349 = vst [vmem:[%s149 + $0x318] sm:$0xff] %v348
                %v350 = vld [vmem:[%s148 + $0x638] sm:$0xff]
                %351 = vst [vmem:[%s149 + $0x320] sm:$0xff] %v350
                %v352 = vld [vmem:[%s148 + $0x640] sm:$0xff]
                %353 = vst [vmem:[%s149 + $0x328] sm:$0xff] %v352
                %v354 = vld [vmem:[%s148 + $0x648] sm:$0xff]
                %355 = vst [vmem:[%s149 + $0x330] sm:$0xff] %v354
                %v356 = vld [vmem:[%s148 + $0x650] sm:$0xff]
                %357 = vst [vmem:[%s149 + $0x338] sm:$0xff] %v356
                %v358 = vld [vmem:[%s148 + $0x658] sm:$0xff]
                %359 = vst [vmem:[%s149 + $0x340] sm:$0xff] %v358
                %v360 = vld [vmem:[%s148 + $0x660] sm:$0xff]
                %361 = vst [vmem:[%s149 + $0x348] sm:$0xff] %v360
                %v362 = vld [vmem:[%s148 + $0x668] sm:$0xff]
                %363 = vst [vmem:[%s149 + $0x350] sm:$0xff] %v362
                %v364 = vld [vmem:[%s148 + $0x670] sm:$0xff]
                %365 = vst [vmem:[%s149 + $0x358] sm:$0xff] %v364
                %v366 = vld [vmem:[%s148 + $0x6c0] sm:$0xff]
                %367 = vst [vmem:[%s149 + $0x360] sm:$0xff] %v366
                %v368 = vld [vmem:[%s148 + $0x6c8] sm:$0xff]
                %369 = vst [vmem:[%s149 + $0x368] sm:$0xff] %v368
                %v370 = vld [vmem:[%s148 + $0x6d0] sm:$0xff]
                %371 = vst [vmem:[%s149 + $0x370] sm:$0xff] %v370
                %v372 = vld [vmem:[%s148 + $0x6d8] sm:$0xff]
                %373 = vst [vmem:[%s149 + $0x378] sm:$0xff] %v372
                %v374 = vld [vmem:[%s148 + $0x6e0] sm:$0xff]
                %375 = vst [vmem:[%s149 + $0x380] sm:$0xff] %v374
                %v376 = vld [vmem:[%s148 + $0x6e8] sm:$0xff]
                %377 = vst [vmem:[%s149 + $0x388] sm:$0xff] %v376
                %v378 = vld [vmem:[%s148 + $0x6f0] sm:$0xff]
                %379 = vst [vmem:[%s149 + $0x390] sm:$0xff] %v378
                %v380 = vld [vmem:[%s148 + $0x6f8] sm:$0xff]
                %381 = vst [vmem:[%s149 + $0x398] sm:$0xff] %v380
                %v382 = vld [vmem:[%s148 + $0x700] sm:$0xff]
                %383 = vst [vmem:[%s149 + $0x3a0] sm:$0xff] %v382
                %v384 = vld [vmem:[%s148 + $0x750] sm:$0xff]
                %385 = vst [vmem:[%s149 + $0x3a8] sm:$0xff] %v384
                %v386 = vld [vmem:[%s148 + $0x758] sm:$0xff]
                %387 = vst [vmem:[%s149 + $0x3b0] sm:$0xff] %v386
                %v388 = vld [vmem:[%s148 + $0x760] sm:$0xff]
                %389 = vst [vmem:[%s149 + $0x3b8] sm:$0xff] %v388
                %v390 = vld [vmem:[%s148 + $0x768] sm:$0xff]
                %391 = vst [vmem:[%s149 + $0x3c0] sm:$0xff] %v390
                %v392 = vld [vmem:[%s148 + $0x770] sm:$0xff]
                %393 = vst [vmem:[%s149 + $0x3c8] sm:$0xff] %v392
                %v394 = vld [vmem:[%s148 + $0x778] sm:$0xff]
                %395 = vst [vmem:[%s149 + $0x3d0] sm:$0xff] %v394
                %v396 = vld [vmem:[%s148 + $0x780] sm:$0xff]
                %397 = vst [vmem:[%s149 + $0x3d8] sm:$0xff] %v396
                %v398 = vld [vmem:[%s148 + $0x788] sm:$0xff]
                %399 = vst [vmem:[%s149 + $0x3e0] sm:$0xff] %v398
                %v400 = vld [vmem:[%s148 + $0x790] sm:$0xff]
                %401 = vst [vmem:[%s149 + $0x3e8] sm:$0xff] %v400
                %v402 = vld [vmem:[%s148 + $0x7e0] sm:$0xff]
                %403 = vst [vmem:[%s149 + $0x3f0] sm:$0xff] %v402
                %v404 = vld [vmem:[%s148 + $0x7e8] sm:$0xff]
                %405 = vst [vmem:[%s149 + $0x3f8] sm:$0xff] %v404
                %v406 = vld [vmem:[%s148 + $0x7f0] sm:$0xff]
                %407 = vst [vmem:[%s149 + $0x400] sm:$0xff] %v406
                %v408 = vld [vmem:[%s148 + $0x7f8] sm:$0xff]
                %409 = vst [vmem:[%s149 + $0x408] sm:$0xff] %v408
                %v410 = vld [vmem:[%s148 + $0x800] sm:$0xff]
                %411 = vst [vmem:[%s149 + $0x410] sm:$0xff] %v410
                %v412 = vld [vmem:[%s148 + $0x808] sm:$0xff]
                %413 = vst [vmem:[%s149 + $0x418] sm:$0xff] %v412
                %v414 = vld [vmem:[%s148 + $0x810] sm:$0xff]
                %415 = vst [vmem:[%s149 + $0x420] sm:$0xff] %v414
                %v416 = vld [vmem:[%s148 + $0x818] sm:$0xff]
                %417 = vst [vmem:[%s149 + $0x428] sm:$0xff] %v416
                %v418 = vld [vmem:[%s148 + $0x820] sm:$0xff]
                %419 = vst [vmem:[%s149 + $0x430] sm:$0xff] %v418
                %v420 = vld [vmem:[%s148 + $0x870] sm:$0xff]
                %421 = vst [vmem:[%s149 + $0x438] sm:$0xff] %v420
                %v422 = vld [vmem:[%s148 + $0x878] sm:$0xff]
                %423 = vst [vmem:[%s149 + $0x440] sm:$0xff] %v422
                %v424 = vld [vmem:[%s148 + $0x880] sm:$0xff]
                %425 = vst [vmem:[%s149 + $0x448] sm:$0xff] %v424
                %v426 = vld [vmem:[%s148 + $0x888] sm:$0xff]
                %427 = vst [vmem:[%s149 + $0x450] sm:$0xff] %v426
                %v428 = vld [vmem:[%s148 + $0x890] sm:$0xff]
                %429 = vst [vmem:[%s149 + $0x458] sm:$0xff] %v428
                %v430 = vld [vmem:[%s148 + $0x898] sm:$0xff]
                %431 = vst [vmem:[%s149 + $0x460] sm:$0xff] %v430
                %v432 = vld [vmem:[%s148 + $0x8a0] sm:$0xff]
                %433 = vst [vmem:[%s149 + $0x468] sm:$0xff] %v432
                %v434 = vld [vmem:[%s148 + $0x8a8] sm:$0xff]
                %435 = vst [vmem:[%s149 + $0x470] sm:$0xff] %v434
                %v436 = vld [vmem:[%s148 + $0x8b0] sm:$0xff]
                %437 = vst [vmem:[%s149 + $0x478] sm:$0xff] %v436
                %v438 = vld [vmem:[%s148 + $0x900] sm:$0xff]
                %439 = vst [vmem:[%s149 + $0x480] sm:$0xff] %v438
                %v440 = vld [vmem:[%s148 + $0x908] sm:$0xff]
                %441 = vst [vmem:[%s149 + $0x488] sm:$0xff] %v440
                %v442 = vld [vmem:[%s148 + $0x910] sm:$0xff]
                %443 = vst [vmem:[%s149 + $0x490] sm:$0xff] %v442
                %v444 = vld [vmem:[%s148 + $0x918] sm:$0xff]
                %445 = vst [vmem:[%s149 + $0x498] sm:$0xff] %v444
                %v446 = vld [vmem:[%s148 + $0x920] sm:$0xff]
                %447 = vst [vmem:[%s149 + $0x4a0] sm:$0xff] %v446
                %v448 = vld [vmem:[%s148 + $0x928] sm:$0xff]
                %449 = vst [vmem:[%s149 + $0x4a8] sm:$0xff] %v448
                %v450 = vld [vmem:[%s148 + $0x930] sm:$0xff]
                %451 = vst [vmem:[%s149 + $0x4b0] sm:$0xff] %v450
                %v452 = vld [vmem:[%s148 + $0x938] sm:$0xff]
                %453 = vst [vmem:[%s149 + $0x4b8] sm:$0xff] %v452
                %v454 = vld [vmem:[%s148 + $0x940] sm:$0xff]
                %455 = vst [vmem:[%s149 + $0x4c0] sm:$0xff] %v454
                %v456 = vld [vmem:[%s148 + $0x990] sm:$0xff]
                %457 = vst [vmem:[%s149 + $0x4c8] sm:$0xff] %v456
                %v458 = vld [vmem:[%s148 + $0x998] sm:$0xff]
                %459 = vst [vmem:[%s149 + $0x4d0] sm:$0xff] %v458
                %v460 = vld [vmem:[%s148 + $0x9a0] sm:$0xff]
                %461 = vst [vmem:[%s149 + $0x4d8] sm:$0xff] %v460
                %v462 = vld [vmem:[%s148 + $0x9a8] sm:$0xff]
                %463 = vst [vmem:[%s149 + $0x4e0] sm:$0xff] %v462
                %v464 = vld [vmem:[%s148 + $0x9b0] sm:$0xff]
                %465 = vst [vmem:[%s149 + $0x4e8] sm:$0xff] %v464
                %v466 = vld [vmem:[%s148 + $0x9b8] sm:$0xff]
                %467 = vst [vmem:[%s149 + $0x4f0] sm:$0xff] %v466
                %v468 = vld [vmem:[%s148 + $0x9c0] sm:$0xff]
                %469 = vst [vmem:[%s149 + $0x4f8] sm:$0xff] %v468
                %v470 = vld [vmem:[%s148 + $0x9c8] sm:$0xff]
                %471 = vst [vmem:[%s149 + $0x500] sm:$0xff] %v470
                %v472 = vld [vmem:[%s148 + $0x9d0] sm:$0xff]
                %473 = vst [vmem:[%s149 + $0x508] sm:$0xff] %v472
                %v474 = vld [vmem:[%s148 + $0xa20] sm:$0xff]
                %475 = vst [vmem:[%s149 + $0x510] sm:$0xff] %v474
                %v476 = vld [vmem:[%s148 + $0xa28] sm:$0xff]
                %477 = vst [vmem:[%s149 + $0x518] sm:$0xff] %v476
                %v478 = vld [vmem:[%s148 + $0xa30] sm:$0xff]
                %479 = vst [vmem:[%s149 + $0x520] sm:$0xff] %v478
                %v480 = vld [vmem:[%s148 + $0xa38] sm:$0xff]
                %481 = vst [vmem:[%s149 + $0x528] sm:$0xff] %v480
                %v482 = vld [vmem:[%s148 + $0xa40] sm:$0xff]
                %483 = vst [vmem:[%s149 + $0x530] sm:$0xff] %v482
                %v484 = vld [vmem:[%s148 + $0xa48] sm:$0xff]
                %485 = vst [vmem:[%s149 + $0x538] sm:$0xff] %v484
                %v486 = vld [vmem:[%s148 + $0xa50] sm:$0xff]
                %487 = vst [vmem:[%s149 + $0x540] sm:$0xff] %v486
                %v488 = vld [vmem:[%s148 + $0xa58] sm:$0xff]
                %489 = vst [vmem:[%s149 + $0x548] sm:$0xff] %v488
                %v490 = vld [vmem:[%s148 + $0xa60] sm:$0xff]
                %491 = vst [vmem:[%s149 + $0x550] sm:$0xff] %v490
              $region41: #{cnn_forward.3} parent=35 // loop_footer
                %s147 = sadd.s32 1, %s143
              $region42: #{cnn_forward.3} parent=35 // loop_footer_branch
                %142 = sbr.rel target = $region38
              $region43: #{cnn_forward.3} parent=35 // loop_exit
                _
            $region36: #{cnn_forward.3} parent=31 // pred_fallthru
              _
            // Predicated region
            $region44: #{cnn_forward.3} parent=31 // pred_check
              _
            $region45: #{cnn_forward.3} parent=31 // pred_check_branch
              %493 = sbr.rel target = $region47
            $region46: #{cnn_forward.3} parent=31 // pred_region
              _
            $region47: #{cnn_forward.3} parent=31 // pred_fallthru
              _
          $region32: #{cnn_forward.3} parent=27 // pred_fallthru
            _
          %494 = vnop
        $region28: #{cnn_forward.3} parent=23 // pred_fallthru
          _
      $region24: #{cnn_forward.3} parent=5 // pred_fallthru
        _
      %p495 = scmp.le.s32.totalorder 1, %s9
      %p496 = scmp.lt.s32.totalorder %s9, 3
      %p497 = pnand %p495, %p496
      %p498 = pneg %p497
      // Predicated region
      $region48: #{cnn_forward.3} parent=5 // pred_check
        _
      $region49: #{cnn_forward.3} parent=5 // pred_check_branch
        %500 = sbr.rel (%p497) target = $region51
      $region50: #{cnn_forward.3} parent=5 // pred_region
        %s501 = ssub.s32 %s9, 1
        %s502 = sand.u32 %s43, 1
        %s503 = sand.u32 %s43, 1
        %s504 = smul.addr %s503, 1368
        %s505 = scalar_lea.vmem [#allocation2], %s504
        // Predicated region
        $region52: #{cnn_forward.3} parent=50 // pred_check
          %p506 = pneg %p56
        $region53: #{cnn_forward.3} parent=50 // pred_check_branch
          %508 = sbr.rel (%p506) target = $region55
        $region54: #{cnn_forward.3} parent=50 // pred_region
          _
        $region55: #{cnn_forward.3} parent=50 // pred_fallthru
          _
        %p509 = pneg %p30
        %p510 = pneg %p27
        %s511 = sand.u32 %s43, 1
        %s512 = sand.u32 %s43, 1
        %s513 = smul.addr %s512, 1368
        %s514 = scalar_lea.vmem [#allocation2], %s513
        %p515 = pneg %p56
        %p516 = pneg %p53
        %p517 = pneg %p77
        %p518 = pneg %p74
        %p519 = pneg %p103
        %p520 = pneg %p100
        %s521 = sand.u32 %s90, 1
        %s522 = sand.u32 %s90, 1
        %s523 = smul.addr %s522, 144
        %s524 = scalar_lea.vmem [#allocation3], %s523
        %s525 = smul.u32 18, %s14
        %s526 = smul.u32 18, %s14
        %v528 = vld [vmem:[%s0] sm:$0xff]
        %v529 = vld [vmem:[%s0 + $0x8] sm:$0xff]
        %v530 = vld [vmem:[%s505] sm:$0xff]
        %v531 = vld [vmem:[%s505 + $0x8] sm:$0xff]
        %v532 = vld [vmem:[%s505 + $0x10] sm:$0xff]
        %v533 = vld [vmem:[%s505 + $0x18] sm:$0xff]
        %v534 = vld [vmem:[%s505 + $0x20] sm:$0xff]
        %v535 = vld [vmem:[%s505 + $0x28] sm:$0xff]
        %v536 = vld [vmem:[%s505 + $0x30] sm:$0xff]
        %v537 = vld [vmem:[%s505 + $0x38] sm:$0xff]
        %v538 = vld [vmem:[%s505 + $0x40] sm:$0xff]
        %v539 = vld [vmem:[%s505 + $0x48] sm:$0xff]
        %v540 = vld [vmem:[%s505 + $0x50] sm:$0xff]
        %v541 = vld [vmem:[%s505 + $0x58] sm:$0xff]
        %v542 = vld [vmem:[%s505 + $0x60] sm:$0xff]
        %v543 = vld [vmem:[%s505 + $0x68] sm:$0xff]
        %v544 = vld [vmem:[%s505 + $0x70] sm:$0xff]
        %v545 = vld [vmem:[%s505 + $0x78] sm:$0xff]
        %v546 = vld [vmem:[%s505 + $0x80] sm:$0xff]
        %v547 = vld [vmem:[%s505 + $0x88] sm:$0xff]
        %v548 = vld [vmem:[%s505 + $0x90] sm:$0xff]
        %v549 = vld [vmem:[%s505 + $0x98] sm:$0xff]
        %v550 = vld [vmem:[%s505 + $0xa0] sm:$0xff]
        %v551 = vld [vmem:[%s505 + $0xa8] sm:$0xff]
        %v552 = vld [vmem:[%s505 + $0xb0] sm:$0xff]
        %v553 = vld [vmem:[%s505 + $0xb8] sm:$0xff]
        %v554 = vld [vmem:[%s505 + $0xc0] sm:$0xff]
        %v555 = vld [vmem:[%s505 + $0xc8] sm:$0xff]
        %v556 = vld [vmem:[%s505 + $0xd0] sm:$0xff]
        %v557 = vld [vmem:[%s505 + $0xd8] sm:$0xff]
        %v558 = vld [vmem:[%s505 + $0xe0] sm:$0xff]
        %v559 = vld [vmem:[%s505 + $0xe8] sm:$0xff]
        %v560 = vld [vmem:[%s505 + $0xf0] sm:$0xff]
        %v561 = vld [vmem:[%s505 + $0xf8] sm:$0xff]
        %v562 = vld [vmem:[%s505 + $0x100] sm:$0xff]
        %v563 = vld [vmem:[%s505 + $0x108] sm:$0xff]
        %v564 = vld [vmem:[%s505 + $0x110] sm:$0xff]
        %v565 = vld [vmem:[%s505 + $0x118] sm:$0xff]
        %v566 = vld [vmem:[%s505 + $0x120] sm:$0xff]
        %v567 = vld [vmem:[%s505 + $0x128] sm:$0xff]
        %v568 = vld [vmem:[%s505 + $0x130] sm:$0xff]
        %v569 = vld [vmem:[%s505 + $0x138] sm:$0xff]
        %v570 = vld [vmem:[%s505 + $0x140] sm:$0xff]
        %v571 = vld [vmem:[%s505 + $0x148] sm:$0xff]
        %v572 = vld [vmem:[%s505 + $0x150] sm:$0xff]
        %v573 = vld [vmem:[%s505 + $0x158] sm:$0xff]
        %v574 = vld [vmem:[%s505 + $0x160] sm:$0xff]
        %v575 = vld [vmem:[%s505 + $0x168] sm:$0xff]
        %v576 = vld [vmem:[%s505 + $0x170] sm:$0xff]
        %v577 = vld [vmem:[%s505 + $0x178] sm:$0xff]
        %v578 = vld [vmem:[%s505 + $0x180] sm:$0xff]
        %v579 = vld [vmem:[%s505 + $0x188] sm:$0xff]
        %v580 = vld [vmem:[%s505 + $0x190] sm:$0xff]
        %v581 = vld [vmem:[%s505 + $0x198] sm:$0xff]
        %v582 = vld [vmem:[%s505 + $0x1a0] sm:$0xff]
        %v583 = vld [vmem:[%s505 + $0x1a8] sm:$0xff]
        %v584 = vld [vmem:[%s505 + $0x1b0] sm:$0xff]
        %v585 = vld [vmem:[%s505 + $0x1b8] sm:$0xff]
        %v586 = vld [vmem:[%s505 + $0x1c0] sm:$0xff]
        %v587 = vld [vmem:[%s505 + $0x1c8] sm:$0xff]
        %v588 = vld [vmem:[%s505 + $0x1d0] sm:$0xff]
        %v589 = vld [vmem:[%s505 + $0x1d8] sm:$0xff]
        %v590 = vld [vmem:[%s505 + $0x1e0] sm:$0xff]
        %v591 = vld [vmem:[%s505 + $0x1e8] sm:$0xff]
        %v592 = vld [vmem:[%s505 + $0x1f0] sm:$0xff]
        %v593 = vld [vmem:[%s505 + $0x1f8] sm:$0xff]
        %v594 = vld [vmem:[%s505 + $0x200] sm:$0xff]
        %v595 = vld [vmem:[%s505 + $0x208] sm:$0xff]
        %v596 = vld [vmem:[%s505 + $0x210] sm:$0xff]
        %v597 = vld [vmem:[%s505 + $0x218] sm:$0xff]
        %v598 = vld [vmem:[%s505 + $0x220] sm:$0xff]
        %v599 = vld [vmem:[%s505 + $0x228] sm:$0xff]
        %v600 = vld [vmem:[%s505 + $0x230] sm:$0xff]
        %v601 = vld [vmem:[%s505 + $0x238] sm:$0xff]
        %v602 = vld [vmem:[%s505 + $0x240] sm:$0xff]
        %v603 = vld [vmem:[%s505 + $0x248] sm:$0xff]
        %v604 = vld [vmem:[%s505 + $0x250] sm:$0xff]
        %v605 = vld [vmem:[%s505 + $0x258] sm:$0xff]
        %v606 = vld [vmem:[%s505 + $0x260] sm:$0xff]
        %v607 = vld [vmem:[%s505 + $0x268] sm:$0xff]
        %v608 = vld [vmem:[%s505 + $0x270] sm:$0xff]
        %v609 = vld [vmem:[%s505 + $0x278] sm:$0xff]
        %v610 = vld [vmem:[%s505 + $0x280] sm:$0xff]
        %v611 = vld [vmem:[%s505 + $0x288] sm:$0xff]
        %v612 = vld [vmem:[%s505 + $0x290] sm:$0xff]
        %v613 = vld [vmem:[%s505 + $0x298] sm:$0xff]
        %v614 = vld [vmem:[%s505 + $0x2a0] sm:$0xff]
        %v615 = vld [vmem:[%s505 + $0x2a8] sm:$0xff]
        %v616 = vld [vmem:[%s505 + $0x2b0] sm:$0xff]
        %v617 = vld [vmem:[%s505 + $0x2b8] sm:$0xff]
        %v618 = vld [vmem:[%s505 + $0x2c0] sm:$0xff]
        %v619 = vld [vmem:[%s505 + $0x2c8] sm:$0xff]
        %v620 = vld [vmem:[%s505 + $0x2d0] sm:$0xff]
        %v621 = vld [vmem:[%s505 + $0x2d8] sm:$0xff]
        %v622 = vld [vmem:[%s505 + $0x2e0] sm:$0xff]
        %v623 = vld [vmem:[%s505 + $0x2e8] sm:$0xff]
        %v624 = vld [vmem:[%s505 + $0x2f0] sm:$0xff]
        %v625 = vld [vmem:[%s505 + $0x2f8] sm:$0xff]
        %v626 = vld [vmem:[%s505 + $0x300] sm:$0xff]
        %v627 = vld [vmem:[%s505 + $0x308] sm:$0xff]
        %v628 = vld [vmem:[%s505 + $0x310] sm:$0xff]
        %v629 = vld [vmem:[%s505 + $0x318] sm:$0xff]
        %v630 = vld [vmem:[%s505 + $0x320] sm:$0xff]
        %v631 = vld [vmem:[%s505 + $0x328] sm:$0xff]
        %v632 = vld [vmem:[%s505 + $0x330] sm:$0xff]
        %v633 = vld [vmem:[%s505 + $0x338] sm:$0xff]
        %v634 = vld [vmem:[%s505 + $0x340] sm:$0xff]
        %v635 = vld [vmem:[%s505 + $0x348] sm:$0xff]
        %v636 = vld [vmem:[%s505 + $0x350] sm:$0xff]
        %v637 = vld [vmem:[%s505 + $0x358] sm:$0xff]
        %v638 = vld [vmem:[%s505 + $0x360] sm:$0xff]
        %v639 = vld [vmem:[%s505 + $0x368] sm:$0xff]
        %v640 = vld [vmem:[%s505 + $0x370] sm:$0xff]
        %v641 = vld [vmem:[%s505 + $0x378] sm:$0xff]
        %v642 = vld [vmem:[%s505 + $0x380] sm:$0xff]
        %v643 = vld [vmem:[%s505 + $0x388] sm:$0xff]
        %v644 = vld [vmem:[%s505 + $0x390] sm:$0xff]
        %v645 = vld [vmem:[%s505 + $0x398] sm:$0xff]
        %v646 = vld [vmem:[%s505 + $0x3a0] sm:$0xff]
        %v647 = vld [vmem:[%s505 + $0x3a8] sm:$0xff]
        %v648 = vld [vmem:[%s505 + $0x3b0] sm:$0xff]
        %v649 = vld [vmem:[%s505 + $0x3b8] sm:$0xff]
        %v650 = vld [vmem:[%s505 + $0x3c0] sm:$0xff]
        %v651 = vld [vmem:[%s505 + $0x3c8] sm:$0xff]
        %v652 = vld [vmem:[%s505 + $0x3d0] sm:$0xff]
        %v653 = vld [vmem:[%s505 + $0x3d8] sm:$0xff]
        %v654 = vld [vmem:[%s505 + $0x3e0] sm:$0xff]
        %v655 = vld [vmem:[%s505 + $0x3e8] sm:$0xff]
        %v656 = vld [vmem:[%s505 + $0x3f0] sm:$0xff]
        %v657 = vld [vmem:[%s505 + $0x3f8] sm:$0xff]
        %v658 = vld [vmem:[%s505 + $0x400] sm:$0xff]
        %v659 = vld [vmem:[%s505 + $0x408] sm:$0xff]
        %v660 = vld [vmem:[%s505 + $0x410] sm:$0xff]
        %v661 = vld [vmem:[%s505 + $0x418] sm:$0xff]
        %v662 = vld [vmem:[%s505 + $0x420] sm:$0xff]
        %v663 = vld [vmem:[%s505 + $0x428] sm:$0xff]
        %v664 = vld [vmem:[%s505 + $0x430] sm:$0xff]
        %v665 = vld [vmem:[%s505 + $0x438] sm:$0xff]
        %v666 = vld [vmem:[%s505 + $0x440] sm:$0xff]
        %v667 = vld [vmem:[%s505 + $0x448] sm:$0xff]
        %v668 = vld [vmem:[%s505 + $0x450] sm:$0xff]
        %v669 = vld [vmem:[%s505 + $0x458] sm:$0xff]
        %v670 = vld [vmem:[%s505 + $0x460] sm:$0xff]
        %v671 = vld [vmem:[%s505 + $0x468] sm:$0xff]
        %v672 = vld [vmem:[%s505 + $0x470] sm:$0xff]
        %v673 = vld [vmem:[%s505 + $0x478] sm:$0xff]
        %v674 = vld [vmem:[%s505 + $0x480] sm:$0xff]
        %v675 = vld [vmem:[%s505 + $0x488] sm:$0xff]
        %v676 = vld [vmem:[%s505 + $0x490] sm:$0xff]
        %v677 = vld [vmem:[%s505 + $0x498] sm:$0xff]
        %v678 = vld [vmem:[%s505 + $0x4a0] sm:$0xff]
        %v679 = vld [vmem:[%s505 + $0x4a8] sm:$0xff]
        %v680 = vld [vmem:[%s505 + $0x4b0] sm:$0xff]
        %v681 = vld [vmem:[%s505 + $0x4b8] sm:$0xff]
        %v682 = vld [vmem:[%s505 + $0x4c0] sm:$0xff]
        %v683 = vld [vmem:[%s505 + $0x4c8] sm:$0xff]
        %v684 = vld [vmem:[%s505 + $0x4d0] sm:$0xff]
        %v685 = vld [vmem:[%s505 + $0x4d8] sm:$0xff]
        %v686 = vld [vmem:[%s505 + $0x4e0] sm:$0xff]
        %v687 = vld [vmem:[%s505 + $0x4e8] sm:$0xff]
        %v688 = vld [vmem:[%s505 + $0x4f0] sm:$0xff]
        %v689 = vld [vmem:[%s505 + $0x4f8] sm:$0xff]
        %v690 = vld [vmem:[%s505 + $0x500] sm:$0xff]
        %v691 = vld [vmem:[%s505 + $0x508] sm:$0xff]
        %v692 = vld [vmem:[%s505 + $0x510] sm:$0x33]
        %v693 = vld [vmem:[%s505 + $0x518] sm:$0x33]
        %v694 = vld [vmem:[%s505 + $0x520] sm:$0x33]
        %v695 = vld [vmem:[%s505 + $0x528] sm:$0x33]
        %v696 = vld [vmem:[%s505 + $0x530] sm:$0x33]
        %v697 = vld [vmem:[%s505 + $0x538] sm:$0x33]
        %v698 = vld [vmem:[%s505 + $0x540] sm:$0x33]
        %v699 = vld [vmem:[%s505 + $0x548] sm:$0x33]
        %v700 = vld [vmem:[%s505 + $0x550] sm:$0x33]
        %v703 = vunpack.c.l.b16 %v528
        %v704 = vunpack.c.h.b16 %v528
        %v705 = vunpack.c.l.b16 %v529
        %v706 = vunpack.c.h.b16 %v529
        %v707 = vpack.c.b16 %v705, %v703
        %v708 = vpack.c.b16 %v706, %v704
        %v881 = vunpack.c.l.b16 %v530
        %v882 = vunpack.c.h.b16 %v530
        %v883 = vunpack.c.l.b16 %v531
        %v884 = vunpack.c.h.b16 %v531
        %v885 = vunpack.c.l.b16 %v532
        %v886 = vunpack.c.h.b16 %v532
        %v887 = vunpack.c.l.b16 %v533
        %v888 = vunpack.c.h.b16 %v533
        %v889 = vunpack.c.l.b16 %v534
        %v890 = vunpack.c.h.b16 %v534
        %v891 = vunpack.c.l.b16 %v535
        %v892 = vunpack.c.h.b16 %v535
        %v893 = vunpack.c.l.b16 %v536
        %v894 = vunpack.c.h.b16 %v536
        %v895 = vunpack.c.l.b16 %v537
        %v896 = vunpack.c.h.b16 %v537
        %v897 = vunpack.c.l.b16 %v538
        %v898 = vunpack.c.h.b16 %v538
        %v899 = vunpack.c.l.b16 %v539
        %v900 = vunpack.c.h.b16 %v539
        %v901 = vunpack.c.l.b16 %v540
        %v902 = vunpack.c.h.b16 %v540
        %v903 = vunpack.c.l.b16 %v541
        %v904 = vunpack.c.h.b16 %v541
        %v905 = vunpack.c.l.b16 %v542
        %v906 = vunpack.c.h.b16 %v542
        %v907 = vunpack.c.l.b16 %v543
        %v908 = vunpack.c.h.b16 %v543
        %v909 = vunpack.c.l.b16 %v544
        %v910 = vunpack.c.h.b16 %v544
        %v911 = vunpack.c.l.b16 %v545
        %v912 = vunpack.c.h.b16 %v545
        %v913 = vunpack.c.l.b16 %v546
        %v914 = vunpack.c.h.b16 %v546
        %v915 = vunpack.c.l.b16 %v547
        %v916 = vunpack.c.h.b16 %v547
        %v917 = vunpack.c.l.b16 %v548
        %v918 = vunpack.c.h.b16 %v548
        %v919 = vunpack.c.l.b16 %v549
        %v920 = vunpack.c.h.b16 %v549
        %v921 = vunpack.c.l.b16 %v550
        %v922 = vunpack.c.h.b16 %v550
        %v923 = vunpack.c.l.b16 %v551
        %v924 = vunpack.c.h.b16 %v551
        %v925 = vunpack.c.l.b16 %v552
        %v926 = vunpack.c.h.b16 %v552
        %v927 = vunpack.c.l.b16 %v553
        %v928 = vunpack.c.h.b16 %v553
        %v929 = vunpack.c.l.b16 %v554
        %v930 = vunpack.c.h.b16 %v554
        %v931 = vunpack.c.l.b16 %v555
        %v932 = vunpack.c.h.b16 %v555
        %v933 = vunpack.c.l.b16 %v556
        %v934 = vunpack.c.h.b16 %v556
        %v935 = vunpack.c.l.b16 %v557
        %v936 = vunpack.c.h.b16 %v557
        %v937 = vunpack.c.l.b16 %v558
        %v938 = vunpack.c.h.b16 %v558
        %v939 = vunpack.c.l.b16 %v559
        %v940 = vunpack.c.h.b16 %v559
        %v941 = vunpack.c.l.b16 %v560
        %v942 = vunpack.c.h.b16 %v560
        %v943 = vunpack.c.l.b16 %v561
        %v944 = vunpack.c.h.b16 %v561
        %v945 = vunpack.c.l.b16 %v562
        %v946 = vunpack.c.h.b16 %v562
        %v947 = vunpack.c.l.b16 %v563
        %v948 = vunpack.c.h.b16 %v563
        %v949 = vunpack.c.l.b16 %v564
        %v950 = vunpack.c.h.b16 %v564
        %v951 = vunpack.c.l.b16 %v565
        %v952 = vunpack.c.h.b16 %v565
        %v953 = vunpack.c.l.b16 %v566
        %v954 = vunpack.c.h.b16 %v566
        %v955 = vunpack.c.l.b16 %v567
        %v956 = vunpack.c.h.b16 %v567
        %v957 = vunpack.c.l.b16 %v568
        %v958 = vunpack.c.h.b16 %v568
        %v959 = vunpack.c.l.b16 %v569
        %v960 = vunpack.c.h.b16 %v569
        %v961 = vunpack.c.l.b16 %v570
        %v962 = vunpack.c.h.b16 %v570
        %v963 = vunpack.c.l.b16 %v571
        %v964 = vunpack.c.h.b16 %v571
        %v965 = vunpack.c.l.b16 %v572
        %v966 = vunpack.c.h.b16 %v572
        %v967 = vunpack.c.l.b16 %v573
        %v968 = vunpack.c.h.b16 %v573
        %v969 = vunpack.c.l.b16 %v574
        %v970 = vunpack.c.h.b16 %v574
        %v971 = vunpack.c.l.b16 %v575
        %v972 = vunpack.c.h.b16 %v575
        %v973 = vunpack.c.l.b16 %v576
        %v974 = vunpack.c.h.b16 %v576
        %v975 = vunpack.c.l.b16 %v577
        %v976 = vunpack.c.h.b16 %v577
        %v977 = vunpack.c.l.b16 %v578
        %v978 = vunpack.c.h.b16 %v578
        %v979 = vunpack.c.l.b16 %v579
        %v980 = vunpack.c.h.b16 %v579
        %v981 = vunpack.c.l.b16 %v580
        %v982 = vunpack.c.h.b16 %v580
        %v983 = vunpack.c.l.b16 %v581
        %v984 = vunpack.c.h.b16 %v581
        %v985 = vunpack.c.l.b16 %v582
        %v986 = vunpack.c.h.b16 %v582
        %v987 = vunpack.c.l.b16 %v583
        %v988 = vunpack.c.h.b16 %v583
        %v989 = vunpack.c.l.b16 %v584
        %v990 = vunpack.c.h.b16 %v584
        %v991 = vunpack.c.l.b16 %v585
        %v992 = vunpack.c.h.b16 %v585
        %v993 = vunpack.c.l.b16 %v586
        %v994 = vunpack.c.h.b16 %v586
        %v995 = vunpack.c.l.b16 %v587
        %v996 = vunpack.c.h.b16 %v587
        %v997 = vunpack.c.l.b16 %v588
        %v998 = vunpack.c.h.b16 %v588
        %v999 = vunpack.c.l.b16 %v589
        %v1000 = vunpack.c.h.b16 %v589
        %v1001 = vunpack.c.l.b16 %v590
        %v1002 = vunpack.c.h.b16 %v590
        %v1003 = vunpack.c.l.b16 %v591
        %v1004 = vunpack.c.h.b16 %v591
        %v1005 = vunpack.c.l.b16 %v592
        %v1006 = vunpack.c.h.b16 %v592
        %v1007 = vunpack.c.l.b16 %v593
        %v1008 = vunpack.c.h.b16 %v593
        %v1009 = vunpack.c.l.b16 %v594
        %v1010 = vunpack.c.h.b16 %v594
        %v1011 = vunpack.c.l.b16 %v595
        %v1012 = vunpack.c.h.b16 %v595
        %v1013 = vunpack.c.l.b16 %v596
        %v1014 = vunpack.c.h.b16 %v596
        %v1015 = vunpack.c.l.b16 %v597
        %v1016 = vunpack.c.h.b16 %v597
        %v1017 = vunpack.c.l.b16 %v598
        %v1018 = vunpack.c.h.b16 %v598
        %v1019 = vunpack.c.l.b16 %v599
        %v1020 = vunpack.c.h.b16 %v599
        %v1021 = vunpack.c.l.b16 %v600
        %v1022 = vunpack.c.h.b16 %v600
        %v1023 = vunpack.c.l.b16 %v601
        %v1024 = vunpack.c.h.b16 %v601
        %v1025 = vunpack.c.l.b16 %v602
        %v1026 = vunpack.c.h.b16 %v602
        %v1027 = vunpack.c.l.b16 %v603
        %v1028 = vunpack.c.h.b16 %v603
        %v1029 = vunpack.c.l.b16 %v604
        %v1030 = vunpack.c.h.b16 %v604
        %v1031 = vunpack.c.l.b16 %v605
        %v1032 = vunpack.c.h.b16 %v605
        %v1033 = vunpack.c.l.b16 %v606
        %v1034 = vunpack.c.h.b16 %v606
        %v1035 = vunpack.c.l.b16 %v607
        %v1036 = vunpack.c.h.b16 %v607
        %v1037 = vunpack.c.l.b16 %v608
        %v1038 = vunpack.c.h.b16 %v608
        %v1039 = vunpack.c.l.b16 %v609
        %v1040 = vunpack.c.h.b16 %v609
        %v1041 = vunpack.c.l.b16 %v610
        %v1042 = vunpack.c.h.b16 %v610
        %v1043 = vunpack.c.l.b16 %v611
        %v1044 = vunpack.c.h.b16 %v611
        %v1045 = vunpack.c.l.b16 %v612
        %v1046 = vunpack.c.h.b16 %v612
        %v1047 = vunpack.c.l.b16 %v613
        %v1048 = vunpack.c.h.b16 %v613
        %v1049 = vunpack.c.l.b16 %v614
        %v1050 = vunpack.c.h.b16 %v614
        %v1051 = vunpack.c.l.b16 %v615
        %v1052 = vunpack.c.h.b16 %v615
        %v1053 = vunpack.c.l.b16 %v616
        %v1054 = vunpack.c.h.b16 %v616
        %v1055 = vunpack.c.l.b16 %v617
        %v1056 = vunpack.c.h.b16 %v617
        %v1057 = vunpack.c.l.b16 %v618
        %v1058 = vunpack.c.h.b16 %v618
        %v1059 = vunpack.c.l.b16 %v619
        %v1060 = vunpack.c.h.b16 %v619
        %v1061 = vunpack.c.l.b16 %v620
        %v1062 = vunpack.c.h.b16 %v620
        %v1063 = vunpack.c.l.b16 %v621
        %v1064 = vunpack.c.h.b16 %v621
        %v1065 = vunpack.c.l.b16 %v622
        %v1066 = vunpack.c.h.b16 %v622
        %v1067 = vunpack.c.l.b16 %v623
        %v1068 = vunpack.c.h.b16 %v623
        %v1069 = vunpack.c.l.b16 %v624
        %v1070 = vunpack.c.h.b16 %v624
        %v1071 = vunpack.c.l.b16 %v625
        %v1072 = vunpack.c.h.b16 %v625
        %v1073 = vunpack.c.l.b16 %v626
        %v1074 = vunpack.c.h.b16 %v626
        %v1075 = vunpack.c.l.b16 %v627
        %v1076 = vunpack.c.h.b16 %v627
        %v1077 = vunpack.c.l.b16 %v628
        %v1078 = vunpack.c.h.b16 %v628
        %v1079 = vunpack.c.l.b16 %v629
        %v1080 = vunpack.c.h.b16 %v629
        %v1081 = vunpack.c.l.b16 %v630
        %v1082 = vunpack.c.h.b16 %v630
        %v1083 = vunpack.c.l.b16 %v631
        %v1084 = vunpack.c.h.b16 %v631
        %v1085 = vunpack.c.l.b16 %v632
        %v1086 = vunpack.c.h.b16 %v632
        %v1087 = vunpack.c.l.b16 %v633
        %v1088 = vunpack.c.h.b16 %v633
        %v1089 = vunpack.c.l.b16 %v634
        %v1090 = vunpack.c.h.b16 %v634
        %v1091 = vunpack.c.l.b16 %v635
        %v1092 = vunpack.c.h.b16 %v635
        %v1093 = vunpack.c.l.b16 %v636
        %v1094 = vunpack.c.h.b16 %v636
        %v1095 = vunpack.c.l.b16 %v637
        %v1096 = vunpack.c.h.b16 %v637
        %v1097 = vunpack.c.l.b16 %v638
        %v1098 = vunpack.c.h.b16 %v638
        %v1099 = vunpack.c.l.b16 %v639
        %v1100 = vunpack.c.h.b16 %v639
        %v1101 = vunpack.c.l.b16 %v640
        %v1102 = vunpack.c.h.b16 %v640
        %v1103 = vunpack.c.l.b16 %v641
        %v1104 = vunpack.c.h.b16 %v641
        %v1105 = vunpack.c.l.b16 %v642
        %v1106 = vunpack.c.h.b16 %v642
        %v1107 = vunpack.c.l.b16 %v643
        %v1108 = vunpack.c.h.b16 %v643
        %v1109 = vunpack.c.l.b16 %v644
        %v1110 = vunpack.c.h.b16 %v644
        %v1111 = vunpack.c.l.b16 %v645
        %v1112 = vunpack.c.h.b16 %v645
        %v1113 = vunpack.c.l.b16 %v646
        %v1114 = vunpack.c.h.b16 %v646
        %v1115 = vunpack.c.l.b16 %v647
        %v1116 = vunpack.c.h.b16 %v647
        %v1117 = vunpack.c.l.b16 %v648
        %v1118 = vunpack.c.h.b16 %v648
        %v1119 = vunpack.c.l.b16 %v649
        %v1120 = vunpack.c.h.b16 %v649
        %v1121 = vunpack.c.l.b16 %v650
        %v1122 = vunpack.c.h.b16 %v650
        %v1123 = vunpack.c.l.b16 %v651
        %v1124 = vunpack.c.h.b16 %v651
        %v1125 = vunpack.c.l.b16 %v652
        %v1126 = vunpack.c.h.b16 %v652
        %v1127 = vunpack.c.l.b16 %v653
        %v1128 = vunpack.c.h.b16 %v653
        %v1129 = vunpack.c.l.b16 %v654
        %v1130 = vunpack.c.h.b16 %v654
        %v1131 = vunpack.c.l.b16 %v655
        %v1132 = vunpack.c.h.b16 %v655
        %v1133 = vunpack.c.l.b16 %v656
        %v1134 = vunpack.c.h.b16 %v656
        %v1135 = vunpack.c.l.b16 %v657
        %v1136 = vunpack.c.h.b16 %v657
        %v1137 = vunpack.c.l.b16 %v658
        %v1138 = vunpack.c.h.b16 %v658
        %v1139 = vunpack.c.l.b16 %v659
        %v1140 = vunpack.c.h.b16 %v659
        %v1141 = vunpack.c.l.b16 %v660
        %v1142 = vunpack.c.h.b16 %v660
        %v1143 = vunpack.c.l.b16 %v661
        %v1144 = vunpack.c.h.b16 %v661
        %v1145 = vunpack.c.l.b16 %v662
        %v1146 = vunpack.c.h.b16 %v662
        %v1147 = vunpack.c.l.b16 %v663
        %v1148 = vunpack.c.h.b16 %v663
        %v1149 = vunpack.c.l.b16 %v664
        %v1150 = vunpack.c.h.b16 %v664
        %v1151 = vunpack.c.l.b16 %v665
        %v1152 = vunpack.c.h.b16 %v665
        %v1153 = vunpack.c.l.b16 %v666
        %v1154 = vunpack.c.h.b16 %v666
        %v1155 = vunpack.c.l.b16 %v667
        %v1156 = vunpack.c.h.b16 %v667
        %v1157 = vunpack.c.l.b16 %v668
        %v1158 = vunpack.c.h.b16 %v668
        %v1159 = vunpack.c.l.b16 %v669
        %v1160 = vunpack.c.h.b16 %v669
        %v1161 = vunpack.c.l.b16 %v670
        %v1162 = vunpack.c.h.b16 %v670
        %v1163 = vunpack.c.l.b16 %v671
        %v1164 = vunpack.c.h.b16 %v671
        %v1165 = vunpack.c.l.b16 %v672
        %v1166 = vunpack.c.h.b16 %v672
        %v1167 = vunpack.c.l.b16 %v673
        %v1168 = vunpack.c.h.b16 %v673
        %v1169 = vunpack.c.l.b16 %v674
        %v1170 = vunpack.c.h.b16 %v674
        %v1171 = vunpack.c.l.b16 %v675
        %v1172 = vunpack.c.h.b16 %v675
        %v1173 = vunpack.c.l.b16 %v676
        %v1174 = vunpack.c.h.b16 %v676
        %v1175 = vunpack.c.l.b16 %v677
        %v1176 = vunpack.c.h.b16 %v677
        %v1177 = vunpack.c.l.b16 %v678
        %v1178 = vunpack.c.h.b16 %v678
        %v1179 = vunpack.c.l.b16 %v679
        %v1180 = vunpack.c.h.b16 %v679
        %v1181 = vunpack.c.l.b16 %v680
        %v1182 = vunpack.c.h.b16 %v680
        %v1183 = vunpack.c.l.b16 %v681
        %v1184 = vunpack.c.h.b16 %v681
        %v1185 = vunpack.c.l.b16 %v682
        %v1186 = vunpack.c.h.b16 %v682
        %v1187 = vunpack.c.l.b16 %v683
        %v1188 = vunpack.c.h.b16 %v683
        %v1189 = vunpack.c.l.b16 %v684
        %v1190 = vunpack.c.h.b16 %v684
        %v1191 = vunpack.c.l.b16 %v685
        %v1192 = vunpack.c.h.b16 %v685
        %v1193 = vunpack.c.l.b16 %v686
        %v1194 = vunpack.c.h.b16 %v686
        %v1195 = vunpack.c.l.b16 %v687
        %v1196 = vunpack.c.h.b16 %v687
        %v1197 = vunpack.c.l.b16 %v688
        %v1198 = vunpack.c.h.b16 %v688
        %v1199 = vunpack.c.l.b16 %v689
        %v1200 = vunpack.c.h.b16 %v689
        %v1201 = vunpack.c.l.b16 %v690
        %v1202 = vunpack.c.h.b16 %v690
        %v1203 = vunpack.c.l.b16 %v691
        %v1204 = vunpack.c.h.b16 %v691
        %v1205 = vunpack.c.l.b16 %v692
        %v1206 = vunpack.c.h.b16 %v692
        %v1207 = vunpack.c.l.b16 %v693
        %v1208 = vunpack.c.h.b16 %v693
        %v1209 = vunpack.c.l.b16 %v694
        %v1210 = vunpack.c.h.b16 %v694
        %v1211 = vunpack.c.l.b16 %v695
        %v1212 = vunpack.c.h.b16 %v695
        %v1213 = vunpack.c.l.b16 %v696
        %v1214 = vunpack.c.h.b16 %v696
        %v1215 = vunpack.c.l.b16 %v697
        %v1216 = vunpack.c.h.b16 %v697
        %v1217 = vunpack.c.l.b16 %v698
        %v1218 = vunpack.c.h.b16 %v698
        %v1219 = vunpack.c.l.b16 %v699
        %v1220 = vunpack.c.h.b16 %v699
        %v1221 = vunpack.c.l.b16 %v700
        %v1222 = vunpack.c.h.b16 %v700
        %v1223 = vpack.c.b16 %v899, %v881
        %v1224 = vpack.c.b16 %v900, %v882
        %v1225 = vpack.c.b16 %v901, %v883
        %v1226 = vpack.c.b16 %v902, %v884
        %v1227 = vpack.c.b16 %v903, %v885
        %v1228 = vpack.c.b16 %v904, %v886
        %v1229 = vpack.c.b16 %v905, %v887
        %v1230 = vpack.c.b16 %v906, %v888
        %v1231 = vpack.c.b16 %v907, %v889
        %v1232 = vpack.c.b16 %v908, %v890
        %v1233 = vpack.c.b16 %v909, %v891
        %v1234 = vpack.c.b16 %v910, %v892
        %v1235 = vpack.c.b16 %v911, %v893
        %v1236 = vpack.c.b16 %v912, %v894
        %v1237 = vpack.c.b16 %v913, %v895
        %v1238 = vpack.c.b16 %v914, %v896
        %v1239 = vpack.c.b16 %v915, %v897
        %v1240 = vpack.c.b16 %v916, %v898
        %v1241 = vpack.c.b16 %v935, %v917
        %v1242 = vpack.c.b16 %v936, %v918
        %v1243 = vpack.c.b16 %v937, %v919
        %v1244 = vpack.c.b16 %v938, %v920
        %v1245 = vpack.c.b16 %v939, %v921
        %v1246 = vpack.c.b16 %v940, %v922
        %v1247 = vpack.c.b16 %v941, %v923
        %v1248 = vpack.c.b16 %v942, %v924
        %v1249 = vpack.c.b16 %v943, %v925
        %v1250 = vpack.c.b16 %v944, %v926
        %v1251 = vpack.c.b16 %v945, %v927
        %v1252 = vpack.c.b16 %v946, %v928
        %v1253 = vpack.c.b16 %v947, %v929
        %v1254 = vpack.c.b16 %v948, %v930
        %v1255 = vpack.c.b16 %v949, %v931
        %v1256 = vpack.c.b16 %v950, %v932
        %v1257 = vpack.c.b16 %v951, %v933
        %v1258 = vpack.c.b16 %v952, %v934
        %v1259 = vpack.c.b16 %v971, %v953
        %v1260 = vpack.c.b16 %v972, %v954
        %v1261 = vpack.c.b16 %v973, %v955
        %v1262 = vpack.c.b16 %v974, %v956
        %v1263 = vpack.c.b16 %v975, %v957
        %v1264 = vpack.c.b16 %v976, %v958
        %v1265 = vpack.c.b16 %v977, %v959
        %v1266 = vpack.c.b16 %v978, %v960
        %v1267 = vpack.c.b16 %v979, %v961
        %v1268 = vpack.c.b16 %v980, %v962
        %v1269 = vpack.c.b16 %v981, %v963
        %v1270 = vpack.c.b16 %v982, %v964
        %v1271 = vpack.c.b16 %v983, %v965
        %v1272 = vpack.c.b16 %v984, %v966
        %v1273 = vpack.c.b16 %v985, %v967
        %v1274 = vpack.c.b16 %v986, %v968
        %v1275 = vpack.c.b16 %v987, %v969
        %v1276 = vpack.c.b16 %v988, %v970
        %v1277 = vpack.c.b16 %v1007, %v989
        %v1278 = vpack.c.b16 %v1008, %v990
        %v1279 = vpack.c.b16 %v1009, %v991
        %v1280 = vpack.c.b16 %v1010, %v992
        %v1281 = vpack.c.b16 %v1011, %v993
        %v1282 = vpack.c.b16 %v1012, %v994
        %v1283 = vpack.c.b16 %v1013, %v995
        %v1284 = vpack.c.b16 %v1014, %v996
        %v1285 = vpack.c.b16 %v1015, %v997
        %v1286 = vpack.c.b16 %v1016, %v998
        %v1287 = vpack.c.b16 %v1017, %v999
        %v1288 = vpack.c.b16 %v1018, %v1000
        %v1289 = vpack.c.b16 %v1019, %v1001
        %v1290 = vpack.c.b16 %v1020, %v1002
        %v1291 = vpack.c.b16 %v1021, %v1003
        %v1292 = vpack.c.b16 %v1022, %v1004
        %v1293 = vpack.c.b16 %v1023, %v1005
        %v1294 = vpack.c.b16 %v1024, %v1006
        %v1295 = vpack.c.b16 %v1043, %v1025
        %v1296 = vpack.c.b16 %v1044, %v1026
        %v1297 = vpack.c.b16 %v1045, %v1027
        %v1298 = vpack.c.b16 %v1046, %v1028
        %v1299 = vpack.c.b16 %v1047, %v1029
        %v1300 = vpack.c.b16 %v1048, %v1030
        %v1301 = vpack.c.b16 %v1049, %v1031
        %v1302 = vpack.c.b16 %v1050, %v1032
        %v1303 = vpack.c.b16 %v1051, %v1033
        %v1304 = vpack.c.b16 %v1052, %v1034
        %v1305 = vpack.c.b16 %v1053, %v1035
        %v1306 = vpack.c.b16 %v1054, %v1036
        %v1307 = vpack.c.b16 %v1055, %v1037
        %v1308 = vpack.c.b16 %v1056, %v1038
        %v1309 = vpack.c.b16 %v1057, %v1039
        %v1310 = vpack.c.b16 %v1058, %v1040
        %v1311 = vpack.c.b16 %v1059, %v1041
        %v1312 = vpack.c.b16 %v1060, %v1042
        %v1313 = vpack.c.b16 %v1079, %v1061
        %v1314 = vpack.c.b16 %v1080, %v1062
        %v1315 = vpack.c.b16 %v1081, %v1063
        %v1316 = vpack.c.b16 %v1082, %v1064
        %v1317 = vpack.c.b16 %v1083, %v1065
        %v1318 = vpack.c.b16 %v1084, %v1066
        %v1319 = vpack.c.b16 %v1085, %v1067
        %v1320 = vpack.c.b16 %v1086, %v1068
        %v1321 = vpack.c.b16 %v1087, %v1069
        %v1322 = vpack.c.b16 %v1088, %v1070
        %v1323 = vpack.c.b16 %v1089, %v1071
        %v1324 = vpack.c.b16 %v1090, %v1072
        %v1325 = vpack.c.b16 %v1091, %v1073
        %v1326 = vpack.c.b16 %v1092, %v1074
        %v1327 = vpack.c.b16 %v1093, %v1075
        %v1328 = vpack.c.b16 %v1094, %v1076
        %v1329 = vpack.c.b16 %v1095, %v1077
        %v1330 = vpack.c.b16 %v1096, %v1078
        %v1331 = vpack.c.b16 %v1115, %v1097
        %v1332 = vpack.c.b16 %v1116, %v1098
        %v1333 = vpack.c.b16 %v1117, %v1099
        %v1334 = vpack.c.b16 %v1118, %v1100
        %v1335 = vpack.c.b16 %v1119, %v1101
        %v1336 = vpack.c.b16 %v1120, %v1102
        %v1337 = vpack.c.b16 %v1121, %v1103
        %v1338 = vpack.c.b16 %v1122, %v1104
        %v1339 = vpack.c.b16 %v1123, %v1105
        %v1340 = vpack.c.b16 %v1124, %v1106
        %v1341 = vpack.c.b16 %v1125, %v1107
        %v1342 = vpack.c.b16 %v1126, %v1108
        %v1343 = vpack.c.b16 %v1127, %v1109
        %v1344 = vpack.c.b16 %v1128, %v1110
        %v1345 = vpack.c.b16 %v1129, %v1111
        %v1346 = vpack.c.b16 %v1130, %v1112
        %v1347 = vpack.c.b16 %v1131, %v1113
        %v1348 = vpack.c.b16 %v1132, %v1114
        %v1349 = vpack.c.b16 %v1151, %v1133
        %v1350 = vpack.c.b16 %v1152, %v1134
        %v1351 = vpack.c.b16 %v1153, %v1135
        %v1352 = vpack.c.b16 %v1154, %v1136
        %v1353 = vpack.c.b16 %v1155, %v1137
        %v1354 = vpack.c.b16 %v1156, %v1138
        %v1355 = vpack.c.b16 %v1157, %v1139
        %v1356 = vpack.c.b16 %v1158, %v1140
        %v1357 = vpack.c.b16 %v1159, %v1141
        %v1358 = vpack.c.b16 %v1160, %v1142
        %v1359 = vpack.c.b16 %v1161, %v1143
        %v1360 = vpack.c.b16 %v1162, %v1144
        %v1361 = vpack.c.b16 %v1163, %v1145
        %v1362 = vpack.c.b16 %v1164, %v1146
        %v1363 = vpack.c.b16 %v1165, %v1147
        %v1364 = vpack.c.b16 %v1166, %v1148
        %v1365 = vpack.c.b16 %v1167, %v1149
        %v1366 = vpack.c.b16 %v1168, %v1150
        %v1367 = vpack.c.b16 %v1187, %v1169
        %v1368 = vpack.c.b16 %v1188, %v1170
        %v1369 = vpack.c.b16 %v1189, %v1171
        %v1370 = vpack.c.b16 %v1190, %v1172
        %v1371 = vpack.c.b16 %v1191, %v1173
        %v1372 = vpack.c.b16 %v1192, %v1174
        %v1373 = vpack.c.b16 %v1193, %v1175
        %v1374 = vpack.c.b16 %v1194, %v1176
        %v1375 = vpack.c.b16 %v1195, %v1177
        %v1376 = vpack.c.b16 %v1196, %v1178
        %v1377 = vpack.c.b16 %v1197, %v1179
        %v1378 = vpack.c.b16 %v1198, %v1180
        %v1379 = vpack.c.b16 %v1199, %v1181
        %v1380 = vpack.c.b16 %v1200, %v1182
        %v1381 = vpack.c.b16 %v1201, %v1183
        %v1382 = vpack.c.b16 %v1202, %v1184
        %v1383 = vpack.c.b16 %v1203, %v1185
        %v1384 = vpack.c.b16 %v1204, %v1186
        %v1385 = vpack.c.b16 %v1205, %v1205
        %v1386 = vpack.c.b16 %v1206, %v1206
        %v1387 = vpack.c.b16 %v1207, %v1207
        %v1388 = vpack.c.b16 %v1208, %v1208
        %v1389 = vpack.c.b16 %v1209, %v1209
        %v1390 = vpack.c.b16 %v1210, %v1210
        %v1391 = vpack.c.b16 %v1211, %v1211
        %v1392 = vpack.c.b16 %v1212, %v1212
        %v1393 = vpack.c.b16 %v1213, %v1213
        %v1394 = vpack.c.b16 %v1214, %v1214
        %v1395 = vpack.c.b16 %v1215, %v1215
        %v1396 = vpack.c.b16 %v1216, %v1216
        %v1397 = vpack.c.b16 %v1217, %v1217
        %v1398 = vpack.c.b16 %v1218, %v1218
        %v1399 = vpack.c.b16 %v1219, %v1219
        %v1400 = vpack.c.b16 %v1220, %v1220
        %v1401 = vpack.c.b16 %v1221, %v1221
        %v1402 = vpack.c.b16 %v1222, %v1222
        %vm1565 = vcmask 162816
        %v1567 = vsel %vm1565, %v708, 0
        %vm1569 = vcmask 1041408
        %v1571 = vsel %vm1569, %v1385, 0
        %v1574 = vsel %vm1569, %v1386, 0
        %v1577 = vsel %vm1569, %v1387, 0
        %v1580 = vsel %vm1569, %v1388, 0
        %v1583 = vsel %vm1569, %v1389, 0
        %v1586 = vsel %vm1569, %v1390, 0
        %v1589 = vsel %vm1569, %v1391, 0
        %v1592 = vsel %vm1569, %v1392, 0
        %v1595 = vsel %vm1569, %v1393, 0
        %v1598 = vsel %vm1569, %v1394, 0
        %v1601 = vsel %vm1569, %v1395, 0
        %v1604 = vsel %vm1569, %v1396, 0
        %v1607 = vsel %vm1569, %v1397, 0
        %v1610 = vsel %vm1569, %v1398, 0
        %v1613 = vsel %vm1569, %v1399, 0
        %v1616 = vsel %vm1569, %v1400, 0
        %v1619 = vsel %vm1569, %v1401, 0
        %v1622 = vsel %vm1569, %v1402, 0
        %1624 = vmatprep.subr.bf16.mxu0 %v1224
        %1625 = vmatpush1.bf16.msra.mxu0 %v1223
        %1626 = vmatprep.subr.bf16.mxu0 %v1242
        %1627 = vmatpush1.bf16.msra.mxu0 %v1241
        %1628 = vmatprep.subr.bf16.mxu0 %v1260
        %1629 = vmatpush1.bf16.msra.mxu0 %v1259
        %1630 = vmatprep.subr.bf16.mxu0 %v1278
        %1631 = vmatpush1.bf16.msra.mxu0 %v1277
        %1632 = vmatprep.subr.bf16.mxu0 %v1296
        %1633 = vmatpush1.bf16.msra.mxu0 %v1295
        %1634 = vmatprep.subr.bf16.mxu0 %v1314
        %1635 = vmatpush1.bf16.msra.mxu0 %v1313
        %1636 = vmatprep.subr.bf16.mxu0 %v1332
        %1637 = vmatpush1.bf16.msra.mxu0 %v1331
        %1638 = vmatprep.subr.bf16.mxu0 %v1350
        %1639 = vmatpush1.bf16.msra.mxu0 %v1349
        %1640 = vmatprep.subr.bf16.mxu0 %v1368
        %1641 = vmatpush1.bf16.msra.mxu0 %v1367
        %1642 = vmatprep.subr.bf16.mxu0 %v1574
        %1643 = vmatpush1.bf16.msra.mxu0 %v1571
        %1644 = vmatprep.subr.bf16.mxu0 0
        %1645 = vmatpush1.bf16.msra.mxu0 0
        %1646 = vmatprep.subr.bf16.mxu0 0
        %1647 = vmatpush1.bf16.msra.mxu0 0
        %1648 = vmatprep.subr.bf16.mxu0 0
        %1649 = vmatpush1.bf16.msra.mxu0 0
        %1650 = vmatprep.subr.bf16.mxu0 0
        %1651 = vmatpush1.bf16.msra.mxu0 0
        %1652 = vmatprep.subr.bf16.mxu0 0
        %1653 = vmatpush1.bf16.msra.mxu0 0
        %1654 = vmatprep.subr.bf16.mxu0 0
        %1655 = vmatpush1.bf16.msra.mxu0 0
        %1656 = vmatprep.mubr.bf16.mxu0 %v1567
        %1657 = vmatmul.mubr.bf16.gmra.mrb[0].mxu0 %v707
        %v1658 = vpop.f32.mrb[0].mxu0
        %v1659 = vadd.f32 0.0, %v1658
        %v1660 = vpop.f32.mrb[0].mxu0
        %v1661 = vadd.f32 0.0, %v1660
        %v1662 = vpop.f32.mrb[0].mxu0
        %v1663 = vadd.f32 0.0, %v1662
        %v1664 = vpop.f32.mrb[0].mxu0
        %v1665 = vadd.f32 0.0, %v1664
        %1666 = vdwg.mxu0
        %1667 = vmatprep.subr.bf16.mxu0 %v1226
        %1668 = vmatpush1.bf16.msra.mxu0 %v1225
        %1669 = vmatprep.subr.bf16.mxu0 %v1244
        %1670 = vmatpush1.bf16.msra.mxu0 %v1243
        %1671 = vmatprep.subr.bf16.mxu0 %v1262
        %1672 = vmatpush1.bf16.msra.mxu0 %v1261
        %1673 = vmatprep.subr.bf16.mxu0 %v1280
        %1674 = vmatpush1.bf16.msra.mxu0 %v1279
        %1675 = vmatprep.subr.bf16.mxu0 %v1298
        %1676 = vmatpush1.bf16.msra.mxu0 %v1297
        %1677 = vmatprep.subr.bf16.mxu0 %v1316
        %1678 = vmatpush1.bf16.msra.mxu0 %v1315
        %1679 = vmatprep.subr.bf16.mxu0 %v1334
        %1680 = vmatpush1.bf16.msra.mxu0 %v1333
        %1681 = vmatprep.subr.bf16.mxu0 %v1352
        %1682 = vmatpush1.bf16.msra.mxu0 %v1351
        %1683 = vmatprep.subr.bf16.mxu0 %v1370
        %1684 = vmatpush1.bf16.msra.mxu0 %v1369
        %1685 = vmatprep.subr.bf16.mxu0 %v1580
        %1686 = vmatpush1.bf16.msra.mxu0 %v1577
        %1687 = vmatprep.subr.bf16.mxu0 0
        %1688 = vmatpush1.bf16.msra.mxu0 0
        %1689 = vmatprep.subr.bf16.mxu0 0
        %1690 = vmatpush1.bf16.msra.mxu0 0
        %1691 = vmatprep.subr.bf16.mxu0 0
        %1692 = vmatpush1.bf16.msra.mxu0 0
        %1693 = vmatprep.subr.bf16.mxu0 0
        %1694 = vmatpush1.bf16.msra.mxu0 0
        %1695 = vmatprep.subr.bf16.mxu0 0
        %1696 = vmatpush1.bf16.msra.mxu0 0
        %1697 = vmatprep.subr.bf16.mxu0 0
        %1698 = vmatpush1.bf16.msra.mxu0 0
        %1699 = vmatprep.mubr.bf16.mxu0 %v1567
        %1700 = vmatmul.mubr.bf16.gmra.mrb[0].mxu0 %v707
        %v1701 = vpop.f32.mrb[0].mxu0
        %v1702 = vadd.f32 0.0, %v1701
        %v1703 = vpop.f32.mrb[0].mxu0
        %v1704 = vadd.f32 0.0, %v1703
        %v1705 = vpop.f32.mrb[0].mxu0
        %v1706 = vadd.f32 0.0, %v1705
        %v1707 = vpop.f32.mrb[0].mxu0
        %v1708 = vadd.f32 0.0, %v1707
        %1709 = vdwg.mxu0
        %1710 = vmatprep.subr.bf16.mxu0 %v1228
        %1711 = vmatpush1.bf16.msra.mxu0 %v1227
        %1712 = vmatprep.subr.bf16.mxu0 %v1246
        %1713 = vmatpush1.bf16.msra.mxu0 %v1245
        %1714 = vmatprep.subr.bf16.mxu0 %v1264
        %1715 = vmatpush1.bf16.msra.mxu0 %v1263
        %1716 = vmatprep.subr.bf16.mxu0 %v1282
        %1717 = vmatpush1.bf16.msra.mxu0 %v1281
        %1718 = vmatprep.subr.bf16.mxu0 %v1300
        %1719 = vmatpush1.bf16.msra.mxu0 %v1299
        %1720 = vmatprep.subr.bf16.mxu0 %v1318
        %1721 = vmatpush1.bf16.msra.mxu0 %v1317
        %1722 = vmatprep.subr.bf16.mxu0 %v1336
        %1723 = vmatpush1.bf16.msra.mxu0 %v1335
        %1724 = vmatprep.subr.bf16.mxu0 %v1354
        %1725 = vmatpush1.bf16.msra.mxu0 %v1353
        %1726 = vmatprep.subr.bf16.mxu0 %v1372
        %1727 = vmatpush1.bf16.msra.mxu0 %v1371
        %1728 = vmatprep.subr.bf16.mxu0 %v1586
        %1729 = vmatpush1.bf16.msra.mxu0 %v1583
        %1730 = vmatprep.subr.bf16.mxu0 0
        %1731 = vmatpush1.bf16.msra.mxu0 0
        %1732 = vmatprep.subr.bf16.mxu0 0
        %1733 = vmatpush1.bf16.msra.mxu0 0
        %1734 = vmatprep.subr.bf16.mxu0 0
        %1735 = vmatpush1.bf16.msra.mxu0 0
        %1736 = vmatprep.subr.bf16.mxu0 0
        %1737 = vmatpush1.bf16.msra.mxu0 0
        %1738 = vmatprep.subr.bf16.mxu0 0
        %1739 = vmatpush1.bf16.msra.mxu0 0
        %1740 = vmatprep.subr.bf16.mxu0 0
        %1741 = vmatpush1.bf16.msra.mxu0 0
        %1742 = vmatprep.mubr.bf16.mxu0 %v1567
        %1743 = vmatmul.mubr.bf16.gmra.mrb[0].mxu0 %v707
        %v1744 = vpop.f32.mrb[0].mxu0
        %v1745 = vadd.f32 0.0, %v1744
        %v1746 = vpop.f32.mrb[0].mxu0
        %v1747 = vadd.f32 0.0, %v1746
        %v1748 = vpop.f32.mrb[0].mxu0
        %v1749 = vadd.f32 0.0, %v1748
        %v1750 = vpop.f32.mrb[0].mxu0
        %v1751 = vadd.f32 0.0, %v1750
        %1752 = vdwg.mxu0
        %1753 = vmatprep.subr.bf16.mxu0 %v1230
        %1754 = vmatpush1.bf16.msra.mxu0 %v1229
        %1755 = vmatprep.subr.bf16.mxu0 %v1248
        %1756 = vmatpush1.bf16.msra.mxu0 %v1247
        %1757 = vmatprep.subr.bf16.mxu0 %v1266
        %1758 = vmatpush1.bf16.msra.mxu0 %v1265
        %1759 = vmatprep.subr.bf16.mxu0 %v1284
        %1760 = vmatpush1.bf16.msra.mxu0 %v1283
        %1761 = vmatprep.subr.bf16.mxu0 %v1302
        %1762 = vmatpush1.bf16.msra.mxu0 %v1301
        %1763 = vmatprep.subr.bf16.mxu0 %v1320
        %1764 = vmatpush1.bf16.msra.mxu0 %v1319
        %1765 = vmatprep.subr.bf16.mxu0 %v1338
        %1766 = vmatpush1.bf16.msra.mxu0 %v1337
        %1767 = vmatprep.subr.bf16.mxu0 %v1356
        %1768 = vmatpush1.bf16.msra.mxu0 %v1355
        %1769 = vmatprep.subr.bf16.mxu0 %v1374
        %1770 = vmatpush1.bf16.msra.mxu0 %v1373
        %1771 = vmatprep.subr.bf16.mxu0 %v1592
        %1772 = vmatpush1.bf16.msra.mxu0 %v1589
        %1773 = vmatprep.subr.bf16.mxu0 0
        %1774 = vmatpush1.bf16.msra.mxu0 0
        %1775 = vmatprep.subr.bf16.mxu0 0
        %1776 = vmatpush1.bf16.msra.mxu0 0
        %1777 = vmatprep.subr.bf16.mxu0 0
        %1778 = vmatpush1.bf16.msra.mxu0 0
        %1779 = vmatprep.subr.bf16.mxu0 0
        %1780 = vmatpush1.bf16.msra.mxu0 0
        %1781 = vmatprep.subr.bf16.mxu0 0
        %1782 = vmatpush1.bf16.msra.mxu0 0
        %1783 = vmatprep.subr.bf16.mxu0 0
        %1784 = vmatpush1.bf16.msra.mxu0 0
        %1785 = vmatprep.mubr.bf16.mxu0 %v1567
        %1786 = vmatmul.mubr.bf16.gmra.mrb[0].mxu0 %v707
        %v1787 = vpop.f32.mrb[0].mxu0
        %v1788 = vadd.f32 0.0, %v1787
        %v1789 = vpop.f32.mrb[0].mxu0
        %v1790 = vadd.f32 0.0, %v1789
        %v1791 = vpop.f32.mrb[0].mxu0
        %v1792 = vadd.f32 0.0, %v1791
        %v1793 = vpop.f32.mrb[0].mxu0
        %v1794 = vadd.f32 0.0, %v1793
        %1795 = vdwg.mxu0
        %1796 = vmatprep.subr.bf16.mxu0 %v1232
        %1797 = vmatpush1.bf16.msra.mxu0 %v1231
        %1798 = vmatprep.subr.bf16.mxu0 %v1250
        %1799 = vmatpush1.bf16.msra.mxu0 %v1249
        %1800 = vmatprep.subr.bf16.mxu0 %v1268
        %1801 = vmatpush1.bf16.msra.mxu0 %v1267
        %1802 = vmatprep.subr.bf16.mxu0 %v1286
        %1803 = vmatpush1.bf16.msra.mxu0 %v1285
        %1804 = vmatprep.subr.bf16.mxu0 %v1304
        %1805 = vmatpush1.bf16.msra.mxu0 %v1303
        %1806 = vmatprep.subr.bf16.mxu0 %v1322
        %1807 = vmatpush1.bf16.msra.mxu0 %v1321
        %1808 = vmatprep.subr.bf16.mxu0 %v1340
        %1809 = vmatpush1.bf16.msra.mxu0 %v1339
        %1810 = vmatprep.subr.bf16.mxu0 %v1358
        %1811 = vmatpush1.bf16.msra.mxu0 %v1357
        %1812 = vmatprep.subr.bf16.mxu0 %v1376
        %1813 = vmatpush1.bf16.msra.mxu0 %v1375
        %1814 = vmatprep.subr.bf16.mxu0 %v1598
        %1815 = vmatpush1.bf16.msra.mxu0 %v1595
        %1816 = vmatprep.subr.bf16.mxu0 0
        %1817 = vmatpush1.bf16.msra.mxu0 0
        %1818 = vmatprep.subr.bf16.mxu0 0
        %1819 = vmatpush1.bf16.msra.mxu0 0
        %1820 = vmatprep.subr.bf16.mxu0 0
        %1821 = vmatpush1.bf16.msra.mxu0 0
        %1822 = vmatprep.subr.bf16.mxu0 0
        %1823 = vmatpush1.bf16.msra.mxu0 0
        %1824 = vmatprep.subr.bf16.mxu0 0
        %1825 = vmatpush1.bf16.msra.mxu0 0
        %1826 = vmatprep.subr.bf16.mxu0 0
        %1827 = vmatpush1.bf16.msra.mxu0 0
        %1828 = vmatprep.mubr.bf16.mxu0 %v1567
        %1829 = vmatmul.mubr.bf16.gmra.mrb[0].mxu0 %v707
        %v1830 = vpop.f32.mrb[0].mxu0
        %v1831 = vadd.f32 0.0, %v1830
        %v1832 = vpop.f32.mrb[0].mxu0
        %v1833 = vadd.f32 0.0, %v1832
        %v1834 = vpop.f32.mrb[0].mxu0
        %v1835 = vadd.f32 0.0, %v1834
        %v1836 = vpop.f32.mrb[0].mxu0
        %v1837 = vadd.f32 0.0, %v1836
        %1838 = vdwg.mxu0
        %1839 = vmatprep.subr.bf16.mxu0 %v1234
        %1840 = vmatpush1.bf16.msra.mxu0 %v1233
        %1841 = vmatprep.subr.bf16.mxu0 %v1252
        %1842 = vmatpush1.bf16.msra.mxu0 %v1251
        %1843 = vmatprep.subr.bf16.mxu0 %v1270
        %1844 = vmatpush1.bf16.msra.mxu0 %v1269
        %1845 = vmatprep.subr.bf16.mxu0 %v1288
        %1846 = vmatpush1.bf16.msra.mxu0 %v1287
        %1847 = vmatprep.subr.bf16.mxu0 %v1306
        %1848 = vmatpush1.bf16.msra.mxu0 %v1305
        %1849 = vmatprep.subr.bf16.mxu0 %v1324
        %1850 = vmatpush1.bf16.msra.mxu0 %v1323
        %1851 = vmatprep.subr.bf16.mxu0 %v1342
        %1852 = vmatpush1.bf16.msra.mxu0 %v1341
        %1853 = vmatprep.subr.bf16.mxu0 %v1360
        %1854 = vmatpush1.bf16.msra.mxu0 %v1359
        %1855 = vmatprep.subr.bf16.mxu0 %v1378
        %1856 = vmatpush1.bf16.msra.mxu0 %v1377
        %1857 = vmatprep.subr.bf16.mxu0 %v1604
        %1858 = vmatpush1.bf16.msra.mxu0 %v1601
        %1859 = vmatprep.subr.bf16.mxu0 0
        %1860 = vmatpush1.bf16.msra.mxu0 0
        %1861 = vmatprep.subr.bf16.mxu0 0
        %1862 = vmatpush1.bf16.msra.mxu0 0
        %1863 = vmatprep.subr.bf16.mxu0 0
        %1864 = vmatpush1.bf16.msra.mxu0 0
        %1865 = vmatprep.subr.bf16.mxu0 0
        %1866 = vmatpush1.bf16.msra.mxu0 0
        %1867 = vmatprep.subr.bf16.mxu0 0
        %1868 = vmatpush1.bf16.msra.mxu0 0
        %1869 = vmatprep.subr.bf16.mxu0 0
        %1870 = vmatpush1.bf16.msra.mxu0 0
        %1871 = vmatprep.mubr.bf16.mxu0 %v1567
        %1872 = vmatmul.mubr.bf16.gmra.mrb[0].mxu0 %v707
        %v1873 = vpop.f32.mrb[0].mxu0
        %v1874 = vadd.f32 0.0, %v1873
        %v1875 = vpop.f32.mrb[0].mxu0
        %v1876 = vadd.f32 0.0, %v1875
        %v1877 = vpop.f32.mrb[0].mxu0
        %v1878 = vadd.f32 0.0, %v1877
        %v1879 = vpop.f32.mrb[0].mxu0
        %v1880 = vadd.f32 0.0, %v1879
        %1881 = vdwg.mxu0
        %1882 = vmatprep.subr.bf16.mxu0 %v1236
        %1883 = vmatpush1.bf16.msra.mxu0 %v1235
        %1884 = vmatprep.subr.bf16.mxu0 %v1254
        %1885 = vmatpush1.bf16.msra.mxu0 %v1253
        %1886 = vmatprep.subr.bf16.mxu0 %v1272
        %1887 = vmatpush1.bf16.msra.mxu0 %v1271
        %1888 = vmatprep.subr.bf16.mxu0 %v1290
        %1889 = vmatpush1.bf16.msra.mxu0 %v1289
        %1890 = vmatprep.subr.bf16.mxu0 %v1308
        %1891 = vmatpush1.bf16.msra.mxu0 %v1307
        %1892 = vmatprep.subr.bf16.mxu0 %v1326
        %1893 = vmatpush1.bf16.msra.mxu0 %v1325
        %1894 = vmatprep.subr.bf16.mxu0 %v1344
        %1895 = vmatpush1.bf16.msra.mxu0 %v1343
        %1896 = vmatprep.subr.bf16.mxu0 %v1362
        %1897 = vmatpush1.bf16.msra.mxu0 %v1361
        %1898 = vmatprep.subr.bf16.mxu0 %v1380
        %1899 = vmatpush1.bf16.msra.mxu0 %v1379
        %1900 = vmatprep.subr.bf16.mxu0 %v1610
        %1901 = vmatpush1.bf16.msra.mxu0 %v1607
        %1902 = vmatprep.subr.bf16.mxu0 0
        %1903 = vmatpush1.bf16.msra.mxu0 0
        %1904 = vmatprep.subr.bf16.mxu0 0
        %1905 = vmatpush1.bf16.msra.mxu0 0
        %1906 = vmatprep.subr.bf16.mxu0 0
        %1907 = vmatpush1.bf16.msra.mxu0 0
        %1908 = vmatprep.subr.bf16.mxu0 0
        %1909 = vmatpush1.bf16.msra.mxu0 0
        %1910 = vmatprep.subr.bf16.mxu0 0
        %1911 = vmatpush1.bf16.msra.mxu0 0
        %1912 = vmatprep.subr.bf16.mxu0 0
        %1913 = vmatpush1.bf16.msra.mxu0 0
        %1914 = vmatprep.mubr.bf16.mxu0 %v1567
        %1915 = vmatmul.mubr.bf16.gmra.mrb[0].mxu0 %v707
        %v1916 = vpop.f32.mrb[0].mxu0
        %v1917 = vadd.f32 0.0, %v1916
        %v1918 = vpop.f32.mrb[0].mxu0
        %v1919 = vadd.f32 0.0, %v1918
        %v1920 = vpop.f32.mrb[0].mxu0
        %v1921 = vadd.f32 0.0, %v1920
        %v1922 = vpop.f32.mrb[0].mxu0
        %v1923 = vadd.f32 0.0, %v1922
        %1924 = vdwg.mxu0
        %1925 = vmatprep.subr.bf16.mxu0 %v1238
        %1926 = vmatpush1.bf16.msra.mxu0 %v1237
        %1927 = vmatprep.subr.bf16.mxu0 %v1256
        %1928 = vmatpush1.bf16.msra.mxu0 %v1255
        %1929 = vmatprep.subr.bf16.mxu0 %v1274
        %1930 = vmatpush1.bf16.msra.mxu0 %v1273
        %1931 = vmatprep.subr.bf16.mxu0 %v1292
        %1932 = vmatpush1.bf16.msra.mxu0 %v1291
        %1933 = vmatprep.subr.bf16.mxu0 %v1310
        %1934 = vmatpush1.bf16.msra.mxu0 %v1309
        %1935 = vmatprep.subr.bf16.mxu0 %v1328
        %1936 = vmatpush1.bf16.msra.mxu0 %v1327
        %1937 = vmatprep.subr.bf16.mxu0 %v1346
        %1938 = vmatpush1.bf16.msra.mxu0 %v1345
        %1939 = vmatprep.subr.bf16.mxu0 %v1364
        %1940 = vmatpush1.bf16.msra.mxu0 %v1363
        %1941 = vmatprep.subr.bf16.mxu0 %v1382
        %1942 = vmatpush1.bf16.msra.mxu0 %v1381
        %1943 = vmatprep.subr.bf16.mxu0 %v1616
        %1944 = vmatpush1.bf16.msra.mxu0 %v1613
        %1945 = vmatprep.subr.bf16.mxu0 0
        %1946 = vmatpush1.bf16.msra.mxu0 0
        %1947 = vmatprep.subr.bf16.mxu0 0
        %1948 = vmatpush1.bf16.msra.mxu0 0
        %1949 = vmatprep.subr.bf16.mxu0 0
        %1950 = vmatpush1.bf16.msra.mxu0 0
        %1951 = vmatprep.subr.bf16.mxu0 0
        %1952 = vmatpush1.bf16.msra.mxu0 0
        %1953 = vmatprep.subr.bf16.mxu0 0
        %1954 = vmatpush1.bf16.msra.mxu0 0
        %1955 = vmatprep.subr.bf16.mxu0 0
        %1956 = vmatpush1.bf16.msra.mxu0 0
        %1957 = vmatprep.mubr.bf16.mxu0 %v1567
        %1958 = vmatmul.mubr.bf16.gmra.mrb[0].mxu0 %v707
        %v1959 = vpop.f32.mrb[0].mxu0
        %v1960 = vadd.f32 0.0, %v1959
        %v1961 = vpop.f32.mrb[0].mxu0
        %v1962 = vadd.f32 0.0, %v1961
        %v1963 = vpop.f32.mrb[0].mxu0
        %v1964 = vadd.f32 0.0, %v1963
        %v1965 = vpop.f32.mrb[0].mxu0
        %v1966 = vadd.f32 0.0, %v1965
        %1967 = vdwg.mxu0
        %1968 = vmatprep.subr.bf16.mxu0 %v1240
        %1969 = vmatpush1.bf16.msra.mxu0 %v1239
        %1970 = vmatprep.subr.bf16.mxu0 %v1258
        %1971 = vmatpush1.bf16.msra.mxu0 %v1257
        %1972 = vmatprep.subr.bf16.mxu0 %v1276
        %1973 = vmatpush1.bf16.msra.mxu0 %v1275
        %1974 = vmatprep.subr.bf16.mxu0 %v1294
        %1975 = vmatpush1.bf16.msra.mxu0 %v1293
        %1976 = vmatprep.subr.bf16.mxu0 %v1312
        %1977 = vmatpush1.bf16.msra.mxu0 %v1311
        %1978 = vmatprep.subr.bf16.mxu0 %v1330
        %1979 = vmatpush1.bf16.msra.mxu0 %v1329
        %1980 = vmatprep.subr.bf16.mxu0 %v1348
        %1981 = vmatpush1.bf16.msra.mxu0 %v1347
        %1982 = vmatprep.subr.bf16.mxu0 %v1366
        %1983 = vmatpush1.bf16.msra.mxu0 %v1365
        %1984 = vmatprep.subr.bf16.mxu0 %v1384
        %1985 = vmatpush1.bf16.msra.mxu0 %v1383
        %1986 = vmatprep.subr.bf16.mxu0 %v1622
        %1987 = vmatpush1.bf16.msra.mxu0 %v1619
        %1988 = vmatprep.subr.bf16.mxu0 0
        %1989 = vmatpush1.bf16.msra.mxu0 0
        %1990 = vmatprep.subr.bf16.mxu0 0
        %1991 = vmatpush1.bf16.msra.mxu0 0
        %1992 = vmatprep.subr.bf16.mxu0 0
        %1993 = vmatpush1.bf16.msra.mxu0 0
        %1994 = vmatprep.subr.bf16.mxu0 0
        %1995 = vmatpush1.bf16.msra.mxu0 0
        %1996 = vmatprep.subr.bf16.mxu0 0
        %1997 = vmatpush1.bf16.msra.mxu0 0
        %1998 = vmatprep.subr.bf16.mxu0 0
        %1999 = vmatpush1.bf16.msra.mxu0 0
        %2000 = vmatprep.mubr.bf16.mxu0 %v1567
        %2001 = vmatmul.mubr.bf16.gmra.mrb[0].mxu0 %v707
        %v2002 = vpop.f32.mrb[0].mxu0
        %v2003 = vadd.f32 0.0, %v2002
        %v2004 = vpop.f32.mrb[0].mxu0
        %v2005 = vadd.f32 0.0, %v2004
        %v2006 = vpop.f32.mrb[0].mxu0
        %v2007 = vadd.f32 0.0, %v2006
        %v2008 = vpop.f32.mrb[0].mxu0
        %v2009 = vadd.f32 0.0, %v2008
        %2010 = vdwg.mxu0
        %v2011 = vmax.f32 %v1659, 0.0
        %v2012 = vmax.f32 %v1661, 0.0
        %v2013 = vmax.f32 %v1702, 0.0
        %v2014 = vmax.f32 %v1704, 0.0
        %v2015 = vmax.f32 %v1745, 0.0
        %v2016 = vmax.f32 %v1747, 0.0
        %v2017 = vmax.f32 %v1788, 0.0
        %v2018 = vmax.f32 %v1790, 0.0
        %v2019 = vmax.f32 %v1831, 0.0
        %v2020 = vmax.f32 %v1833, 0.0
        %v2021 = vmax.f32 %v1874, 0.0
        %v2022 = vmax.f32 %v1876, 0.0
        %v2023 = vmax.f32 %v1917, 0.0
        %v2024 = vmax.f32 %v1919, 0.0
        %v2025 = vmax.f32 %v1960, 0.0
        %v2026 = vmax.f32 %v1962, 0.0
        %v2027 = vmax.f32 %v2003, 0.0
        %v2028 = vmax.f32 %v2005, 0.0
        %v2029 = vmax.f32 %v1663, 0.0
        %v2030 = vmax.f32 %v1665, 0.0
        %v2031 = vmax.f32 %v1706, 0.0
        %v2032 = vmax.f32 %v1708, 0.0
        %v2033 = vmax.f32 %v1749, 0.0
        %v2034 = vmax.f32 %v1751, 0.0
        %v2035 = vmax.f32 %v1792, 0.0
        %v2036 = vmax.f32 %v1794, 0.0
        %v2037 = vmax.f32 %v1835, 0.0
        %v2038 = vmax.f32 %v1837, 0.0
        %v2039 = vmax.f32 %v1878, 0.0
        %v2040 = vmax.f32 %v1880, 0.0
        %v2041 = vmax.f32 %v1921, 0.0
        %v2042 = vmax.f32 %v1923, 0.0
        %v2043 = vmax.f32 %v1964, 0.0
        %v2044 = vmax.f32 %v1966, 0.0
        %v2045 = vmax.f32 %v2007, 0.0
        %v2046 = vmax.f32 %v2009, 0.0
        %v2047 = vld [vmem:[%s2] sm:$0xff]
        %v2048 = vld [vmem:[%s2 + $0x8] sm:$0xff]
        %2050 = vset.pattern.permute.xlu0 0
        %2051 = vperm.xlu0 %2050, %v2047
        %v2052 = vpop.permute.xlu0 %2051
        %2055 = vset.pattern.permute.xlu0 0
        %2056 = vperm.xlu0 %2055, %v2048
        %v2057 = vpop.permute.xlu0 %2056
        %v2059 = vmul.f32 %v2011, %v2052
        %v2060 = vmul.f32 %v2012, %v2052
        %v2061 = vmul.f32 %v2013, %v2052
        %v2062 = vmul.f32 %v2014, %v2052
        %v2063 = vmul.f32 %v2015, %v2052
        %v2064 = vmul.f32 %v2016, %v2052
        %v2065 = vmul.f32 %v2017, %v2052
        %v2066 = vmul.f32 %v2018, %v2052
        %v2067 = vmul.f32 %v2019, %v2052
        %v2068 = vmul.f32 %v2020, %v2052
        %v2069 = vmul.f32 %v2021, %v2052
        %v2070 = vmul.f32 %v2022, %v2052
        %v2071 = vmul.f32 %v2023, %v2052
        %v2072 = vmul.f32 %v2024, %v2052
        %v2073 = vmul.f32 %v2025, %v2052
        %v2074 = vmul.f32 %v2026, %v2052
        %v2075 = vmul.f32 %v2027, %v2052
        %v2076 = vmul.f32 %v2028, %v2052
        %v2077 = vmul.f32 %v2029, %v2057
        %v2078 = vmul.f32 %v2030, %v2057
        %v2079 = vmul.f32 %v2031, %v2057
        %v2080 = vmul.f32 %v2032, %v2057
        %v2081 = vmul.f32 %v2033, %v2057
        %v2082 = vmul.f32 %v2034, %v2057
        %v2083 = vmul.f32 %v2035, %v2057
        %v2084 = vmul.f32 %v2036, %v2057
        %v2085 = vmul.f32 %v2037, %v2057
        %v2086 = vmul.f32 %v2038, %v2057
        %v2087 = vmul.f32 %v2039, %v2057
        %v2088 = vmul.f32 %v2040, %v2057
        %v2089 = vmul.f32 %v2041, %v2057
        %v2090 = vmul.f32 %v2042, %v2057
        %v2091 = vmul.f32 %v2043, %v2057
        %v2092 = vmul.f32 %v2044, %v2057
        %v2093 = vmul.f32 %v2045, %v2057
        %v2094 = vmul.f32 %v2046, %v2057
        %2095 = vset.pattern.permute.xlu0 1
        %2096 = vperm.xlu0 %2095, %v2047
        %v2097 = vpop.permute.xlu0 %2096
        %2099 = vset.pattern.permute.xlu0 1
        %2100 = vperm.xlu0 %2099, %v2048
        %v2101 = vpop.permute.xlu0 %2100
        %v2103 = vadd.f32 %v2059, %v2097
        %v2104 = vadd.f32 %v2060, %v2097
        %v2105 = vadd.f32 %v2061, %v2097
        %v2106 = vadd.f32 %v2062, %v2097
        %v2107 = vadd.f32 %v2063, %v2097
        %v2108 = vadd.f32 %v2064, %v2097
        %v2109 = vadd.f32 %v2065, %v2097
        %v2110 = vadd.f32 %v2066, %v2097
        %v2111 = vadd.f32 %v2067, %v2097
        %v2112 = vadd.f32 %v2068, %v2097
        %v2113 = vadd.f32 %v2069, %v2097
        %v2114 = vadd.f32 %v2070, %v2097
        %v2115 = vadd.f32 %v2071, %v2097
        %v2116 = vadd.f32 %v2072, %v2097
        %v2117 = vadd.f32 %v2073, %v2097
        %v2118 = vadd.f32 %v2074, %v2097
        %v2119 = vadd.f32 %v2075, %v2097
        %v2120 = vadd.f32 %v2076, %v2097
        %v2121 = vadd.f32 %v2077, %v2101
        %v2122 = vadd.f32 %v2078, %v2101
        %v2123 = vadd.f32 %v2079, %v2101
        %v2124 = vadd.f32 %v2080, %v2101
        %v2125 = vadd.f32 %v2081, %v2101
        %v2126 = vadd.f32 %v2082, %v2101
        %v2127 = vadd.f32 %v2083, %v2101
        %v2128 = vadd.f32 %v2084, %v2101
        %v2129 = vadd.f32 %v2085, %v2101
        %v2130 = vadd.f32 %v2086, %v2101
        %v2131 = vadd.f32 %v2087, %v2101
        %v2132 = vadd.f32 %v2088, %v2101
        %v2133 = vadd.f32 %v2089, %v2101
        %v2134 = vadd.f32 %v2090, %v2101
        %v2135 = vadd.f32 %v2091, %v2101
        %v2136 = vadd.f32 %v2092, %v2101
        %v2137 = vadd.f32 %v2093, %v2101
        %v2138 = vadd.f32 %v2094, %v2101
        %v2139 = vpack.c.bf16 %v2121, %v2103
        %v2140 = vpack.c.bf16 %v2122, %v2104
        %v2141 = vpack.c.bf16 %v2123, %v2105
        %v2142 = vpack.c.bf16 %v2124, %v2106
        %v2143 = vpack.c.bf16 %v2125, %v2107
        %v2144 = vpack.c.bf16 %v2126, %v2108
        %v2145 = vpack.c.bf16 %v2127, %v2109
        %v2146 = vpack.c.bf16 %v2128, %v2110
        %v2147 = vpack.c.bf16 %v2129, %v2111
        %v2148 = vpack.c.bf16 %v2130, %v2112
        %v2149 = vpack.c.bf16 %v2131, %v2113
        %v2150 = vpack.c.bf16 %v2132, %v2114
        %v2151 = vpack.c.bf16 %v2133, %v2115
        %v2152 = vpack.c.bf16 %v2134, %v2116
        %v2153 = vpack.c.bf16 %v2135, %v2117
        %v2154 = vpack.c.bf16 %v2136, %v2118
        %v2155 = vpack.c.bf16 %v2137, %v2119
        %v2156 = vpack.c.bf16 %v2138, %v2120
        %v2175 = vunpack.c.l.b16 %v2139
        %v2176 = vunpack.c.l.b16 %v2140
        %v2177 = vunpack.c.l.b16 %v2141
        %v2178 = vunpack.c.l.b16 %v2142
        %v2179 = vunpack.c.l.b16 %v2143
        %v2180 = vunpack.c.l.b16 %v2144
        %v2181 = vunpack.c.l.b16 %v2145
        %v2182 = vunpack.c.l.b16 %v2146
        %v2183 = vunpack.c.l.b16 %v2147
        %v2184 = vunpack.c.l.b16 %v2148
        %v2185 = vunpack.c.l.b16 %v2149
        %v2186 = vunpack.c.l.b16 %v2150
        %v2187 = vunpack.c.l.b16 %v2151
        %v2188 = vunpack.c.l.b16 %v2152
        %v2189 = vunpack.c.l.b16 %v2153
        %v2190 = vunpack.c.l.b16 %v2154
        %v2191 = vunpack.c.l.b16 %v2155
        %v2192 = vunpack.c.l.b16 %v2156
        %v2193 = vunpack.c.h.b16 %v2139
        %v2194 = vunpack.c.h.b16 %v2140
        %v2195 = vunpack.c.h.b16 %v2141
        %v2196 = vunpack.c.h.b16 %v2142
        %v2197 = vunpack.c.h.b16 %v2143
        %v2198 = vunpack.c.h.b16 %v2144
        %v2199 = vunpack.c.h.b16 %v2145
        %v2200 = vunpack.c.h.b16 %v2146
        %v2201 = vunpack.c.h.b16 %v2147
        %v2202 = vunpack.c.h.b16 %v2148
        %v2203 = vunpack.c.h.b16 %v2149
        %v2204 = vunpack.c.h.b16 %v2150
        %v2205 = vunpack.c.h.b16 %v2151
        %v2206 = vunpack.c.h.b16 %v2152
        %v2207 = vunpack.c.h.b16 %v2153
        %v2208 = vunpack.c.h.b16 %v2154
        %v2209 = vunpack.c.h.b16 %v2155
        %v2210 = vunpack.c.h.b16 %v2156
        %v2211 = vpack.c.b16 %v2176, %v2175
        %v2212 = vpack.c.b16 %v2178, %v2177
        %v2213 = vpack.c.b16 %v2180, %v2179
        %v2214 = vpack.c.b16 %v2182, %v2181
        %v2215 = vpack.c.b16 %v2184, %v2183
        %v2216 = vpack.c.b16 %v2186, %v2185
        %v2217 = vpack.c.b16 %v2188, %v2187
        %v2218 = vpack.c.b16 %v2190, %v2189
        %v2219 = vpack.c.b16 %v2192, %v2191
        %v2220 = vpack.c.b16 %v2194, %v2193
        %v2221 = vpack.c.b16 %v2196, %v2195
        %v2222 = vpack.c.b16 %v2198, %v2197
        %v2223 = vpack.c.b16 %v2200, %v2199
        %v2224 = vpack.c.b16 %v2202, %v2201
        %v2225 = vpack.c.b16 %v2204, %v2203
        %v2226 = vpack.c.b16 %v2206, %v2205
        %v2227 = vpack.c.b16 %v2208, %v2207
        %v2228 = vpack.c.b16 %v2210, %v2209
        %2247 = vst [vmem:[%s524] sm:$0xff] %v2211
        %2248 = vst [vmem:[%s524 + $0x8] sm:$0xff] %v2212
        %2249 = vst [vmem:[%s524 + $0x10] sm:$0xff] %v2213
        %2250 = vst [vmem:[%s524 + $0x18] sm:$0xff] %v2214
        %2251 = vst [vmem:[%s524 + $0x20] sm:$0xff] %v2215
        %2252 = vst [vmem:[%s524 + $0x28] sm:$0xff] %v2216
        %2253 = vst [vmem:[%s524 + $0x30] sm:$0xff] %v2217
        %2254 = vst [vmem:[%s524 + $0x38] sm:$0xff] %v2218
        %2255 = vst [vmem:[%s524 + $0x40] sm:$0xff] %v2219
        %2256 = vst [vmem:[%s524 + $0x48] sm:$0xff] %v2220
        %2257 = vst [vmem:[%s524 + $0x50] sm:$0xff] %v2221
        %2258 = vst [vmem:[%s524 + $0x58] sm:$0xff] %v2222
        %2259 = vst [vmem:[%s524 + $0x60] sm:$0xff] %v2223
        %2260 = vst [vmem:[%s524 + $0x68] sm:$0xff] %v2224
        %2261 = vst [vmem:[%s524 + $0x70] sm:$0xff] %v2225
        %2262 = vst [vmem:[%s524 + $0x78] sm:$0xff] %v2226
        %2263 = vst [vmem:[%s524 + $0x80] sm:$0xff] %v2227
        %2264 = vst [vmem:[%s524 + $0x88] sm:$0xff] %v2228
        %s2265 = sand.u32 %s90, 1
        %s2266 = sand.u32 %s90, 1
        %s2267 = smul.addr %s2266, 144
        %s2268 = scalar_lea.vmem [#allocation3], %s2267
        // Predicated region
        $region56: #{cnn_forward.3} parent=50 // pred_check
          %p2269 = pneg %p100
        $region57: #{cnn_forward.3} parent=50 // pred_check_branch
          %2271 = sbr.rel (%p2269) target = $region59
        $region58: #{cnn_forward.3} parent=50 // pred_region
          %s2272 = smul.u32 18, %s14
          %s2273 = smul.addr %s2272, 4
          %s2274 = scalar_lea.vmem %s3, %s2273
          // Predicated region
          $region60: #{cnn_forward.3} parent=58 // pred_check
            _
          $region61: #{cnn_forward.3} parent=58 // pred_check_branch
            %2276 = sbr.rel (0) target = $region63
          $region62: #{cnn_forward.3} parent=58 // pred_region
            // Predicated region
            $region64: #{cnn_forward.3} parent=62 // pred_check
              _
            $region65: #{cnn_forward.3} parent=62 // pred_check_branch
              %2278 = sbr.rel (0) target = $region67
            $region66: #{cnn_forward.3} parent=62 // pred_region
              loop: start=0, step=1, limit=1
              $region68: #{cnn_forward.3} parent=66 // loop_pre_header
                _
              $region69: #{cnn_forward.3} parent=66 // loop_header
                %s2280 = sphi 0, %s2284
                %p2281 = scmp.ge.s32.totalorder %s2280, 1
                %s2285 = sphi %s2268, %s2268
                %s2286 = sphi %s2274, %s2274
              $region70: #{cnn_forward.3} parent=66 // loop_header_branch
                %2283 = sbr.rel (%p2281) target = $region74
              $region71: #{cnn_forward.3} parent=66 // loop_body
                %v2287 = vld [vmem:[%s2285] sm:$0xff]
                %2288 = vst [vmem:[%s2286] sm:$0xff] %v2287
                %v2289 = vld [vmem:[%s2285 + $0x8] sm:$0xff]
                %2290 = vst [vmem:[%s2286 + $0x8] sm:$0xff] %v2289
                %v2291 = vld [vmem:[%s2285 + $0x10] sm:$0xff]
                %2292 = vst [vmem:[%s2286 + $0x10] sm:$0xff] %v2291
                %v2293 = vld [vmem:[%s2285 + $0x18] sm:$0xff]
                %2294 = vst [vmem:[%s2286 + $0x18] sm:$0xff] %v2293
                %v2295 = vld [vmem:[%s2285 + $0x20] sm:$0xff]
                %2296 = vst [vmem:[%s2286 + $0x20] sm:$0xff] %v2295
                %v2297 = vld [vmem:[%s2285 + $0x28] sm:$0xff]
                %2298 = vst [vmem:[%s2286 + $0x28] sm:$0xff] %v2297
                %v2299 = vld [vmem:[%s2285 + $0x30] sm:$0xff]
                %2300 = vst [vmem:[%s2286 + $0x30] sm:$0xff] %v2299
                %v2301 = vld [vmem:[%s2285 + $0x38] sm:$0xff]
                %2302 = vst [vmem:[%s2286 + $0x38] sm:$0xff] %v2301
                %v2303 = vld [vmem:[%s2285 + $0x40] sm:$0xff]
                %2304 = vst [vmem:[%s2286 + $0x40] sm:$0xff] %v2303
                %v2305 = vld [vmem:[%s2285 + $0x48] sm:$0xff]
                %2306 = vst [vmem:[%s2286 + $0x90] sm:$0xff] %v2305
                %v2307 = vld [vmem:[%s2285 + $0x50] sm:$0xff]
                %2308 = vst [vmem:[%s2286 + $0x98] sm:$0xff] %v2307
                %v2309 = vld [vmem:[%s2285 + $0x58] sm:$0xff]
                %2310 = vst [vmem:[%s2286 + $0xa0] sm:$0xff] %v2309
                %v2311 = vld [vmem:[%s2285 + $0x60] sm:$0xff]
                %2312 = vst [vmem:[%s2286 + $0xa8] sm:$0xff] %v2311
                %v2313 = vld [vmem:[%s2285 + $0x68] sm:$0xff]
                %2314 = vst [vmem:[%s2286 + $0xb0] sm:$0xff] %v2313
                %v2315 = vld [vmem:[%s2285 + $0x70] sm:$0xff]
                %2316 = vst [vmem:[%s2286 + $0xb8] sm:$0xff] %v2315
                %v2317 = vld [vmem:[%s2285 + $0x78] sm:$0xff]
                %2318 = vst [vmem:[%s2286 + $0xc0] sm:$0xff] %v2317
                %v2319 = vld [vmem:[%s2285 + $0x80] sm:$0xff]
                %2320 = vst [vmem:[%s2286 + $0xc8] sm:$0xff] %v2319
                %v2321 = vld [vmem:[%s2285 + $0x88] sm:$0xff]
                %2322 = vst [vmem:[%s2286 + $0xd0] sm:$0xff] %v2321
              $region72: #{cnn_forward.3} parent=66 // loop_footer
                %s2284 = sadd.s32 1, %s2280
              $region73: #{cnn_forward.3} parent=66 // loop_footer_branch
                %2279 = sbr.rel target = $region69
              $region74: #{cnn_forward.3} parent=66 // loop_exit
                _
            $region67: #{cnn_forward.3} parent=62 // pred_fallthru
              _
            // Predicated region
            $region75: #{cnn_forward.3} parent=62 // pred_check
              _
            $region76: #{cnn_forward.3} parent=62 // pred_check_branch
              %2324 = sbr.rel target = $region78
            $region77: #{cnn_forward.3} parent=62 // pred_region
              _
            $region78: #{cnn_forward.3} parent=62 // pred_fallthru
              _
          $region63: #{cnn_forward.3} parent=58 // pred_fallthru
            _
          %2325 = vnop
        $region59: #{cnn_forward.3} parent=50 // pred_fallthru
          _
      $region51: #{cnn_forward.3} parent=5 // pred_fallthru
        _
      %p2326 = scmp.le.s32.totalorder 2, %s9
      // Predicated region
      $region79: #{cnn_forward.3} parent=5 // pred_check
        %p2327 = pneg %p2326
      $region80: #{cnn_forward.3} parent=5 // pred_check_branch
        %2329 = sbr.rel (%p2327) target = $region82
      $region81: #{cnn_forward.3} parent=5 // pred_region
        %s2330 = ssub.s32 %s9, 2
        // Predicated region
        $region83: #{cnn_forward.3} parent=81 // pred_check
          %p2331 = pneg %p106
        $region84: #{cnn_forward.3} parent=81 // pred_check_branch
          %2333 = sbr.rel (%p2331) target = $region86
        $region85: #{cnn_forward.3} parent=81 // pred_region
          %s2334 = sand.u32 %s91, 1
          %s2335 = sand.u32 %s91, 1
          %s2336 = smul.addr %s2335, 144
          %s2337 = scalar_lea.vmem [#allocation3], %s2336
        $region86: #{cnn_forward.3} parent=81 // pred_fallthru
          _
      $region82: #{cnn_forward.3} parent=5 // pred_fallthru
        _
    $region6: #{cnn_forward.3} parent=1 // loop_footer
      %s13 = sadd.s32 1, %s9
    $region7: #{cnn_forward.3} parent=1 // loop_footer_branch
      %8 = sbr.rel target = $region3
    $region8: #{cnn_forward.3} parent=1 // loop_exit
      _

// kernel: cnn_forward.4
$region0: #{cnn_forward.4}
  #allocation0 [shape = 'u32[]', space=smem, size = 0x4, offset = 0x4, fixed_abs, tag = 'smem constant byte address 0x4 - core index']
  #allocation1 [shape = 'u32[144,128]{1,0:T(1,128)}', space=vmem, size = 0x12000, scoped, tag = 'internal scratch']
  %s0 = inlined_call_operand.vmem [shape: bf16[32,785], index: 0, kind: input, shape index: {}]
  %s1 = inlined_call_operand.vmem [shape: bf16[785,242], index: 1, kind: input, shape index: {}]
  %s2 = inlined_call_operand.vmem [shape: f32[32,2], index: 2, kind: input, shape index: {}]
  %s3 = inlined_call_operand.vmem [shape: bf16[32,242], index: 3, kind: output, shape index: {}]
  %s4 = sld [smem:[#allocation0]]
  $region22: #{cnn_forward.4} parent=0
    _
  %s6 = ssub.s32 1, %s4
  %s7 = scalar_select 0, %s6, %s4
  // Predicated region
  $region2: #{cnn_forward.4} parent=0 // pred_check
    _
  $region3: #{cnn_forward.4} parent=0 // pred_check_branch
    %9 = sbr.rel (0) target = $region5
  $region4: #{cnn_forward.4} parent=0 // pred_region
    _
  $region5: #{cnn_forward.4} parent=0 // pred_fallthru
    _
  // Predicated region
  $region6: #{cnn_forward.4} parent=0 // pred_check
    _
  $region7: #{cnn_forward.4} parent=0 // pred_check_branch
    %11 = sbr.rel (0) target = $region9
  $region8: #{cnn_forward.4} parent=0 // pred_region
    _
  $region9: #{cnn_forward.4} parent=0 // pred_fallthru
    _
  // Predicated region
  $region10: #{cnn_forward.4} parent=0 // pred_check
    _
  $region11: #{cnn_forward.4} parent=0 // pred_check_branch
    %13 = sbr.rel (0) target = $region13
  $region12: #{cnn_forward.4} parent=0 // pred_region
    _
  $region13: #{cnn_forward.4} parent=0 // pred_fallthru
    _
  %v15 = vld [vmem:[%s0] sm:$0xff]
  %v16 = vld [vmem:[%s0 + $0x8] sm:$0xff]
  %v17 = vld [vmem:[%s0 + $0x10] sm:$0xff]
  %v18 = vld [vmem:[%s0 + $0x18] sm:$0xf]
  %v19 = vld [vmem:[%s0 + $0x1c] sm:$0xff]
  %v20 = vld [vmem:[%s0 + $0x24] sm:$0xff]
  %v21 = vld [vmem:[%s0 + $0x2c] sm:$0xff]
  %v22 = vld [vmem:[%s0 + $0x34] sm:$0xf]
  %v23 = vld [vmem:[%s0 + $0x38] sm:$0xff]
  %v24 = vld [vmem:[%s0 + $0x40] sm:$0xff]
  %v25 = vld [vmem:[%s0 + $0x48] sm:$0xff]
  %v26 = vld [vmem:[%s0 + $0x50] sm:$0xf]
  %v27 = vld [vmem:[%s0 + $0x54] sm:$0xff]
  %v28 = vld [vmem:[%s0 + $0x5c] sm:$0xff]
  %v29 = vld [vmem:[%s0 + $0x64] sm:$0xff]
  %v30 = vld [vmem:[%s0 + $0x6c] sm:$0xf]
  %v31 = vld [vmem:[%s1] sm:$0xff]
  %v32 = vld [vmem:[%s1 + $0x8] sm:$0xff]
  %v33 = vld [vmem:[%s1 + $0x10] sm:$0xff]
  %v34 = vld [vmem:[%s1 + $0x18] sm:$0xff]
  %v35 = vld [vmem:[%s1 + $0x20] sm:$0xff]
  %v36 = vld [vmem:[%s1 + $0x28] sm:$0xff]
  %v37 = vld [vmem:[%s1 + $0x30] sm:$0xff]
  %v38 = vld [vmem:[%s1 + $0x38] sm:$0xff]
  %v39 = vld [vmem:[%s1 + $0x40] sm:$0xff]
  %v40 = vld [vmem:[%s1 + $0x48] sm:$0xff]
  %v41 = vld [vmem:[%s1 + $0x50] sm:$0xff]
  %v42 = vld [vmem:[%s1 + $0x58] sm:$0xff]
  %v43 = vld [vmem:[%s1 + $0x60] sm:$0xff]
  %v44 = vld [vmem:[%s1 + $0x68] sm:$0xff]
  %v45 = vld [vmem:[%s1 + $0x70] sm:$0xff]
  %v46 = vld [vmem:[%s1 + $0x78] sm:$0xff]
  %v47 = vld [vmem:[%s1 + $0x80] sm:$0xff]
  %v48 = vld [vmem:[%s1 + $0x88] sm:$0xff]
  %v49 = vld [vmem:[%s1 + $0x90] sm:$0xff]
  %v50 = vld [vmem:[%s1 + $0x98] sm:$0xff]
  %v51 = vld [vmem:[%s1 + $0xa0] sm:$0xff]
  %v52 = vld [vmem:[%s1 + $0xa8] sm:$0xff]
  %v53 = vld [vmem:[%s1 + $0xb0] sm:$0xff]
  %v54 = vld [vmem:[%s1 + $0xb8] sm:$0xff]
  %v55 = vld [vmem:[%s1 + $0xc0] sm:$0xff]
  %v56 = vld [vmem:[%s1 + $0xc8] sm:$0xff]
  %v57 = vld [vmem:[%s1 + $0xd0] sm:$0xff]
  %v58 = vld [vmem:[%s1 + $0xd8] sm:$0xff]
  %v59 = vld [vmem:[%s1 + $0xe0] sm:$0xff]
  %v60 = vld [vmem:[%s1 + $0xe8] sm:$0xff]
  %v61 = vld [vmem:[%s1 + $0xf0] sm:$0xff]
  %v62 = vld [vmem:[%s1 + $0xf8] sm:$0xff]
  %v63 = vld [vmem:[%s1 + $0x100] sm:$0xff]
  %v64 = vld [vmem:[%s1 + $0x108] sm:$0xff]
  %v65 = vld [vmem:[%s1 + $0x110] sm:$0xff]
  %v66 = vld [vmem:[%s1 + $0x118] sm:$0xff]
  %v67 = vld [vmem:[%s1 + $0x120] sm:$0xff]
  %v68 = vld [vmem:[%s1 + $0x128] sm:$0xff]
  %v69 = vld [vmem:[%s1 + $0x130] sm:$0xff]
  %v70 = vld [vmem:[%s1 + $0x138] sm:$0xff]
  %v71 = vld [vmem:[%s1 + $0x140] sm:$0xff]
  %v72 = vld [vmem:[%s1 + $0x148] sm:$0xff]
  %v73 = vld [vmem:[%s1 + $0x150] sm:$0xff]
  %v74 = vld [vmem:[%s1 + $0x158] sm:$0xff]
  %v75 = vld [vmem:[%s1 + $0x160] sm:$0xff]
  %v76 = vld [vmem:[%s1 + $0x168] sm:$0xff]
  %v77 = vld [vmem:[%s1 + $0x170] sm:$0xff]
  %v78 = vld [vmem:[%s1 + $0x178] sm:$0xff]
  %v79 = vld [vmem:[%s1 + $0x180] sm:$0xff]
  %v80 = vld [vmem:[%s1 + $0x188] sm:$0xff]
  %v81 = vld [vmem:[%s1 + $0x190] sm:$0xff]
  %v82 = vld [vmem:[%s1 + $0x198] sm:$0xff]
  %v83 = vld [vmem:[%s1 + $0x1a0] sm:$0xff]
  %v84 = vld [vmem:[%s1 + $0x1a8] sm:$0xff]
  %v85 = vld [vmem:[%s1 + $0x1b0] sm:$0xff]
  %v86 = vld [vmem:[%s1 + $0x1b8] sm:$0xff]
  %v87 = vld [vmem:[%s1 + $0x1c0] sm:$0xff]
  %v88 = vld [vmem:[%s1 + $0x1c8] sm:$0xff]
  %v89 = vld [vmem:[%s1 + $0x1d0] sm:$0xff]
  %v90 = vld [vmem:[%s1 + $0x1d8] sm:$0xff]
  %v91 = vld [vmem:[%s1 + $0x1e0] sm:$0xff]
  %v92 = vld [vmem:[%s1 + $0x1e8] sm:$0xff]
  %v93 = vld [vmem:[%s1 + $0x1f0] sm:$0xff]
  %v94 = vld [vmem:[%s1 + $0x1f8] sm:$0xff]
  %v95 = vld [vmem:[%s1 + $0x200] sm:$0xff]
  %v96 = vld [vmem:[%s1 + $0x208] sm:$0xff]
  %v97 = vld [vmem:[%s1 + $0x210] sm:$0xff]
  %v98 = vld [vmem:[%s1 + $0x218] sm:$0xff]
  %v99 = vld [vmem:[%s1 + $0x220] sm:$0xff]
  %v100 = vld [vmem:[%s1 + $0x228] sm:$0xff]
  %v101 = vld [vmem:[%s1 + $0x230] sm:$0xff]
  %v102 = vld [vmem:[%s1 + $0x238] sm:$0xff]
  %v103 = vld [vmem:[%s1 + $0x240] sm:$0xff]
  %v104 = vld [vmem:[%s1 + $0x248] sm:$0xff]
  %v105 = vld [vmem:[%s1 + $0x250] sm:$0xff]
  %v106 = vld [vmem:[%s1 + $0x258] sm:$0xff]
  %v107 = vld [vmem:[%s1 + $0x260] sm:$0xff]
  %v108 = vld [vmem:[%s1 + $0x268] sm:$0xff]
  %v109 = vld [vmem:[%s1 + $0x270] sm:$0xff]
  %v110 = vld [vmem:[%s1 + $0x278] sm:$0xff]
  %v111 = vld [vmem:[%s1 + $0x280] sm:$0xff]
  %v112 = vld [vmem:[%s1 + $0x288] sm:$0xff]
  %v113 = vld [vmem:[%s1 + $0x290] sm:$0xff]
  %v114 = vld [vmem:[%s1 + $0x298] sm:$0xff]
  %v115 = vld [vmem:[%s1 + $0x2a0] sm:$0xff]
  %v116 = vld [vmem:[%s1 + $0x2a8] sm:$0xff]
  %v117 = vld [vmem:[%s1 + $0x2b0] sm:$0xff]
  %v118 = vld [vmem:[%s1 + $0x2b8] sm:$0xff]
  %v119 = vld [vmem:[%s1 + $0x2c0] sm:$0xff]
  %v120 = vld [vmem:[%s1 + $0x2c8] sm:$0xff]
  %v121 = vld [vmem:[%s1 + $0x2d0] sm:$0xff]
  %v122 = vld [vmem:[%s1 + $0x2d8] sm:$0xff]
  %v123 = vld [vmem:[%s1 + $0x2e0] sm:$0xff]
  %v124 = vld [vmem:[%s1 + $0x2e8] sm:$0xff]
  %v125 = vld [vmem:[%s1 + $0x2f0] sm:$0xff]
  %v126 = vld [vmem:[%s1 + $0x2f8] sm:$0xff]
  %v127 = vld [vmem:[%s1 + $0x300] sm:$0xff]
  %v128 = vld [vmem:[%s1 + $0x308] sm:$0xff]
  %v129 = vld [vmem:[%s1 + $0x310] sm:$0x11]
  %v146 = vunpack.c.l.b16 %v15
  %v147 = vunpack.c.h.b16 %v15
  %v148 = vunpack.c.l.b16 %v16
  %v149 = vunpack.c.h.b16 %v16
  %v150 = vunpack.c.l.b16 %v17
  %v151 = vunpack.c.h.b16 %v17
  %v152 = vunpack.c.l.b16 %v18
  %v153 = vunpack.c.l.b16 %v19
  %v154 = vunpack.c.h.b16 %v19
  %v155 = vunpack.c.l.b16 %v20
  %v156 = vunpack.c.h.b16 %v20
  %v157 = vunpack.c.l.b16 %v21
  %v158 = vunpack.c.h.b16 %v21
  %v159 = vunpack.c.l.b16 %v22
  %v160 = vunpack.c.l.b16 %v23
  %v161 = vunpack.c.h.b16 %v23
  %v162 = vunpack.c.l.b16 %v24
  %v163 = vunpack.c.h.b16 %v24
  %v164 = vunpack.c.l.b16 %v25
  %v165 = vunpack.c.h.b16 %v25
  %v166 = vunpack.c.l.b16 %v26
  %v167 = vunpack.c.l.b16 %v27
  %v168 = vunpack.c.h.b16 %v27
  %v169 = vunpack.c.l.b16 %v28
  %v170 = vunpack.c.h.b16 %v28
  %v171 = vunpack.c.l.b16 %v29
  %v172 = vunpack.c.h.b16 %v29
  %v173 = vunpack.c.l.b16 %v30
  %v174 = vpack.c.b16 %v153, %v146
  %v175 = vpack.c.b16 %v154, %v147
  %v176 = vpack.c.b16 %v155, %v148
  %v177 = vpack.c.b16 %v156, %v149
  %v178 = vpack.c.b16 %v157, %v150
  %v179 = vpack.c.b16 %v158, %v151
  %v180 = vpack.c.b16 %v159, %v152
  %v181 = vpack.c.b16 %v167, %v160
  %v182 = vpack.c.b16 %v168, %v161
  %v183 = vpack.c.b16 %v169, %v162
  %v184 = vpack.c.b16 %v170, %v163
  %v185 = vpack.c.b16 %v171, %v164
  %v186 = vpack.c.b16 %v172, %v165
  %v187 = vpack.c.b16 %v173, %v166
  %v299 = vunpack.c.l.b16 %v31
  %v300 = vunpack.c.h.b16 %v31
  %v301 = vunpack.c.l.b16 %v32
  %v302 = vunpack.c.h.b16 %v32
  %v303 = vunpack.c.l.b16 %v33
  %v304 = vunpack.c.h.b16 %v33
  %v305 = vunpack.c.l.b16 %v34
  %v306 = vunpack.c.h.b16 %v34
  %v307 = vunpack.c.l.b16 %v35
  %v308 = vunpack.c.h.b16 %v35
  %v309 = vunpack.c.l.b16 %v36
  %v310 = vunpack.c.h.b16 %v36
  %v311 = vunpack.c.l.b16 %v37
  %v312 = vunpack.c.h.b16 %v37
  %v313 = vunpack.c.l.b16 %v38
  %v314 = vunpack.c.h.b16 %v38
  %v315 = vunpack.c.l.b16 %v39
  %v316 = vunpack.c.h.b16 %v39
  %v317 = vunpack.c.l.b16 %v40
  %v318 = vunpack.c.h.b16 %v40
  %v319 = vunpack.c.l.b16 %v41
  %v320 = vunpack.c.h.b16 %v41
  %v321 = vunpack.c.l.b16 %v42
  %v322 = vunpack.c.h.b16 %v42
  %v323 = vunpack.c.l.b16 %v43
  %v324 = vunpack.c.h.b16 %v43
  %v325 = vunpack.c.l.b16 %v44
  %v326 = vunpack.c.h.b16 %v44
  %v327 = vunpack.c.l.b16 %v45
  %v328 = vunpack.c.h.b16 %v45
  %v329 = vunpack.c.l.b16 %v46
  %v330 = vunpack.c.h.b16 %v46
  %v331 = vunpack.c.l.b16 %v47
  %v332 = vunpack.c.h.b16 %v47
  %v333 = vunpack.c.l.b16 %v48
  %v334 = vunpack.c.h.b16 %v48
  %v335 = vunpack.c.l.b16 %v49
  %v336 = vunpack.c.h.b16 %v49
  %v337 = vunpack.c.l.b16 %v50
  %v338 = vunpack.c.h.b16 %v50
  %v339 = vunpack.c.l.b16 %v51
  %v340 = vunpack.c.h.b16 %v51
  %v341 = vunpack.c.l.b16 %v52
  %v342 = vunpack.c.h.b16 %v52
  %v343 = vunpack.c.l.b16 %v53
  %v344 = vunpack.c.h.b16 %v53
  %v345 = vunpack.c.l.b16 %v54
  %v346 = vunpack.c.h.b16 %v54
  %v347 = vunpack.c.l.b16 %v55
  %v348 = vunpack.c.h.b16 %v55
  %v349 = vunpack.c.l.b16 %v56
  %v350 = vunpack.c.h.b16 %v56
  %v351 = vunpack.c.l.b16 %v57
  %v352 = vunpack.c.h.b16 %v57
  %v353 = vunpack.c.l.b16 %v58
  %v354 = vunpack.c.h.b16 %v58
  %v355 = vunpack.c.l.b16 %v59
  %v356 = vunpack.c.h.b16 %v59
  %v357 = vunpack.c.l.b16 %v60
  %v358 = vunpack.c.h.b16 %v60
  %v359 = vunpack.c.l.b16 %v61
  %v360 = vunpack.c.h.b16 %v61
  %v361 = vunpack.c.l.b16 %v62
  %v362 = vunpack.c.h.b16 %v62
  %v363 = vunpack.c.l.b16 %v63
  %v364 = vunpack.c.h.b16 %v63
  %v365 = vunpack.c.l.b16 %v64
  %v366 = vunpack.c.h.b16 %v64
  %v367 = vunpack.c.l.b16 %v65
  %v368 = vunpack.c.h.b16 %v65
  %v369 = vunpack.c.l.b16 %v66
  %v370 = vunpack.c.h.b16 %v66
  %v371 = vunpack.c.l.b16 %v67
  %v372 = vunpack.c.h.b16 %v67
  %v373 = vunpack.c.l.b16 %v68
  %v374 = vunpack.c.h.b16 %v68
  %v375 = vunpack.c.l.b16 %v69
  %v376 = vunpack.c.h.b16 %v69
  %v377 = vunpack.c.l.b16 %v70
  %v378 = vunpack.c.h.b16 %v70
  %v379 = vunpack.c.l.b16 %v71
  %v380 = vunpack.c.h.b16 %v71
  %v381 = vunpack.c.l.b16 %v72
  %v382 = vunpack.c.h.b16 %v72
  %v383 = vunpack.c.l.b16 %v73
  %v384 = vunpack.c.h.b16 %v73
  %v385 = vunpack.c.l.b16 %v74
  %v386 = vunpack.c.h.b16 %v74
  %v387 = vunpack.c.l.b16 %v75
  %v388 = vunpack.c.h.b16 %v75
  %v389 = vunpack.c.l.b16 %v76
  %v390 = vunpack.c.h.b16 %v76
  %v391 = vunpack.c.l.b16 %v77
  %v392 = vunpack.c.h.b16 %v77
  %v393 = vunpack.c.l.b16 %v78
  %v394 = vunpack.c.h.b16 %v78
  %v395 = vunpack.c.l.b16 %v79
  %v396 = vunpack.c.h.b16 %v79
  %v397 = vunpack.c.l.b16 %v80
  %v398 = vunpack.c.h.b16 %v80
  %v399 = vunpack.c.l.b16 %v81
  %v400 = vunpack.c.h.b16 %v81
  %v401 = vunpack.c.l.b16 %v82
  %v402 = vunpack.c.h.b16 %v82
  %v403 = vunpack.c.l.b16 %v83
  %v404 = vunpack.c.h.b16 %v83
  %v405 = vunpack.c.l.b16 %v84
  %v406 = vunpack.c.h.b16 %v84
  %v407 = vunpack.c.l.b16 %v85
  %v408 = vunpack.c.h.b16 %v85
  %v409 = vunpack.c.l.b16 %v86
  %v410 = vunpack.c.h.b16 %v86
  %v411 = vunpack.c.l.b16 %v87
  %v412 = vunpack.c.h.b16 %v87
  %v413 = vunpack.c.l.b16 %v88
  %v414 = vunpack.c.h.b16 %v88
  %v415 = vunpack.c.l.b16 %v89
  %v416 = vunpack.c.h.b16 %v89
  %v417 = vunpack.c.l.b16 %v90
  %v418 = vunpack.c.h.b16 %v90
  %v419 = vunpack.c.l.b16 %v91
  %v420 = vunpack.c.h.b16 %v91
  %v421 = vunpack.c.l.b16 %v92
  %v422 = vunpack.c.h.b16 %v92
  %v423 = vunpack.c.l.b16 %v93
  %v424 = vunpack.c.h.b16 %v93
  %v425 = vunpack.c.l.b16 %v94
  %v426 = vunpack.c.h.b16 %v94
  %v427 = vunpack.c.l.b16 %v95
  %v428 = vunpack.c.h.b16 %v95
  %v429 = vunpack.c.l.b16 %v96
  %v430 = vunpack.c.h.b16 %v96
  %v431 = vunpack.c.l.b16 %v97
  %v432 = vunpack.c.h.b16 %v97
  %v433 = vunpack.c.l.b16 %v98
  %v434 = vunpack.c.h.b16 %v98
  %v435 = vunpack.c.l.b16 %v99
  %v436 = vunpack.c.h.b16 %v99
  %v437 = vunpack.c.l.b16 %v100
  %v438 = vunpack.c.h.b16 %v100
  %v439 = vunpack.c.l.b16 %v101
  %v440 = vunpack.c.h.b16 %v101
  %v441 = vunpack.c.l.b16 %v102
  %v442 = vunpack.c.h.b16 %v102
  %v443 = vunpack.c.l.b16 %v103
  %v444 = vunpack.c.h.b16 %v103
  %v445 = vunpack.c.l.b16 %v104
  %v446 = vunpack.c.h.b16 %v104
  %v447 = vunpack.c.l.b16 %v105
  %v448 = vunpack.c.h.b16 %v105
  %v449 = vunpack.c.l.b16 %v106
  %v450 = vunpack.c.h.b16 %v106
  %v451 = vunpack.c.l.b16 %v107
  %v452 = vunpack.c.h.b16 %v107
  %v453 = vunpack.c.l.b16 %v108
  %v454 = vunpack.c.h.b16 %v108
  %v455 = vunpack.c.l.b16 %v109
  %v456 = vunpack.c.h.b16 %v109
  %v457 = vunpack.c.l.b16 %v110
  %v458 = vunpack.c.h.b16 %v110
  %v459 = vunpack.c.l.b16 %v111
  %v460 = vunpack.c.h.b16 %v111
  %v461 = vunpack.c.l.b16 %v112
  %v462 = vunpack.c.h.b16 %v112
  %v463 = vunpack.c.l.b16 %v113
  %v464 = vunpack.c.h.b16 %v113
  %v465 = vunpack.c.l.b16 %v114
  %v466 = vunpack.c.h.b16 %v114
  %v467 = vunpack.c.l.b16 %v115
  %v468 = vunpack.c.h.b16 %v115
  %v469 = vunpack.c.l.b16 %v116
  %v470 = vunpack.c.h.b16 %v116
  %v471 = vunpack.c.l.b16 %v117
  %v472 = vunpack.c.h.b16 %v117
  %v473 = vunpack.c.l.b16 %v118
  %v474 = vunpack.c.h.b16 %v118
  %v475 = vunpack.c.l.b16 %v119
  %v476 = vunpack.c.h.b16 %v119
  %v477 = vunpack.c.l.b16 %v120
  %v478 = vunpack.c.h.b16 %v120
  %v479 = vunpack.c.l.b16 %v121
  %v480 = vunpack.c.h.b16 %v121
  %v481 = vunpack.c.l.b16 %v122
  %v482 = vunpack.c.h.b16 %v122
  %v483 = vunpack.c.l.b16 %v123
  %v484 = vunpack.c.h.b16 %v123
  %v485 = vunpack.c.l.b16 %v124
  %v486 = vunpack.c.h.b16 %v124
  %v487 = vunpack.c.l.b16 %v125
  %v488 = vunpack.c.h.b16 %v125
  %v489 = vunpack.c.l.b16 %v126
  %v490 = vunpack.c.h.b16 %v126
  %v491 = vunpack.c.l.b16 %v127
  %v492 = vunpack.c.h.b16 %v127
  %v493 = vunpack.c.l.b16 %v128
  %v494 = vunpack.c.h.b16 %v128
  %v495 = vunpack.c.l.b16 %v129
  %v496 = vunpack.c.h.b16 %v129
  %v497 = vpack.c.b16 %v301, %v299
  %v498 = vpack.c.b16 %v302, %v300
  %v499 = vpack.c.b16 %v305, %v303
  %v500 = vpack.c.b16 %v306, %v304
  %v501 = vpack.c.b16 %v309, %v307
  %v502 = vpack.c.b16 %v310, %v308
  %v503 = vpack.c.b16 %v313, %v311
  %v504 = vpack.c.b16 %v314, %v312
  %v505 = vpack.c.b16 %v317, %v315
  %v506 = vpack.c.b16 %v318, %v316
  %v507 = vpack.c.b16 %v321, %v319
  %v508 = vpack.c.b16 %v322, %v320
  %v509 = vpack.c.b16 %v325, %v323
  %v510 = vpack.c.b16 %v326, %v324
  %v511 = vpack.c.b16 %v329, %v327
  %v512 = vpack.c.b16 %v330, %v328
  %v513 = vpack.c.b16 %v333, %v331
  %v514 = vpack.c.b16 %v334, %v332
  %v515 = vpack.c.b16 %v337, %v335
  %v516 = vpack.c.b16 %v338, %v336
  %v517 = vpack.c.b16 %v341, %v339
  %v518 = vpack.c.b16 %v342, %v340
  %v519 = vpack.c.b16 %v345, %v343
  %v520 = vpack.c.b16 %v346, %v344
  %v521 = vpack.c.b16 %v349, %v347
  %v522 = vpack.c.b16 %v350, %v348
  %v523 = vpack.c.b16 %v353, %v351
  %v524 = vpack.c.b16 %v354, %v352
  %v525 = vpack.c.b16 %v357, %v355
  %v526 = vpack.c.b16 %v358, %v356
  %v527 = vpack.c.b16 %v361, %v359
  %v528 = vpack.c.b16 %v362, %v360
  %v529 = vpack.c.b16 %v365, %v363
  %v530 = vpack.c.b16 %v366, %v364
  %v531 = vpack.c.b16 %v369, %v367
  %v532 = vpack.c.b16 %v370, %v368
  %v533 = vpack.c.b16 %v373, %v371
  %v534 = vpack.c.b16 %v374, %v372
  %v535 = vpack.c.b16 %v377, %v375
  %v536 = vpack.c.b16 %v378, %v376
  %v537 = vpack.c.b16 %v381, %v379
  %v538 = vpack.c.b16 %v382, %v380
  %v539 = vpack.c.b16 %v385, %v383
  %v540 = vpack.c.b16 %v386, %v384
  %v541 = vpack.c.b16 %v389, %v387
  %v542 = vpack.c.b16 %v390, %v388
  %v543 = vpack.c.b16 %v393, %v391
  %v544 = vpack.c.b16 %v394, %v392
  %v545 = vpack.c.b16 %v397, %v395
  %v546 = vpack.c.b16 %v398, %v396
  %v547 = vpack.c.b16 %v401, %v399
  %v548 = vpack.c.b16 %v402, %v400
  %v549 = vpack.c.b16 %v405, %v403
  %v550 = vpack.c.b16 %v406, %v404
  %v551 = vpack.c.b16 %v409, %v407
  %v552 = vpack.c.b16 %v410, %v408
  %v553 = vpack.c.b16 %v413, %v411
  %v554 = vpack.c.b16 %v414, %v412
  %v555 = vpack.c.b16 %v417, %v415
  %v556 = vpack.c.b16 %v418, %v416
  %v557 = vpack.c.b16 %v421, %v419
  %v558 = vpack.c.b16 %v422, %v420
  %v559 = vpack.c.b16 %v425, %v423
  %v560 = vpack.c.b16 %v426, %v424
  %v561 = vpack.c.b16 %v429, %v427
  %v562 = vpack.c.b16 %v430, %v428
  %v563 = vpack.c.b16 %v433, %v431
  %v564 = vpack.c.b16 %v434, %v432
  %v565 = vpack.c.b16 %v437, %v435
  %v566 = vpack.c.b16 %v438, %v436
  %v567 = vpack.c.b16 %v441, %v439
  %v568 = vpack.c.b16 %v442, %v440
  %v569 = vpack.c.b16 %v445, %v443
  %v570 = vpack.c.b16 %v446, %v444
  %v571 = vpack.c.b16 %v449, %v447
  %v572 = vpack.c.b16 %v450, %v448
  %v573 = vpack.c.b16 %v453, %v451
  %v574 = vpack.c.b16 %v454, %v452
  %v575 = vpack.c.b16 %v457, %v455
  %v576 = vpack.c.b16 %v458, %v456
  %v577 = vpack.c.b16 %v461, %v459
  %v578 = vpack.c.b16 %v462, %v460
  %v579 = vpack.c.b16 %v465, %v463
  %v580 = vpack.c.b16 %v466, %v464
  %v581 = vpack.c.b16 %v469, %v467
  %v582 = vpack.c.b16 %v470, %v468
  %v583 = vpack.c.b16 %v473, %v471
  %v584 = vpack.c.b16 %v474, %v472
  %v585 = vpack.c.b16 %v477, %v475
  %v586 = vpack.c.b16 %v478, %v476
  %v587 = vpack.c.b16 %v481, %v479
  %v588 = vpack.c.b16 %v482, %v480
  %v589 = vpack.c.b16 %v485, %v483
  %v590 = vpack.c.b16 %v486, %v484
  %v591 = vpack.c.b16 %v489, %v487
  %v592 = vpack.c.b16 %v490, %v488
  %v593 = vpack.c.b16 %v493, %v491
  %v594 = vpack.c.b16 %v494, %v492
  %v595 = vpack.c.b16 %v495, %v495
  %v596 = vpack.c.b16 %v496, %v496
  %vm695 = vcmask 138240
  %v697 = vsel %vm695, %v180, 0
  %v700 = vsel %vm695, %v187, 0
  %vm702 = vcmask 1040384
  %v703 = vsel 0, 4294967295, 65535
  %v704 = vsel %vm702, %v703, 0
  %v706 = vand.u32 %v595, %v704
  %v709 = vand.u32 %v596, %v704
  %711 = vmatprep.subr.bf16.mxu0 %v498
  %712 = vmatpush1.bf16.msra.mxu0 %v497
  %713 = vmatprep.subr.bf16.mxu0 %v500
  %714 = vmatpush1.bf16.msra.mxu0 %v499
  %715 = vmatprep.subr.bf16.mxu0 %v502
  %716 = vmatpush1.bf16.msra.mxu0 %v501
  %717 = vmatprep.subr.bf16.mxu0 %v504
  %718 = vmatpush1.bf16.msra.mxu0 %v503
  %719 = vmatprep.subr.bf16.mxu0 %v506
  %720 = vmatpush1.bf16.msra.mxu0 %v505
  %721 = vmatprep.subr.bf16.mxu0 %v508
  %722 = vmatpush1.bf16.msra.mxu0 %v507
  %723 = vmatprep.subr.bf16.mxu0 %v510
  %724 = vmatpush1.bf16.msra.mxu0 %v509
  %725 = vmatprep.subr.bf16.mxu0 %v512
  %726 = vmatpush1.bf16.msra.mxu0 %v511
  %727 = vmatprep.subr.bf16.mxu0 %v514
  %728 = vmatpush1.bf16.msra.mxu0 %v513
  %729 = vmatprep.subr.bf16.mxu0 %v516
  %730 = vmatpush1.bf16.msra.mxu0 %v515
  %731 = vmatprep.subr.bf16.mxu0 %v518
  %732 = vmatpush1.bf16.msra.mxu0 %v517
  %733 = vmatprep.subr.bf16.mxu0 %v520
  %734 = vmatpush1.bf16.msra.mxu0 %v519
  %735 = vmatprep.subr.bf16.mxu0 %v522
  %736 = vmatpush1.bf16.msra.mxu0 %v521
  %737 = vmatprep.subr.bf16.mxu0 %v524
  %738 = vmatpush1.bf16.msra.mxu0 %v523
  %739 = vmatprep.subr.bf16.mxu0 %v526
  %740 = vmatpush1.bf16.msra.mxu0 %v525
  %741 = vmatprep.subr.bf16.mxu0 %v528
  %742 = vmatpush1.bf16.msra.mxu0 %v527
  %743 = vmatprep.mubr.bf16.mxu0 %v175
  %744 = vmatmul.mubr.bf16.gmra.mrb[0].mxu0 %v174
  %v745 = vpop.f32.mrb[0].mxu0
  %v746 = vadd.f32 0.0, %v745
  %v747 = vpop.f32.mrb[0].mxu0
  %v748 = vadd.f32 0.0, %v747
  %v749 = vpop.f32.mrb[0].mxu0
  %v750 = vadd.f32 0.0, %v749
  %v751 = vpop.f32.mrb[0].mxu0
  %v752 = vadd.f32 0.0, %v751
  %753 = vmatprep.mubr.bf16.mxu0 %v182
  %754 = vmatmul.mubr.bf16.gmra.mrb[0].mxu0 %v181
  %v755 = vpop.f32.mrb[0].mxu0
  %v756 = vadd.f32 0.0, %v755
  %v757 = vpop.f32.mrb[0].mxu0
  %v758 = vadd.f32 0.0, %v757
  %v759 = vpop.f32.mrb[0].mxu0
  %v760 = vadd.f32 0.0, %v759
  %v761 = vpop.f32.mrb[0].mxu0
  %v762 = vadd.f32 0.0, %v761
  %763 = vdwg.mxu0
  %764 = vmatprep.subr.bf16.mxu0 %v530
  %765 = vmatpush1.bf16.msra.mxu0 %v529
  %766 = vmatprep.subr.bf16.mxu0 %v532
  %767 = vmatpush1.bf16.msra.mxu0 %v531
  %768 = vmatprep.subr.bf16.mxu0 %v534
  %769 = vmatpush1.bf16.msra.mxu0 %v533
  %770 = vmatprep.subr.bf16.mxu0 %v536
  %771 = vmatpush1.bf16.msra.mxu0 %v535
  %772 = vmatprep.subr.bf16.mxu0 %v538
  %773 = vmatpush1.bf16.msra.mxu0 %v537
  %774 = vmatprep.subr.bf16.mxu0 %v540
  %775 = vmatpush1.bf16.msra.mxu0 %v539
  %776 = vmatprep.subr.bf16.mxu0 %v542
  %777 = vmatpush1.bf16.msra.mxu0 %v541
  %778 = vmatprep.subr.bf16.mxu0 %v544
  %779 = vmatpush1.bf16.msra.mxu0 %v543
  %780 = vmatprep.subr.bf16.mxu0 %v546
  %781 = vmatpush1.bf16.msra.mxu0 %v545
  %782 = vmatprep.subr.bf16.mxu0 %v548
  %783 = vmatpush1.bf16.msra.mxu0 %v547
  %784 = vmatprep.subr.bf16.mxu0 %v550
  %785 = vmatpush1.bf16.msra.mxu0 %v549
  %786 = vmatprep.subr.bf16.mxu0 %v552
  %787 = vmatpush1.bf16.msra.mxu0 %v551
  %788 = vmatprep.subr.bf16.mxu0 %v554
  %789 = vmatpush1.bf16.msra.mxu0 %v553
  %790 = vmatprep.subr.bf16.mxu0 %v556
  %791 = vmatpush1.bf16.msra.mxu0 %v555
  %792 = vmatprep.subr.bf16.mxu0 %v558
  %793 = vmatpush1.bf16.msra.mxu0 %v557
  %794 = vmatprep.subr.bf16.mxu0 %v560
  %795 = vmatpush1.bf16.msra.mxu0 %v559
  %796 = vmatprep.mubr.bf16.mxu0 %v177
  %797 = vmatmul.mubr.bf16.gmra.mrb[0].mxu0 %v176
  %v798 = vpop.f32.mrb[0].mxu0
  %v799 = vadd.f32 %v746, %v798
  %v800 = vpop.f32.mrb[0].mxu0
  %v801 = vadd.f32 %v748, %v800
  %v802 = vpop.f32.mrb[0].mxu0
  %v803 = vadd.f32 %v750, %v802
  %v804 = vpop.f32.mrb[0].mxu0
  %v805 = vadd.f32 %v752, %v804
  %806 = vmatprep.mubr.bf16.mxu0 %v184
  %807 = vmatmul.mubr.bf16.gmra.mrb[0].mxu0 %v183
  %v808 = vpop.f32.mrb[0].mxu0
  %v809 = vadd.f32 %v756, %v808
  %v810 = vpop.f32.mrb[0].mxu0
  %v811 = vadd.f32 %v758, %v810
  %v812 = vpop.f32.mrb[0].mxu0
  %v813 = vadd.f32 %v760, %v812
  %v814 = vpop.f32.mrb[0].mxu0
  %v815 = vadd.f32 %v762, %v814
  %816 = vdwg.mxu0
  %817 = vmatprep.subr.bf16.mxu0 %v562
  %818 = vmatpush1.bf16.msra.mxu0 %v561
  %819 = vmatprep.subr.bf16.mxu0 %v564
  %820 = vmatpush1.bf16.msra.mxu0 %v563
  %821 = vmatprep.subr.bf16.mxu0 %v566
  %822 = vmatpush1.bf16.msra.mxu0 %v565
  %823 = vmatprep.subr.bf16.mxu0 %v568
  %824 = vmatpush1.bf16.msra.mxu0 %v567
  %825 = vmatprep.subr.bf16.mxu0 %v570
  %826 = vmatpush1.bf16.msra.mxu0 %v569
  %827 = vmatprep.subr.bf16.mxu0 %v572
  %828 = vmatpush1.bf16.msra.mxu0 %v571
  %829 = vmatprep.subr.bf16.mxu0 %v574
  %830 = vmatpush1.bf16.msra.mxu0 %v573
  %831 = vmatprep.subr.bf16.mxu0 %v576
  %832 = vmatpush1.bf16.msra.mxu0 %v575
  %833 = vmatprep.subr.bf16.mxu0 %v578
  %834 = vmatpush1.bf16.msra.mxu0 %v577
  %835 = vmatprep.subr.bf16.mxu0 %v580
  %836 = vmatpush1.bf16.msra.mxu0 %v579
  %837 = vmatprep.subr.bf16.mxu0 %v582
  %838 = vmatpush1.bf16.msra.mxu0 %v581
  %839 = vmatprep.subr.bf16.mxu0 %v584
  %840 = vmatpush1.bf16.msra.mxu0 %v583
  %841 = vmatprep.subr.bf16.mxu0 %v586
  %842 = vmatpush1.bf16.msra.mxu0 %v585
  %843 = vmatprep.subr.bf16.mxu0 %v588
  %844 = vmatpush1.bf16.msra.mxu0 %v587
  %845 = vmatprep.subr.bf16.mxu0 %v590
  %846 = vmatpush1.bf16.msra.mxu0 %v589
  %847 = vmatprep.subr.bf16.mxu0 %v592
  %848 = vmatpush1.bf16.msra.mxu0 %v591
  %849 = vmatprep.mubr.bf16.mxu0 %v179
  %850 = vmatmul.mubr.bf16.gmra.mrb[0].mxu0 %v178
  %v851 = vpop.f32.mrb[0].mxu0
  %v852 = vadd.f32 %v799, %v851
  %v853 = vpop.f32.mrb[0].mxu0
  %v854 = vadd.f32 %v801, %v853
  %v855 = vpop.f32.mrb[0].mxu0
  %v856 = vadd.f32 %v803, %v855
  %v857 = vpop.f32.mrb[0].mxu0
  %v858 = vadd.f32 %v805, %v857
  %859 = vmatprep.mubr.bf16.mxu0 %v186
  %860 = vmatmul.mubr.bf16.gmra.mrb[0].mxu0 %v185
  %v861 = vpop.f32.mrb[0].mxu0
  %v862 = vadd.f32 %v809, %v861
  %v863 = vpop.f32.mrb[0].mxu0
  %v864 = vadd.f32 %v811, %v863
  %v865 = vpop.f32.mrb[0].mxu0
  %v866 = vadd.f32 %v813, %v865
  %v867 = vpop.f32.mrb[0].mxu0
  %v868 = vadd.f32 %v815, %v867
  %869 = vdwg.mxu0
  %870 = vmatprep.subr.bf16.mxu0 %v594
  %871 = vmatpush1.bf16.msra.mxu0 %v593
  %872 = vmatprep.subr.bf16.mxu0 %v709
  %873 = vmatpush1.bf16.msra.mxu0 %v706
  %874 = vmatprep.subr.bf16.mxu0 0
  %875 = vmatpush1.bf16.msra.mxu0 0
  %876 = vmatprep.subr.bf16.mxu0 0
  %877 = vmatpush1.bf16.msra.mxu0 0
  %878 = vmatprep.subr.bf16.mxu0 0
  %879 = vmatpush1.bf16.msra.mxu0 0
  %880 = vmatprep.subr.bf16.mxu0 0
  %881 = vmatpush1.bf16.msra.mxu0 0
  %882 = vmatprep.subr.bf16.mxu0 0
  %883 = vmatpush1.bf16.msra.mxu0 0
  %884 = vmatprep.subr.bf16.mxu0 0
  %885 = vmatpush1.bf16.msra.mxu0 0
  %886 = vmatprep.subr.bf16.mxu0 0
  %887 = vmatpush1.bf16.msra.mxu0 0
  %888 = vmatprep.subr.bf16.mxu0 0
  %889 = vmatpush1.bf16.msra.mxu0 0
  %890 = vmatprep.subr.bf16.mxu0 0
  %891 = vmatpush1.bf16.msra.mxu0 0
  %892 = vmatprep.subr.bf16.mxu0 0
  %893 = vmatpush1.bf16.msra.mxu0 0
  %894 = vmatprep.subr.bf16.mxu0 0
  %895 = vmatpush1.bf16.msra.mxu0 0
  %896 = vmatprep.subr.bf16.mxu0 0
  %897 = vmatpush1.bf16.msra.mxu0 0
  %898 = vmatprep.subr.bf16.mxu0 0
  %899 = vmatpush1.bf16.msra.mxu0 0
  %900 = vmatprep.subr.bf16.mxu0 0
  %901 = vmatpush1.bf16.msra.mxu0 0
  %902 = vmatprep.mubr.bf16.mxu0 0
  %903 = vmatmul.mubr.bf16.gmra.mrb[0].mxu0 %v697
  %v904 = vpop.f32.mrb[0].mxu0
  %v905 = vadd.f32 %v852, %v904
  %v906 = vpop.f32.mrb[0].mxu0
  %v907 = vadd.f32 %v854, %v906
  %v908 = vpop.f32.mrb[0].mxu0
  %v909 = vadd.f32 %v856, %v908
  %v910 = vpop.f32.mrb[0].mxu0
  %v911 = vadd.f32 %v858, %v910
  %912 = vmatprep.mubr.bf16.mxu0 0
  %913 = vmatmul.mubr.bf16.gmra.mrb[0].mxu0 %v700
  %v914 = vpop.f32.mrb[0].mxu0
  %v915 = vadd.f32 %v862, %v914
  %v916 = vpop.f32.mrb[0].mxu0
  %v917 = vadd.f32 %v864, %v916
  %v918 = vpop.f32.mrb[0].mxu0
  %v919 = vadd.f32 %v866, %v918
  %v920 = vpop.f32.mrb[0].mxu0
  %v921 = vadd.f32 %v868, %v920
  %922 = vdwg.mxu0
  %v923 = vmax.f32 %v905, 0.0
  %v924 = vmax.f32 %v907, 0.0
  %v925 = vmax.f32 %v909, 0.0
  %v926 = vmax.f32 %v911, 0.0
  %v927 = vmax.f32 %v915, 0.0
  %v928 = vmax.f32 %v917, 0.0
  %v929 = vmax.f32 %v919, 0.0
  %v930 = vmax.f32 %v921, 0.0
  %v931 = vld [vmem:[%s2] sm:$0xff]
  %v932 = vld [vmem:[%s2 + $0x8] sm:$0xff]
  %v933 = vld [vmem:[%s2 + $0x10] sm:$0xff]
  %v934 = vld [vmem:[%s2 + $0x18] sm:$0xff]
  %936 = vset.pattern.permute.xlu0 0
  %937 = vperm.xlu0 %936, %v931
  %v938 = vpop.permute.xlu0 %937
  %941 = vset.pattern.permute.xlu0 0
  %942 = vperm.xlu0 %941, %v932
  %v943 = vpop.permute.xlu0 %942
  %946 = vset.pattern.permute.xlu0 0
  %947 = vperm.xlu0 %946, %v933
  %v948 = vpop.permute.xlu0 %947
  %951 = vset.pattern.permute.xlu0 0
  %952 = vperm.xlu0 %951, %v934
  %v953 = vpop.permute.xlu0 %952
  %v955 = vmul.f32 %v923, %v938
  %v956 = vmul.f32 %v924, %v938
  %v957 = vmul.f32 %v925, %v943
  %v958 = vmul.f32 %v926, %v943
  %v959 = vmul.f32 %v927, %v948
  %v960 = vmul.f32 %v928, %v948
  %v961 = vmul.f32 %v929, %v953
  %v962 = vmul.f32 %v930, %v953
  %963 = vset.pattern.permute.xlu0 1
  %964 = vperm.xlu0 %963, %v931
  %v965 = vpop.permute.xlu0 %964
  %967 = vset.pattern.permute.xlu0 1
  %968 = vperm.xlu0 %967, %v932
  %v969 = vpop.permute.xlu0 %968
  %971 = vset.pattern.permute.xlu0 1
  %972 = vperm.xlu0 %971, %v933
  %v973 = vpop.permute.xlu0 %972
  %975 = vset.pattern.permute.xlu0 1
  %976 = vperm.xlu0 %975, %v934
  %v977 = vpop.permute.xlu0 %976
  %v979 = vadd.f32 %v955, %v965
  %v980 = vadd.f32 %v956, %v965
  %v981 = vadd.f32 %v957, %v969
  %v982 = vadd.f32 %v958, %v969
  %v983 = vadd.f32 %v959, %v973
  %v984 = vadd.f32 %v960, %v973
  %v985 = vadd.f32 %v961, %v977
  %v986 = vadd.f32 %v962, %v977
  %v987 = vpack.c.bf16 %v981, %v979
  %v988 = vpack.c.bf16 %v982, %v980
  %v989 = vpack.c.bf16 %v985, %v983
  %v990 = vpack.c.bf16 %v986, %v984
  %v995 = vunpack.c.l.b16 %v987
  %v996 = vunpack.c.l.b16 %v988
  %v997 = vunpack.c.h.b16 %v987
  %v998 = vunpack.c.h.b16 %v988
  %v999 = vunpack.c.l.b16 %v989
  %v1000 = vunpack.c.l.b16 %v990
  %v1001 = vunpack.c.h.b16 %v989
  %v1002 = vunpack.c.h.b16 %v990
  %v1003 = vpack.c.b16 %v996, %v995
  %v1004 = vpack.c.b16 %v998, %v997
  %v1005 = vpack.c.b16 %v1000, %v999
  %v1006 = vpack.c.b16 %v1002, %v1001
  %vm1011 = vcmask 1043456
  %vm1012 = vcmask 932868
  %vm1013 = vmor %vm1012, %vm1011
  %1014 = vst.msk [vmem:[%s3] sm:$0xff] %vm1013, %v1003
  %1015 = vst.msk [vmem:[%s3 + $0x8] sm:$0xff] %vm1013, %v1004
  %1016 = vst.msk [vmem:[%s3 + $0x10] sm:$0xff] %vm1013, %v1005
  %1017 = vst.msk [vmem:[%s3 + $0x18] sm:$0xff] %vm1013, %v1006
  // Predicated region
  $region14: #{cnn_forward.4} parent=0 // pred_check
    _
  $region15: #{cnn_forward.4} parent=0 // pred_check_branch
    %1019 = sbr.rel (0) target = $region17
  $region16: #{cnn_forward.4} parent=0 // pred_region
    _
  $region17: #{cnn_forward.4} parent=0 // pred_fallthru
    _
  // Predicated region
  $region18: #{cnn_forward.4} parent=0 // pred_check
    _
  $region19: #{cnn_forward.4} parent=0 // pred_check_branch
    %1021 = sbr.rel (0) target = $region21
  $region20: #{cnn_forward.4} parent=0 // pred_region
    _
  $region21: #{cnn_forward.4} parent=0 // pred_fallthru
    _

// kernel: cnn_forward.5
$region0: #{cnn_forward.5}
  #allocation0 [shape = 'u32[]', space=smem, size = 0x4, offset = 0x4, fixed_abs, tag = 'smem constant byte address 0x4 - core index']
  #allocation1 [shape = 'u32[144,128]{1,0:T(1,128)}', space=vmem, size = 0x12000, scoped, tag = 'internal scratch']
  %s0 = inlined_call_operand.vmem [shape: bf16[64,1569], index: 0, kind: input, shape index: {}]
  %s1 = inlined_call_operand.vmem [shape: bf16[1569,8], index: 1, kind: input, shape index: {}]
  %s2 = inlined_call_operand.vmem [shape: f32[64,2], index: 2, kind: input, shape index: {}]
  %s3 = inlined_call_operand.vmem [shape: bf16[64,8], index: 3, kind: output, shape index: {}]
  %s4 = sld [smem:[#allocation0]]
  $region22: #{cnn_forward.5} parent=0
    _
  %s6 = ssub.s32 1, %s4
  %s7 = scalar_select 0, %s6, %s4
  // Predicated region
  $region2: #{cnn_forward.5} parent=0 // pred_check
    _
  $region3: #{cnn_forward.5} parent=0 // pred_check_branch
    %9 = sbr.rel (0) target = $region5
  $region4: #{cnn_forward.5} parent=0 // pred_region
    _
  $region5: #{cnn_forward.5} parent=0 // pred_fallthru
    _
  // Predicated region
  $region6: #{cnn_forward.5} parent=0 // pred_check
    _
  $region7: #{cnn_forward.5} parent=0 // pred_check_branch
    %11 = sbr.rel (0) target = $region9
  $region8: #{cnn_forward.5} parent=0 // pred_region
    _
  $region9: #{cnn_forward.5} parent=0 // pred_fallthru
    _
  // Predicated region
  $region10: #{cnn_forward.5} parent=0 // pred_check
    _
  $region11: #{cnn_forward.5} parent=0 // pred_check_branch
    %13 = sbr.rel (0) target = $region13
  $region12: #{cnn_forward.5} parent=0 // pred_region
    _
  $region13: #{cnn_forward.5} parent=0 // pred_fallthru
    _
  %v15 = vld [vmem:[%s0] sm:$0xff]
  %v16 = vld [vmem:[%s0 + $0x8] sm:$0xff]
  %v17 = vld [vmem:[%s0 + $0x10] sm:$0xff]
  %v18 = vld [vmem:[%s0 + $0x18] sm:$0xff]
  %v19 = vld [vmem:[%s0 + $0x20] sm:$0xff]
  %v20 = vld [vmem:[%s0 + $0x28] sm:$0xff]
  %v21 = vld [vmem:[%s0 + $0x30] sm:$0xf]
  %v22 = vld [vmem:[%s0 + $0x34] sm:$0xff]
  %v23 = vld [vmem:[%s0 + $0x3c] sm:$0xff]
  %v24 = vld [vmem:[%s0 + $0x44] sm:$0xff]
  %v25 = vld [vmem:[%s0 + $0x4c] sm:$0xff]
  %v26 = vld [vmem:[%s0 + $0x54] sm:$0xff]
  %v27 = vld [vmem:[%s0 + $0x5c] sm:$0xff]
  %v28 = vld [vmem:[%s0 + $0x64] sm:$0xf]
  %v29 = vld [vmem:[%s0 + $0x68] sm:$0xff]
  %v30 = vld [vmem:[%s0 + $0x70] sm:$0xff]
  %v31 = vld [vmem:[%s0 + $0x78] sm:$0xff]
  %v32 = vld [vmem:[%s0 + $0x80] sm:$0xff]
  %v33 = vld [vmem:[%s0 + $0x88] sm:$0xff]
  %v34 = vld [vmem:[%s0 + $0x90] sm:$0xff]
  %v35 = vld [vmem:[%s0 + $0x98] sm:$0xf]
  %v36 = vld [vmem:[%s0 + $0x9c] sm:$0xff]
  %v37 = vld [vmem:[%s0 + $0xa4] sm:$0xff]
  %v38 = vld [vmem:[%s0 + $0xac] sm:$0xff]
  %v39 = vld [vmem:[%s0 + $0xb4] sm:$0xff]
  %v40 = vld [vmem:[%s0 + $0xbc] sm:$0xff]
  %v41 = vld [vmem:[%s0 + $0xc4] sm:$0xff]
  %v42 = vld [vmem:[%s0 + $0xcc] sm:$0xf]
  %v43 = vld [vmem:[%s0 + $0xd0] sm:$0xff]
  %v44 = vld [vmem:[%s0 + $0xd8] sm:$0xff]
  %v45 = vld [vmem:[%s0 + $0xe0] sm:$0xff]
  %v46 = vld [vmem:[%s0 + $0xe8] sm:$0xff]
  %v47 = vld [vmem:[%s0 + $0xf0] sm:$0xff]
  %v48 = vld [vmem:[%s0 + $0xf8] sm:$0xff]
  %v49 = vld [vmem:[%s0 + $0x100] sm:$0xf]
  %v50 = vld [vmem:[%s0 + $0x104] sm:$0xff]
  %v51 = vld [vmem:[%s0 + $0x10c] sm:$0xff]
  %v52 = vld [vmem:[%s0 + $0x114] sm:$0xff]
  %v53 = vld [vmem:[%s0 + $0x11c] sm:$0xff]
  %v54 = vld [vmem:[%s0 + $0x124] sm:$0xff]
  %v55 = vld [vmem:[%s0 + $0x12c] sm:$0xff]
  %v56 = vld [vmem:[%s0 + $0x134] sm:$0xf]
  %v57 = vld [vmem:[%s0 + $0x138] sm:$0xff]
  %v58 = vld [vmem:[%s0 + $0x140] sm:$0xff]
  %v59 = vld [vmem:[%s0 + $0x148] sm:$0xff]
  %v60 = vld [vmem:[%s0 + $0x150] sm:$0xff]
  %v61 = vld [vmem:[%s0 + $0x158] sm:$0xff]
  %v62 = vld [vmem:[%s0 + $0x160] sm:$0xff]
  %v63 = vld [vmem:[%s0 + $0x168] sm:$0xf]
  %v64 = vld [vmem:[%s0 + $0x16c] sm:$0xff]
  %v65 = vld [vmem:[%s0 + $0x174] sm:$0xff]
  %v66 = vld [vmem:[%s0 + $0x17c] sm:$0xff]
  %v67 = vld [vmem:[%s0 + $0x184] sm:$0xff]
  %v68 = vld [vmem:[%s0 + $0x18c] sm:$0xff]
  %v69 = vld [vmem:[%s0 + $0x194] sm:$0xff]
  %v70 = vld [vmem:[%s0 + $0x19c] sm:$0xf]
  %v71 = vld [vmem:[%s1] sm:$0xf]
  %v72 = vld [vmem:[%s1 + $0x4] sm:$0xf]
  %v73 = vld [vmem:[%s1 + $0x8] sm:$0xf]
  %v74 = vld [vmem:[%s1 + $0xc] sm:$0xf]
  %v75 = vld [vmem:[%s1 + $0x10] sm:$0xf]
  %v76 = vld [vmem:[%s1 + $0x14] sm:$0xf]
  %v77 = vld [vmem:[%s1 + $0x18] sm:$0xf]
  %v78 = vld [vmem:[%s1 + $0x1c] sm:$0xf]
  %v79 = vld [vmem:[%s1 + $0x20] sm:$0xf]
  %v80 = vld [vmem:[%s1 + $0x24] sm:$0xf]
  %v81 = vld [vmem:[%s1 + $0x28] sm:$0xf]
  %v82 = vld [vmem:[%s1 + $0x2c] sm:$0xf]
  %v83 = vld [vmem:[%s1 + $0x30] sm:$0xf]
  %v84 = vld [vmem:[%s1 + $0x34] sm:$0xf]
  %v85 = vld [vmem:[%s1 + $0x38] sm:$0xf]
  %v86 = vld [vmem:[%s1 + $0x3c] sm:$0xf]
  %v87 = vld [vmem:[%s1 + $0x40] sm:$0xf]
  %v88 = vld [vmem:[%s1 + $0x44] sm:$0xf]
  %v89 = vld [vmem:[%s1 + $0x48] sm:$0xf]
  %v90 = vld [vmem:[%s1 + $0x4c] sm:$0xf]
  %v91 = vld [vmem:[%s1 + $0x50] sm:$0xf]
  %v92 = vld [vmem:[%s1 + $0x54] sm:$0xf]
  %v93 = vld [vmem:[%s1 + $0x58] sm:$0xf]
  %v94 = vld [vmem:[%s1 + $0x5c] sm:$0xf]
  %v95 = vld [vmem:[%s1 + $0x60] sm:$0xf]
  %v96 = vld [vmem:[%s1 + $0x64] sm:$0xf]
  %v97 = vld [vmem:[%s1 + $0x68] sm:$0xf]
  %v98 = vld [vmem:[%s1 + $0x6c] sm:$0xf]
  %v99 = vld [vmem:[%s1 + $0x70] sm:$0xf]
  %v100 = vld [vmem:[%s1 + $0x74] sm:$0xf]
  %v101 = vld [vmem:[%s1 + $0x78] sm:$0xf]
  %v102 = vld [vmem:[%s1 + $0x7c] sm:$0xf]
  %v103 = vld [vmem:[%s1 + $0x80] sm:$0xf]
  %v104 = vld [vmem:[%s1 + $0x84] sm:$0xf]
  %v105 = vld [vmem:[%s1 + $0x88] sm:$0xf]
  %v106 = vld [vmem:[%s1 + $0x8c] sm:$0xf]
  %v107 = vld [vmem:[%s1 + $0x90] sm:$0xf]
  %v108 = vld [vmem:[%s1 + $0x94] sm:$0xf]
  %v109 = vld [vmem:[%s1 + $0x98] sm:$0xf]
  %v110 = vld [vmem:[%s1 + $0x9c] sm:$0xf]
  %v111 = vld [vmem:[%s1 + $0xa0] sm:$0xf]
  %v112 = vld [vmem:[%s1 + $0xa4] sm:$0xf]
  %v113 = vld [vmem:[%s1 + $0xa8] sm:$0xf]
  %v114 = vld [vmem:[%s1 + $0xac] sm:$0xf]
  %v115 = vld [vmem:[%s1 + $0xb0] sm:$0xf]
  %v116 = vld [vmem:[%s1 + $0xb4] sm:$0xf]
  %v117 = vld [vmem:[%s1 + $0xb8] sm:$0xf]
  %v118 = vld [vmem:[%s1 + $0xbc] sm:$0xf]
  %v119 = vld [vmem:[%s1 + $0xc0] sm:$0xf]
  %v120 = vld [vmem:[%s1 + $0xc4] sm:$0xf]
  %v121 = vld [vmem:[%s1 + $0xc8] sm:$0xf]
  %v122 = vld [vmem:[%s1 + $0xcc] sm:$0xf]
  %v123 = vld [vmem:[%s1 + $0xd0] sm:$0xf]
  %v124 = vld [vmem:[%s1 + $0xd4] sm:$0xf]
  %v125 = vld [vmem:[%s1 + $0xd8] sm:$0xf]
  %v126 = vld [vmem:[%s1 + $0xdc] sm:$0xf]
  %v127 = vld [vmem:[%s1 + $0xe0] sm:$0xf]
  %v128 = vld [vmem:[%s1 + $0xe4] sm:$0xf]
  %v129 = vld [vmem:[%s1 + $0xe8] sm:$0xf]
  %v130 = vld [vmem:[%s1 + $0xec] sm:$0xf]
  %v131 = vld [vmem:[%s1 + $0xf0] sm:$0xf]
  %v132 = vld [vmem:[%s1 + $0xf4] sm:$0xf]
  %v133 = vld [vmem:[%s1 + $0xf8] sm:$0xf]
  %v134 = vld [vmem:[%s1 + $0xfc] sm:$0xf]
  %v135 = vld [vmem:[%s1 + $0x100] sm:$0xf]
  %v136 = vld [vmem:[%s1 + $0x104] sm:$0xf]
  %v137 = vld [vmem:[%s1 + $0x108] sm:$0xf]
  %v138 = vld [vmem:[%s1 + $0x10c] sm:$0xf]
  %v139 = vld [vmem:[%s1 + $0x110] sm:$0xf]
  %v140 = vld [vmem:[%s1 + $0x114] sm:$0xf]
  %v141 = vld [vmem:[%s1 + $0x118] sm:$0xf]
  %v142 = vld [vmem:[%s1 + $0x11c] sm:$0xf]
  %v143 = vld [vmem:[%s1 + $0x120] sm:$0xf]
  %v144 = vld [vmem:[%s1 + $0x124] sm:$0xf]
  %v145 = vld [vmem:[%s1 + $0x128] sm:$0xf]
  %v146 = vld [vmem:[%s1 + $0x12c] sm:$0xf]
  %v147 = vld [vmem:[%s1 + $0x130] sm:$0xf]
  %v148 = vld [vmem:[%s1 + $0x134] sm:$0xf]
  %v149 = vld [vmem:[%s1 + $0x138] sm:$0xf]
  %v150 = vld [vmem:[%s1 + $0x13c] sm:$0xf]
  %v151 = vld [vmem:[%s1 + $0x140] sm:$0xf]
  %v152 = vld [vmem:[%s1 + $0x144] sm:$0xf]
  %v153 = vld [vmem:[%s1 + $0x148] sm:$0xf]
  %v154 = vld [vmem:[%s1 + $0x14c] sm:$0xf]
  %v155 = vld [vmem:[%s1 + $0x150] sm:$0xf]
  %v156 = vld [vmem:[%s1 + $0x154] sm:$0xf]
  %v157 = vld [vmem:[%s1 + $0x158] sm:$0xf]
  %v158 = vld [vmem:[%s1 + $0x15c] sm:$0xf]
  %v159 = vld [vmem:[%s1 + $0x160] sm:$0xf]
  %v160 = vld [vmem:[%s1 + $0x164] sm:$0xf]
  %v161 = vld [vmem:[%s1 + $0x168] sm:$0xf]
  %v162 = vld [vmem:[%s1 + $0x16c] sm:$0xf]
  %v163 = vld [vmem:[%s1 + $0x170] sm:$0xf]
  %v164 = vld [vmem:[%s1 + $0x174] sm:$0xf]
  %v165 = vld [vmem:[%s1 + $0x178] sm:$0xf]
  %v166 = vld [vmem:[%s1 + $0x17c] sm:$0xf]
  %v167 = vld [vmem:[%s1 + $0x180] sm:$0xf]
  %v168 = vld [vmem:[%s1 + $0x184] sm:$0xf]
  %v169 = vld [vmem:[%s1 + $0x188] sm:$0xf]
  %v170 = vld [vmem:[%s1 + $0x18c] sm:$0xf]
  %v171 = vld [vmem:[%s1 + $0x190] sm:$0xf]
  %v172 = vld [vmem:[%s1 + $0x194] sm:$0xf]
  %v173 = vld [vmem:[%s1 + $0x198] sm:$0xf]
  %v174 = vld [vmem:[%s1 + $0x19c] sm:$0xf]
  %v175 = vld [vmem:[%s1 + $0x1a0] sm:$0xf]
  %v176 = vld [vmem:[%s1 + $0x1a4] sm:$0xf]
  %v177 = vld [vmem:[%s1 + $0x1a8] sm:$0xf]
  %v178 = vld [vmem:[%s1 + $0x1ac] sm:$0xf]
  %v179 = vld [vmem:[%s1 + $0x1b0] sm:$0xf]
  %v180 = vld [vmem:[%s1 + $0x1b4] sm:$0xf]
  %v181 = vld [vmem:[%s1 + $0x1b8] sm:$0xf]
  %v182 = vld [vmem:[%s1 + $0x1bc] sm:$0xf]
  %v183 = vld [vmem:[%s1 + $0x1c0] sm:$0xf]
  %v184 = vld [vmem:[%s1 + $0x1c4] sm:$0xf]
  %v185 = vld [vmem:[%s1 + $0x1c8] sm:$0xf]
  %v186 = vld [vmem:[%s1 + $0x1cc] sm:$0xf]
  %v187 = vld [vmem:[%s1 + $0x1d0] sm:$0xf]
  %v188 = vld [vmem:[%s1 + $0x1d4] sm:$0xf]
  %v189 = vld [vmem:[%s1 + $0x1d8] sm:$0xf]
  %v190 = vld [vmem:[%s1 + $0x1dc] sm:$0xf]
  %v191 = vld [vmem:[%s1 + $0x1e0] sm:$0xf]
  %v192 = vld [vmem:[%s1 + $0x1e4] sm:$0xf]
  %v193 = vld [vmem:[%s1 + $0x1e8] sm:$0xf]
  %v194 = vld [vmem:[%s1 + $0x1ec] sm:$0xf]
  %v195 = vld [vmem:[%s1 + $0x1f0] sm:$0xf]
  %v196 = vld [vmem:[%s1 + $0x1f4] sm:$0xf]
  %v197 = vld [vmem:[%s1 + $0x1f8] sm:$0xf]
  %v198 = vld [vmem:[%s1 + $0x1fc] sm:$0xf]
  %v199 = vld [vmem:[%s1 + $0x200] sm:$0xf]
  %v200 = vld [vmem:[%s1 + $0x204] sm:$0xf]
  %v201 = vld [vmem:[%s1 + $0x208] sm:$0xf]
  %v202 = vld [vmem:[%s1 + $0x20c] sm:$0xf]
  %v203 = vld [vmem:[%s1 + $0x210] sm:$0xf]
  %v204 = vld [vmem:[%s1 + $0x214] sm:$0xf]
  %v205 = vld [vmem:[%s1 + $0x218] sm:$0xf]
  %v206 = vld [vmem:[%s1 + $0x21c] sm:$0xf]
  %v207 = vld [vmem:[%s1 + $0x220] sm:$0xf]
  %v208 = vld [vmem:[%s1 + $0x224] sm:$0xf]
  %v209 = vld [vmem:[%s1 + $0x228] sm:$0xf]
  %v210 = vld [vmem:[%s1 + $0x22c] sm:$0xf]
  %v211 = vld [vmem:[%s1 + $0x230] sm:$0xf]
  %v212 = vld [vmem:[%s1 + $0x234] sm:$0xf]
  %v213 = vld [vmem:[%s1 + $0x238] sm:$0xf]
  %v214 = vld [vmem:[%s1 + $0x23c] sm:$0xf]
  %v215 = vld [vmem:[%s1 + $0x240] sm:$0xf]
  %v216 = vld [vmem:[%s1 + $0x244] sm:$0xf]
  %v217 = vld [vmem:[%s1 + $0x248] sm:$0xf]
  %v218 = vld [vmem:[%s1 + $0x24c] sm:$0xf]
  %v219 = vld [vmem:[%s1 + $0x250] sm:$0xf]
  %v220 = vld [vmem:[%s1 + $0x254] sm:$0xf]
  %v221 = vld [vmem:[%s1 + $0x258] sm:$0xf]
  %v222 = vld [vmem:[%s1 + $0x25c] sm:$0xf]
  %v223 = vld [vmem:[%s1 + $0x260] sm:$0xf]
  %v224 = vld [vmem:[%s1 + $0x264] sm:$0xf]
  %v225 = vld [vmem:[%s1 + $0x268] sm:$0xf]
  %v226 = vld [vmem:[%s1 + $0x26c] sm:$0xf]
  %v227 = vld [vmem:[%s1 + $0x270] sm:$0xf]
  %v228 = vld [vmem:[%s1 + $0x274] sm:$0xf]
  %v229 = vld [vmem:[%s1 + $0x278] sm:$0xf]
  %v230 = vld [vmem:[%s1 + $0x27c] sm:$0xf]
  %v231 = vld [vmem:[%s1 + $0x280] sm:$0xf]
  %v232 = vld [vmem:[%s1 + $0x284] sm:$0xf]
  %v233 = vld [vmem:[%s1 + $0x288] sm:$0xf]
  %v234 = vld [vmem:[%s1 + $0x28c] sm:$0xf]
  %v235 = vld [vmem:[%s1 + $0x290] sm:$0xf]
  %v236 = vld [vmem:[%s1 + $0x294] sm:$0xf]
  %v237 = vld [vmem:[%s1 + $0x298] sm:$0xf]
  %v238 = vld [vmem:[%s1 + $0x29c] sm:$0xf]
  %v239 = vld [vmem:[%s1 + $0x2a0] sm:$0xf]
  %v240 = vld [vmem:[%s1 + $0x2a4] sm:$0xf]
  %v241 = vld [vmem:[%s1 + $0x2a8] sm:$0xf]
  %v242 = vld [vmem:[%s1 + $0x2ac] sm:$0xf]
  %v243 = vld [vmem:[%s1 + $0x2b0] sm:$0xf]
  %v244 = vld [vmem:[%s1 + $0x2b4] sm:$0xf]
  %v245 = vld [vmem:[%s1 + $0x2b8] sm:$0xf]
  %v246 = vld [vmem:[%s1 + $0x2bc] sm:$0xf]
  %v247 = vld [vmem:[%s1 + $0x2c0] sm:$0xf]
  %v248 = vld [vmem:[%s1 + $0x2c4] sm:$0xf]
  %v249 = vld [vmem:[%s1 + $0x2c8] sm:$0xf]
  %v250 = vld [vmem:[%s1 + $0x2cc] sm:$0xf]
  %v251 = vld [vmem:[%s1 + $0x2d0] sm:$0xf]
  %v252 = vld [vmem:[%s1 + $0x2d4] sm:$0xf]
  %v253 = vld [vmem:[%s1 + $0x2d8] sm:$0xf]
  %v254 = vld [vmem:[%s1 + $0x2dc] sm:$0xf]
  %v255 = vld [vmem:[%s1 + $0x2e0] sm:$0xf]
  %v256 = vld [vmem:[%s1 + $0x2e4] sm:$0xf]
  %v257 = vld [vmem:[%s1 + $0x2e8] sm:$0xf]
  %v258 = vld [vmem:[%s1 + $0x2ec] sm:$0xf]
  %v259 = vld [vmem:[%s1 + $0x2f0] sm:$0xf]
  %v260 = vld [vmem:[%s1 + $0x2f4] sm:$0xf]
  %v261 = vld [vmem:[%s1 + $0x2f8] sm:$0xf]
  %v262 = vld [vmem:[%s1 + $0x2fc] sm:$0xf]
  %v263 = vld [vmem:[%s1 + $0x300] sm:$0xf]
  %v264 = vld [vmem:[%s1 + $0x304] sm:$0xf]
  %v265 = vld [vmem:[%s1 + $0x308] sm:$0xf]
  %v266 = vld [vmem:[%s1 + $0x30c] sm:$0xf]
  %v267 = vld [vmem:[%s1 + $0x310] sm:$0x1]
  %v324 = vunpack.c.l.b16 %v15
  %v325 = vunpack.c.h.b16 %v15
  %v326 = vunpack.c.l.b16 %v16
  %v327 = vunpack.c.h.b16 %v16
  %v328 = vunpack.c.l.b16 %v17
  %v329 = vunpack.c.h.b16 %v17
  %v330 = vunpack.c.l.b16 %v18
  %v331 = vunpack.c.h.b16 %v18
  %v332 = vunpack.c.l.b16 %v19
  %v333 = vunpack.c.h.b16 %v19
  %v334 = vunpack.c.l.b16 %v20
  %v335 = vunpack.c.h.b16 %v20
  %v336 = vunpack.c.l.b16 %v21
  %v337 = vunpack.c.l.b16 %v22
  %v338 = vunpack.c.h.b16 %v22
  %v339 = vunpack.c.l.b16 %v23
  %v340 = vunpack.c.h.b16 %v23
  %v341 = vunpack.c.l.b16 %v24
  %v342 = vunpack.c.h.b16 %v24
  %v343 = vunpack.c.l.b16 %v25
  %v344 = vunpack.c.h.b16 %v25
  %v345 = vunpack.c.l.b16 %v26
  %v346 = vunpack.c.h.b16 %v26
  %v347 = vunpack.c.l.b16 %v27
  %v348 = vunpack.c.h.b16 %v27
  %v349 = vunpack.c.l.b16 %v28
  %v350 = vunpack.c.l.b16 %v29
  %v351 = vunpack.c.h.b16 %v29
  %v352 = vunpack.c.l.b16 %v30
  %v353 = vunpack.c.h.b16 %v30
  %v354 = vunpack.c.l.b16 %v31
  %v355 = vunpack.c.h.b16 %v31
  %v356 = vunpack.c.l.b16 %v32
  %v357 = vunpack.c.h.b16 %v32
  %v358 = vunpack.c.l.b16 %v33
  %v359 = vunpack.c.h.b16 %v33
  %v360 = vunpack.c.l.b16 %v34
  %v361 = vunpack.c.h.b16 %v34
  %v362 = vunpack.c.l.b16 %v35
  %v363 = vunpack.c.l.b16 %v36
  %v364 = vunpack.c.h.b16 %v36
  %v365 = vunpack.c.l.b16 %v37
  %v366 = vunpack.c.h.b16 %v37
  %v367 = vunpack.c.l.b16 %v38
  %v368 = vunpack.c.h.b16 %v38
  %v369 = vunpack.c.l.b16 %v39
  %v370 = vunpack.c.h.b16 %v39
  %v371 = vunpack.c.l.b16 %v40
  %v372 = vunpack.c.h.b16 %v40
  %v373 = vunpack.c.l.b16 %v41
  %v374 = vunpack.c.h.b16 %v41
  %v375 = vunpack.c.l.b16 %v42
  %v376 = vunpack.c.l.b16 %v43
  %v377 = vunpack.c.h.b16 %v43
  %v378 = vunpack.c.l.b16 %v44
  %v379 = vunpack.c.h.b16 %v44
  %v380 = vunpack.c.l.b16 %v45
  %v381 = vunpack.c.h.b16 %v45
  %v382 = vunpack.c.l.b16 %v46
  %v383 = vunpack.c.h.b16 %v46
  %v384 = vunpack.c.l.b16 %v47
  %v385 = vunpack.c.h.b16 %v47
  %v386 = vunpack.c.l.b16 %v48
  %v387 = vunpack.c.h.b16 %v48
  %v388 = vunpack.c.l.b16 %v49
  %v389 = vunpack.c.l.b16 %v50
  %v390 = vunpack.c.h.b16 %v50
  %v391 = vunpack.c.l.b16 %v51
  %v392 = vunpack.c.h.b16 %v51
  %v393 = vunpack.c.l.b16 %v52
  %v394 = vunpack.c.h.b16 %v52
  %v395 = vunpack.c.l.b16 %v53
  %v396 = vunpack.c.h.b16 %v53
  %v397 = vunpack.c.l.b16 %v54
  %v398 = vunpack.c.h.b16 %v54
  %v399 = vunpack.c.l.b16 %v55
  %v400 = vunpack.c.h.b16 %v55
  %v401 = vunpack.c.l.b16 %v56
  %v402 = vunpack.c.l.b16 %v57
  %v403 = vunpack.c.h.b16 %v57
  %v404 = vunpack.c.l.b16 %v58
  %v405 = vunpack.c.h.b16 %v58
  %v406 = vunpack.c.l.b16 %v59
  %v407 = vunpack.c.h.b16 %v59
  %v408 = vunpack.c.l.b16 %v60
  %v409 = vunpack.c.h.b16 %v60
  %v410 = vunpack.c.l.b16 %v61
  %v411 = vunpack.c.h.b16 %v61
  %v412 = vunpack.c.l.b16 %v62
  %v413 = vunpack.c.h.b16 %v62
  %v414 = vunpack.c.l.b16 %v63
  %v415 = vunpack.c.l.b16 %v64
  %v416 = vunpack.c.h.b16 %v64
  %v417 = vunpack.c.l.b16 %v65
  %v418 = vunpack.c.h.b16 %v65
  %v419 = vunpack.c.l.b16 %v66
  %v420 = vunpack.c.h.b16 %v66
  %v421 = vunpack.c.l.b16 %v67
  %v422 = vunpack.c.h.b16 %v67
  %v423 = vunpack.c.l.b16 %v68
  %v424 = vunpack.c.h.b16 %v68
  %v425 = vunpack.c.l.b16 %v69
  %v426 = vunpack.c.h.b16 %v69
  %v427 = vunpack.c.l.b16 %v70
  %v428 = vpack.c.b16 %v337, %v324
  %v429 = vpack.c.b16 %v338, %v325
  %v430 = vpack.c.b16 %v339, %v326
  %v431 = vpack.c.b16 %v340, %v327
  %v432 = vpack.c.b16 %v341, %v328
  %v433 = vpack.c.b16 %v342, %v329
  %v434 = vpack.c.b16 %v343, %v330
  %v435 = vpack.c.b16 %v344, %v331
  %v436 = vpack.c.b16 %v345, %v332
  %v437 = vpack.c.b16 %v346, %v333
  %v438 = vpack.c.b16 %v347, %v334
  %v439 = vpack.c.b16 %v348, %v335
  %v440 = vpack.c.b16 %v349, %v336
  %v441 = vpack.c.b16 %v363, %v350
  %v442 = vpack.c.b16 %v364, %v351
  %v443 = vpack.c.b16 %v365, %v352
  %v444 = vpack.c.b16 %v366, %v353
  %v445 = vpack.c.b16 %v367, %v354
  %v446 = vpack.c.b16 %v368, %v355
  %v447 = vpack.c.b16 %v369, %v356
  %v448 = vpack.c.b16 %v370, %v357
  %v449 = vpack.c.b16 %v371, %v358
  %v450 = vpack.c.b16 %v372, %v359
  %v451 = vpack.c.b16 %v373, %v360
  %v452 = vpack.c.b16 %v374, %v361
  %v453 = vpack.c.b16 %v375, %v362
  %v454 = vpack.c.b16 %v389, %v376
  %v455 = vpack.c.b16 %v390, %v377
  %v456 = vpack.c.b16 %v391, %v378
  %v457 = vpack.c.b16 %v392, %v379
  %v458 = vpack.c.b16 %v393, %v380
  %v459 = vpack.c.b16 %v394, %v381
  %v460 = vpack.c.b16 %v395, %v382
  %v461 = vpack.c.b16 %v396, %v383
  %v462 = vpack.c.b16 %v397, %v384
  %v463 = vpack.c.b16 %v398, %v385
  %v464 = vpack.c.b16 %v399, %v386
  %v465 = vpack.c.b16 %v400, %v387
  %v466 = vpack.c.b16 %v401, %v388
  %v467 = vpack.c.b16 %v415, %v402
  %v468 = vpack.c.b16 %v416, %v403
  %v469 = vpack.c.b16 %v417, %v404
  %v470 = vpack.c.b16 %v418, %v405
  %v471 = vpack.c.b16 %v419, %v406
  %v472 = vpack.c.b16 %v420, %v407
  %v473 = vpack.c.b16 %v421, %v408
  %v474 = vpack.c.b16 %v422, %v409
  %v475 = vpack.c.b16 %v423, %v410
  %v476 = vpack.c.b16 %v424, %v411
  %v477 = vpack.c.b16 %v425, %v412
  %v478 = vpack.c.b16 %v426, %v413
  %v479 = vpack.c.b16 %v427, %v414
  %v725 = vunpack.c.l.b16 %v71
  %v726 = vunpack.c.l.b16 %v72
  %v727 = vunpack.c.l.b16 %v73
  %v728 = vunpack.c.l.b16 %v74
  %v729 = vunpack.c.l.b16 %v75
  %v730 = vunpack.c.l.b16 %v76
  %v731 = vunpack.c.l.b16 %v77
  %v732 = vunpack.c.l.b16 %v78
  %v733 = vunpack.c.l.b16 %v79
  %v734 = vunpack.c.l.b16 %v80
  %v735 = vunpack.c.l.b16 %v81
  %v736 = vunpack.c.l.b16 %v82
  %v737 = vunpack.c.l.b16 %v83
  %v738 = vunpack.c.l.b16 %v84
  %v739 = vunpack.c.l.b16 %v85
  %v740 = vunpack.c.l.b16 %v86
  %v741 = vunpack.c.l.b16 %v87
  %v742 = vunpack.c.l.b16 %v88
  %v743 = vunpack.c.l.b16 %v89
  %v744 = vunpack.c.l.b16 %v90
  %v745 = vunpack.c.l.b16 %v91
  %v746 = vunpack.c.l.b16 %v92
  %v747 = vunpack.c.l.b16 %v93
  %v748 = vunpack.c.l.b16 %v94
  %v749 = vunpack.c.l.b16 %v95
  %v750 = vunpack.c.l.b16 %v96
  %v751 = vunpack.c.l.b16 %v97
  %v752 = vunpack.c.l.b16 %v98
  %v753 = vunpack.c.l.b16 %v99
  %v754 = vunpack.c.l.b16 %v100
  %v755 = vunpack.c.l.b16 %v101
  %v756 = vunpack.c.l.b16 %v102
  %v757 = vunpack.c.l.b16 %v103
  %v758 = vunpack.c.l.b16 %v104
  %v759 = vunpack.c.l.b16 %v105
  %v760 = vunpack.c.l.b16 %v106
  %v761 = vunpack.c.l.b16 %v107
  %v762 = vunpack.c.l.b16 %v108
  %v763 = vunpack.c.l.b16 %v109
  %v764 = vunpack.c.l.b16 %v110
  %v765 = vunpack.c.l.b16 %v111
  %v766 = vunpack.c.l.b16 %v112
  %v767 = vunpack.c.l.b16 %v113
  %v768 = vunpack.c.l.b16 %v114
  %v769 = vunpack.c.l.b16 %v115
  %v770 = vunpack.c.l.b16 %v116
  %v771 = vunpack.c.l.b16 %v117
  %v772 = vunpack.c.l.b16 %v118
  %v773 = vunpack.c.l.b16 %v119
  %v774 = vunpack.c.l.b16 %v120
  %v775 = vunpack.c.l.b16 %v121
  %v776 = vunpack.c.l.b16 %v122
  %v777 = vunpack.c.l.b16 %v123
  %v778 = vunpack.c.l.b16 %v124
  %v779 = vunpack.c.l.b16 %v125
  %v780 = vunpack.c.l.b16 %v126
  %v781 = vunpack.c.l.b16 %v127
  %v782 = vunpack.c.l.b16 %v128
  %v783 = vunpack.c.l.b16 %v129
  %v784 = vunpack.c.l.b16 %v130
  %v785 = vunpack.c.l.b16 %v131
  %v786 = vunpack.c.l.b16 %v132
  %v787 = vunpack.c.l.b16 %v133
  %v788 = vunpack.c.l.b16 %v134
  %v789 = vunpack.c.l.b16 %v135
  %v790 = vunpack.c.l.b16 %v136
  %v791 = vunpack.c.l.b16 %v137
  %v792 = vunpack.c.l.b16 %v138
  %v793 = vunpack.c.l.b16 %v139
  %v794 = vunpack.c.l.b16 %v140
  %v795 = vunpack.c.l.b16 %v141
  %v796 = vunpack.c.l.b16 %v142
  %v797 = vunpack.c.l.b16 %v143
  %v798 = vunpack.c.l.b16 %v144
  %v799 = vunpack.c.l.b16 %v145
  %v800 = vunpack.c.l.b16 %v146
  %v801 = vunpack.c.l.b16 %v147
  %v802 = vunpack.c.l.b16 %v148
  %v803 = vunpack.c.l.b16 %v149
  %v804 = vunpack.c.l.b16 %v150
  %v805 = vunpack.c.l.b16 %v151
  %v806 = vunpack.c.l.b16 %v152
  %v807 = vunpack.c.l.b16 %v153
  %v808 = vunpack.c.l.b16 %v154
  %v809 = vunpack.c.l.b16 %v155
  %v810 = vunpack.c.l.b16 %v156
  %v811 = vunpack.c.l.b16 %v157
  %v812 = vunpack.c.l.b16 %v158
  %v813 = vunpack.c.l.b16 %v159
  %v814 = vunpack.c.l.b16 %v160
  %v815 = vunpack.c.l.b16 %v161
  %v816 = vunpack.c.l.b16 %v162
  %v817 = vunpack.c.l.b16 %v163
  %v818 = vunpack.c.l.b16 %v164
  %v819 = vunpack.c.l.b16 %v165
  %v820 = vunpack.c.l.b16 %v166
  %v821 = vunpack.c.l.b16 %v167
  %v822 = vunpack.c.l.b16 %v168
  %v823 = vunpack.c.l.b16 %v169
  %v824 = vunpack.c.l.b16 %v170
  %v825 = vunpack.c.l.b16 %v171
  %v826 = vunpack.c.l.b16 %v172
  %v827 = vunpack.c.l.b16 %v173
  %v828 = vunpack.c.l.b16 %v174
  %v829 = vunpack.c.l.b16 %v175
  %v830 = vunpack.c.l.b16 %v176
  %v831 = vunpack.c.l.b16 %v177
  %v832 = vunpack.c.l.b16 %v178
  %v833 = vunpack.c.l.b16 %v179
  %v834 = vunpack.c.l.b16 %v180
  %v835 = vunpack.c.l.b16 %v181
  %v836 = vunpack.c.l.b16 %v182
  %v837 = vunpack.c.l.b16 %v183
  %v838 = vunpack.c.l.b16 %v184
  %v839 = vunpack.c.l.b16 %v185
  %v840 = vunpack.c.l.b16 %v186
  %v841 = vunpack.c.l.b16 %v187
  %v842 = vunpack.c.l.b16 %v188
  %v843 = vunpack.c.l.b16 %v189
  %v844 = vunpack.c.l.b16 %v190
  %v845 = vunpack.c.l.b16 %v191
  %v846 = vunpack.c.l.b16 %v192
  %v847 = vunpack.c.l.b16 %v193
  %v848 = vunpack.c.l.b16 %v194
  %v849 = vunpack.c.l.b16 %v195
  %v850 = vunpack.c.l.b16 %v196
  %v851 = vunpack.c.l.b16 %v197
  %v852 = vunpack.c.l.b16 %v198
  %v853 = vunpack.c.l.b16 %v199
  %v854 = vunpack.c.l.b16 %v200
  %v855 = vunpack.c.l.b16 %v201
  %v856 = vunpack.c.l.b16 %v202
  %v857 = vunpack.c.l.b16 %v203
  %v858 = vunpack.c.l.b16 %v204
  %v859 = vunpack.c.l.b16 %v205
  %v860 = vunpack.c.l.b16 %v206
  %v861 = vunpack.c.l.b16 %v207
  %v862 = vunpack.c.l.b16 %v208
  %v863 = vunpack.c.l.b16 %v209
  %v864 = vunpack.c.l.b16 %v210
  %v865 = vunpack.c.l.b16 %v211
  %v866 = vunpack.c.l.b16 %v212
  %v867 = vunpack.c.l.b16 %v213
  %v868 = vunpack.c.l.b16 %v214
  %v869 = vunpack.c.l.b16 %v215
  %v870 = vunpack.c.l.b16 %v216
  %v871 = vunpack.c.l.b16 %v217
  %v872 = vunpack.c.l.b16 %v218
  %v873 = vunpack.c.l.b16 %v219
  %v874 = vunpack.c.l.b16 %v220
  %v875 = vunpack.c.l.b16 %v221
  %v876 = vunpack.c.l.b16 %v222
  %v877 = vunpack.c.l.b16 %v223
  %v878 = vunpack.c.l.b16 %v224
  %v879 = vunpack.c.l.b16 %v225
  %v880 = vunpack.c.l.b16 %v226
  %v881 = vunpack.c.l.b16 %v227
  %v882 = vunpack.c.l.b16 %v228
  %v883 = vunpack.c.l.b16 %v229
  %v884 = vunpack.c.l.b16 %v230
  %v885 = vunpack.c.l.b16 %v231
  %v886 = vunpack.c.l.b16 %v232
  %v887 = vunpack.c.l.b16 %v233
  %v888 = vunpack.c.l.b16 %v234
  %v889 = vunpack.c.l.b16 %v235
  %v890 = vunpack.c.l.b16 %v236
  %v891 = vunpack.c.l.b16 %v237
  %v892 = vunpack.c.l.b16 %v238
  %v893 = vunpack.c.l.b16 %v239
  %v894 = vunpack.c.l.b16 %v240
  %v895 = vunpack.c.l.b16 %v241
  %v896 = vunpack.c.l.b16 %v242
  %v897 = vunpack.c.l.b16 %v243
  %v898 = vunpack.c.l.b16 %v244
  %v899 = vunpack.c.l.b16 %v245
  %v900 = vunpack.c.l.b16 %v246
  %v901 = vunpack.c.l.b16 %v247
  %v902 = vunpack.c.l.b16 %v248
  %v903 = vunpack.c.l.b16 %v249
  %v904 = vunpack.c.l.b16 %v250
  %v905 = vunpack.c.l.b16 %v251
  %v906 = vunpack.c.l.b16 %v252
  %v907 = vunpack.c.l.b16 %v253
  %v908 = vunpack.c.l.b16 %v254
  %v909 = vunpack.c.l.b16 %v255
  %v910 = vunpack.c.l.b16 %v256
  %v911 = vunpack.c.l.b16 %v257
  %v912 = vunpack.c.l.b16 %v258
  %v913 = vunpack.c.l.b16 %v259
  %v914 = vunpack.c.l.b16 %v260
  %v915 = vunpack.c.l.b16 %v261
  %v916 = vunpack.c.l.b16 %v262
  %v917 = vunpack.c.l.b16 %v263
  %v918 = vunpack.c.l.b16 %v264
  %v919 = vunpack.c.l.b16 %v265
  %v920 = vunpack.c.l.b16 %v266
  %v921 = vunpack.c.l.b16 %v267
  %v922 = vpack.c.b16 %v726, %v725
  %v923 = vpack.c.b16 %v728, %v727
  %v924 = vpack.c.b16 %v730, %v729
  %v925 = vpack.c.b16 %v732, %v731
  %v926 = vpack.c.b16 %v734, %v733
  %v927 = vpack.c.b16 %v736, %v735
  %v928 = vpack.c.b16 %v738, %v737
  %v929 = vpack.c.b16 %v740, %v739
  %v930 = vpack.c.b16 %v742, %v741
  %v931 = vpack.c.b16 %v744, %v743
  %v932 = vpack.c.b16 %v746, %v745
  %v933 = vpack.c.b16 %v748, %v747
  %v934 = vpack.c.b16 %v750, %v749
  %v935 = vpack.c.b16 %v752, %v751
  %v936 = vpack.c.b16 %v754, %v753
  %v937 = vpack.c.b16 %v756, %v755
  %v938 = vpack.c.b16 %v758, %v757
  %v939 = vpack.c.b16 %v760, %v759
  %v940 = vpack.c.b16 %v762, %v761
  %v941 = vpack.c.b16 %v764, %v763
  %v942 = vpack.c.b16 %v766, %v765
  %v943 = vpack.c.b16 %v768, %v767
  %v944 = vpack.c.b16 %v770, %v769
  %v945 = vpack.c.b16 %v772, %v771
  %v946 = vpack.c.b16 %v774, %v773
  %v947 = vpack.c.b16 %v776, %v775
  %v948 = vpack.c.b16 %v778, %v777
  %v949 = vpack.c.b16 %v780, %v779
  %v950 = vpack.c.b16 %v782, %v781
  %v951 = vpack.c.b16 %v784, %v783
  %v952 = vpack.c.b16 %v786, %v785
  %v953 = vpack.c.b16 %v788, %v787
  %v954 = vpack.c.b16 %v790, %v789
  %v955 = vpack.c.b16 %v792, %v791
  %v956 = vpack.c.b16 %v794, %v793
  %v957 = vpack.c.b16 %v796, %v795
  %v958 = vpack.c.b16 %v798, %v797
  %v959 = vpack.c.b16 %v800, %v799
  %v960 = vpack.c.b16 %v802, %v801
  %v961 = vpack.c.b16 %v804, %v803
  %v962 = vpack.c.b16 %v806, %v805
  %v963 = vpack.c.b16 %v808, %v807
  %v964 = vpack.c.b16 %v810, %v809
  %v965 = vpack.c.b16 %v812, %v811
  %v966 = vpack.c.b16 %v814, %v813
  %v967 = vpack.c.b16 %v816, %v815
  %v968 = vpack.c.b16 %v818, %v817
  %v969 = vpack.c.b16 %v820, %v819
  %v970 = vpack.c.b16 %v822, %v821
  %v971 = vpack.c.b16 %v824, %v823
  %v972 = vpack.c.b16 %v826, %v825
  %v973 = vpack.c.b16 %v828, %v827
  %v974 = vpack.c.b16 %v830, %v829
  %v975 = vpack.c.b16 %v832, %v831
  %v976 = vpack.c.b16 %v834, %v833
  %v977 = vpack.c.b16 %v836, %v835
  %v978 = vpack.c.b16 %v838, %v837
  %v979 = vpack.c.b16 %v840, %v839
  %v980 = vpack.c.b16 %v842, %v841
  %v981 = vpack.c.b16 %v844, %v843
  %v982 = vpack.c.b16 %v846, %v845
  %v983 = vpack.c.b16 %v848, %v847
  %v984 = vpack.c.b16 %v850, %v849
  %v985 = vpack.c.b16 %v852, %v851
  %v986 = vpack.c.b16 %v854, %v853
  %v987 = vpack.c.b16 %v856, %v855
  %v988 = vpack.c.b16 %v858, %v857
  %v989 = vpack.c.b16 %v860, %v859
  %v990 = vpack.c.b16 %v862, %v861
  %v991 = vpack.c.b16 %v864, %v863
  %v992 = vpack.c.b16 %v866, %v865
  %v993 = vpack.c.b16 %v868, %v867
  %v994 = vpack.c.b16 %v870, %v869
  %v995 = vpack.c.b16 %v872, %v871
  %v996 = vpack.c.b16 %v874, %v873
  %v997 = vpack.c.b16 %v876, %v875
  %v998 = vpack.c.b16 %v878, %v877
  %v999 = vpack.c.b16 %v880, %v879
  %v1000 = vpack.c.b16 %v882, %v881
  %v1001 = vpack.c.b16 %v884, %v883
  %v1002 = vpack.c.b16 %v886, %v885
  %v1003 = vpack.c.b16 %v888, %v887
  %v1004 = vpack.c.b16 %v890, %v889
  %v1005 = vpack.c.b16 %v892, %v891
  %v1006 = vpack.c.b16 %v894, %v893
  %v1007 = vpack.c.b16 %v896, %v895
  %v1008 = vpack.c.b16 %v898, %v897
  %v1009 = vpack.c.b16 %v900, %v899
  %v1010 = vpack.c.b16 %v902, %v901
  %v1011 = vpack.c.b16 %v904, %v903
  %v1012 = vpack.c.b16 %v906, %v905
  %v1013 = vpack.c.b16 %v908, %v907
  %v1014 = vpack.c.b16 %v910, %v909
  %v1015 = vpack.c.b16 %v912, %v911
  %v1016 = vpack.c.b16 %v914, %v913
  %v1017 = vpack.c.b16 %v916, %v915
  %v1018 = vpack.c.b16 %v918, %v917
  %v1019 = vpack.c.b16 %v920, %v919
  %v1020 = vpack.c.b16 %v921, %v921
  %vm1119 = vcmask 269312
  %v1121 = vsel %vm1119, %v440, 0
  %v1124 = vsel %vm1119, %v453, 0
  %v1127 = vsel %vm1119, %v466, 0
  %v1130 = vsel %vm1119, %v479, 0
  %vm1132 = vcmask 1040384
  %v1133 = vsel 0, 4294967295, 65535
  %v1134 = vsel %vm1132, %v1133, 0
  %v1136 = vand.u32 %v1020, %v1134
  %1138 = vmatprep.subr.bf16.mxu0 0
  %1139 = vmatpush1.bf16.msra.mxu0 %v922
  %1140 = vmatprep.subr.bf16.mxu0 0
  %1141 = vmatpush1.bf16.msra.mxu0 %v923
  %1142 = vmatprep.subr.bf16.mxu0 0
  %1143 = vmatpush1.bf16.msra.mxu0 %v924
  %1144 = vmatprep.subr.bf16.mxu0 0
  %1145 = vmatpush1.bf16.msra.mxu0 %v925
  %1146 = vmatprep.subr.bf16.mxu0 0
  %1147 = vmatpush1.bf16.msra.mxu0 %v926
  %1148 = vmatprep.subr.bf16.mxu0 0
  %1149 = vmatpush1.bf16.msra.mxu0 %v927
  %1150 = vmatprep.subr.bf16.mxu0 0
  %1151 = vmatpush1.bf16.msra.mxu0 %v928
  %1152 = vmatprep.subr.bf16.mxu0 0
  %1153 = vmatpush1.bf16.msra.mxu0 %v929
  %1154 = vmatprep.subr.bf16.mxu0 0
  %1155 = vmatpush1.bf16.msra.mxu0 %v930
  %1156 = vmatprep.subr.bf16.mxu0 0
  %1157 = vmatpush1.bf16.msra.mxu0 %v931
  %1158 = vmatprep.subr.bf16.mxu0 0
  %1159 = vmatpush1.bf16.msra.mxu0 %v932
  %1160 = vmatprep.subr.bf16.mxu0 0
  %1161 = vmatpush1.bf16.msra.mxu0 %v933
  %1162 = vmatprep.subr.bf16.mxu0 0
  %1163 = vmatpush1.bf16.msra.mxu0 %v934
  %1164 = vmatprep.subr.bf16.mxu0 0
  %1165 = vmatpush1.bf16.msra.mxu0 %v935
  %1166 = vmatprep.subr.bf16.mxu0 0
  %1167 = vmatpush1.bf16.msra.mxu0 %v936
  %1168 = vmatprep.subr.bf16.mxu0 0
  %1169 = vmatpush1.bf16.msra.mxu0 %v937
  %1170 = vmatprep.mubr.bf16.mxu0 %v429
  %1171 = vmatmul.mubr.bf16.gmra.mrb[0].mxu0 %v428
  %v1172 = vpop.f32.mrb[0].mxu0
  %v1173 = vadd.f32 0.0, %v1172
  %v1174 = vpop.f32.mrb[0].mxu0
  %v1175 = vpop.f32.mrb[0].mxu0
  %v1176 = vadd.f32 0.0, %v1175
  %v1177 = vpop.f32.mrb[0].mxu0
  %1178 = vmatprep.mubr.bf16.mxu0 %v442
  %1179 = vmatmul.mubr.bf16.gmra.mrb[0].mxu0 %v441
  %v1180 = vpop.f32.mrb[0].mxu0
  %v1181 = vadd.f32 0.0, %v1180
  %v1182 = vpop.f32.mrb[0].mxu0
  %v1183 = vpop.f32.mrb[0].mxu0
  %v1184 = vadd.f32 0.0, %v1183
  %v1185 = vpop.f32.mrb[0].mxu0
  %1186 = vmatprep.mubr.bf16.mxu0 %v455
  %1187 = vmatmul.mubr.bf16.gmra.mrb[0].mxu0 %v454
  %v1188 = vpop.f32.mrb[0].mxu0
  %v1189 = vadd.f32 0.0, %v1188
  %v1190 = vpop.f32.mrb[0].mxu0
  %v1191 = vpop.f32.mrb[0].mxu0
  %v1192 = vadd.f32 0.0, %v1191
  %v1193 = vpop.f32.mrb[0].mxu0
  %1194 = vmatprep.mubr.bf16.mxu0 %v468
  %1195 = vmatmul.mubr.bf16.gmra.mrb[0].mxu0 %v467
  %v1196 = vpop.f32.mrb[0].mxu0
  %v1197 = vadd.f32 0.0, %v1196
  %v1198 = vpop.f32.mrb[0].mxu0
  %v1199 = vpop.f32.mrb[0].mxu0
  %v1200 = vadd.f32 0.0, %v1199
  %v1201 = vpop.f32.mrb[0].mxu0
  %1202 = vdwg.mxu0
  %1203 = vmatprep.subr.bf16.mxu0 0
  %1204 = vmatpush1.bf16.msra.mxu0 %v938
  %1205 = vmatprep.subr.bf16.mxu0 0
  %1206 = vmatpush1.bf16.msra.mxu0 %v939
  %1207 = vmatprep.subr.bf16.mxu0 0
  %1208 = vmatpush1.bf16.msra.mxu0 %v940
  %1209 = vmatprep.subr.bf16.mxu0 0
  %1210 = vmatpush1.bf16.msra.mxu0 %v941
  %1211 = vmatprep.subr.bf16.mxu0 0
  %1212 = vmatpush1.bf16.msra.mxu0 %v942
  %1213 = vmatprep.subr.bf16.mxu0 0
  %1214 = vmatpush1.bf16.msra.mxu0 %v943
  %1215 = vmatprep.subr.bf16.mxu0 0
  %1216 = vmatpush1.bf16.msra.mxu0 %v944
  %1217 = vmatprep.subr.bf16.mxu0 0
  %1218 = vmatpush1.bf16.msra.mxu0 %v945
  %1219 = vmatprep.subr.bf16.mxu0 0
  %1220 = vmatpush1.bf16.msra.mxu0 %v946
  %1221 = vmatprep.subr.bf16.mxu0 0
  %1222 = vmatpush1.bf16.msra.mxu0 %v947
  %1223 = vmatprep.subr.bf16.mxu0 0
  %1224 = vmatpush1.bf16.msra.mxu0 %v948
  %1225 = vmatprep.subr.bf16.mxu0 0
  %1226 = vmatpush1.bf16.msra.mxu0 %v949
  %1227 = vmatprep.subr.bf16.mxu0 0
  %1228 = vmatpush1.bf16.msra.mxu0 %v950
  %1229 = vmatprep.subr.bf16.mxu0 0
  %1230 = vmatpush1.bf16.msra.mxu0 %v951
  %1231 = vmatprep.subr.bf16.mxu0 0
  %1232 = vmatpush1.bf16.msra.mxu0 %v952
  %1233 = vmatprep.subr.bf16.mxu0 0
  %1234 = vmatpush1.bf16.msra.mxu0 %v953
  %1235 = vmatprep.mubr.bf16.mxu0 %v431
  %1236 = vmatmul.mubr.bf16.gmra.mrb[0].mxu0 %v430
  %v1237 = vpop.f32.mrb[0].mxu0
  %v1238 = vadd.f32 %v1173, %v1237
  %v1239 = vpop.f32.mrb[0].mxu0
  %v1240 = vpop.f32.mrb[0].mxu0
  %v1241 = vadd.f32 %v1176, %v1240
  %v1242 = vpop.f32.mrb[0].mxu0
  %1243 = vmatprep.mubr.bf16.mxu0 %v444
  %1244 = vmatmul.mubr.bf16.gmra.mrb[0].mxu0 %v443
  %v1245 = vpop.f32.mrb[0].mxu0
  %v1246 = vadd.f32 %v1181, %v1245
  %v1247 = vpop.f32.mrb[0].mxu0
  %v1248 = vpop.f32.mrb[0].mxu0
  %v1249 = vadd.f32 %v1184, %v1248
  %v1250 = vpop.f32.mrb[0].mxu0
  %1251 = vmatprep.mubr.bf16.mxu0 %v457
  %1252 = vmatmul.mubr.bf16.gmra.mrb[0].mxu0 %v456
  %v1253 = vpop.f32.mrb[0].mxu0
  %v1254 = vadd.f32 %v1189, %v1253
  %v1255 = vpop.f32.mrb[0].mxu0
  %v1256 = vpop.f32.mrb[0].mxu0
  %v1257 = vadd.f32 %v1192, %v1256
  %v1258 = vpop.f32.mrb[0].mxu0
  %1259 = vmatprep.mubr.bf16.mxu0 %v470
  %1260 = vmatmul.mubr.bf16.gmra.mrb[0].mxu0 %v469
  %v1261 = vpop.f32.mrb[0].mxu0
  %v1262 = vadd.f32 %v1197, %v1261
  %v1263 = vpop.f32.mrb[0].mxu0
  %v1264 = vpop.f32.mrb[0].mxu0
  %v1265 = vadd.f32 %v1200, %v1264
  %v1266 = vpop.f32.mrb[0].mxu0
  %1267 = vdwg.mxu0
  %1268 = vmatprep.subr.bf16.mxu0 0
  %1269 = vmatpush1.bf16.msra.mxu0 %v954
  %1270 = vmatprep.subr.bf16.mxu0 0
  %1271 = vmatpush1.bf16.msra.mxu0 %v955
  %1272 = vmatprep.subr.bf16.mxu0 0
  %1273 = vmatpush1.bf16.msra.mxu0 %v956
  %1274 = vmatprep.subr.bf16.mxu0 0
  %1275 = vmatpush1.bf16.msra.mxu0 %v957
  %1276 = vmatprep.subr.bf16.mxu0 0
  %1277 = vmatpush1.bf16.msra.mxu0 %v958
  %1278 = vmatprep.subr.bf16.mxu0 0
  %1279 = vmatpush1.bf16.msra.mxu0 %v959
  %1280 = vmatprep.subr.bf16.mxu0 0
  %1281 = vmatpush1.bf16.msra.mxu0 %v960
  %1282 = vmatprep.subr.bf16.mxu0 0
  %1283 = vmatpush1.bf16.msra.mxu0 %v961
  %1284 = vmatprep.subr.bf16.mxu0 0
  %1285 = vmatpush1.bf16.msra.mxu0 %v962
  %1286 = vmatprep.subr.bf16.mxu0 0
  %1287 = vmatpush1.bf16.msra.mxu0 %v963
  %1288 = vmatprep.subr.bf16.mxu0 0
  %1289 = vmatpush1.bf16.msra.mxu0 %v964
  %1290 = vmatprep.subr.bf16.mxu0 0
  %1291 = vmatpush1.bf16.msra.mxu0 %v965
  %1292 = vmatprep.subr.bf16.mxu0 0
  %1293 = vmatpush1.bf16.msra.mxu0 %v966
  %1294 = vmatprep.subr.bf16.mxu0 0
  %1295 = vmatpush1.bf16.msra.mxu0 %v967
  %1296 = vmatprep.subr.bf16.mxu0 0
  %1297 = vmatpush1.bf16.msra.mxu0 %v968
  %1298 = vmatprep.subr.bf16.mxu0 0
  %1299 = vmatpush1.bf16.msra.mxu0 %v969
  %1300 = vmatprep.mubr.bf16.mxu0 %v433
  %1301 = vmatmul.mubr.bf16.gmra.mrb[0].mxu0 %v432
  %v1302 = vpop.f32.mrb[0].mxu0
  %v1303 = vadd.f32 %v1238, %v1302
  %v1304 = vpop.f32.mrb[0].mxu0
  %v1305 = vpop.f32.mrb[0].mxu0
  %v1306 = vadd.f32 %v1241, %v1305
  %v1307 = vpop.f32.mrb[0].mxu0
  %1308 = vmatprep.mubr.bf16.mxu0 %v446
  %1309 = vmatmul.mubr.bf16.gmra.mrb[0].mxu0 %v445
  %v1310 = vpop.f32.mrb[0].mxu0
  %v1311 = vadd.f32 %v1246, %v1310
  %v1312 = vpop.f32.mrb[0].mxu0
  %v1313 = vpop.f32.mrb[0].mxu0
  %v1314 = vadd.f32 %v1249, %v1313
  %v1315 = vpop.f32.mrb[0].mxu0
  %1316 = vmatprep.mubr.bf16.mxu0 %v459
  %1317 = vmatmul.mubr.bf16.gmra.mrb[0].mxu0 %v458
  %v1318 = vpop.f32.mrb[0].mxu0
  %v1319 = vadd.f32 %v1254, %v1318
  %v1320 = vpop.f32.mrb[0].mxu0
  %v1321 = vpop.f32.mrb[0].mxu0
  %v1322 = vadd.f32 %v1257, %v1321
  %v1323 = vpop.f32.mrb[0].mxu0
  %1324 = vmatprep.mubr.bf16.mxu0 %v472
  %1325 = vmatmul.mubr.bf16.gmra.mrb[0].mxu0 %v471
  %v1326 = vpop.f32.mrb[0].mxu0
  %v1327 = vadd.f32 %v1262, %v1326
  %v1328 = vpop.f32.mrb[0].mxu0
  %v1329 = vpop.f32.mrb[0].mxu0
  %v1330 = vadd.f32 %v1265, %v1329
  %v1331 = vpop.f32.mrb[0].mxu0
  %1332 = vdwg.mxu0
  %1333 = vmatprep.subr.bf16.mxu0 0
  %1334 = vmatpush1.bf16.msra.mxu0 %v970
  %1335 = vmatprep.subr.bf16.mxu0 0
  %1336 = vmatpush1.bf16.msra.mxu0 %v971
  %1337 = vmatprep.subr.bf16.mxu0 0
  %1338 = vmatpush1.bf16.msra.mxu0 %v972
  %1339 = vmatprep.subr.bf16.mxu0 0
  %1340 = vmatpush1.bf16.msra.mxu0 %v973
  %1341 = vmatprep.subr.bf16.mxu0 0
  %1342 = vmatpush1.bf16.msra.mxu0 %v974
  %1343 = vmatprep.subr.bf16.mxu0 0
  %1344 = vmatpush1.bf16.msra.mxu0 %v975
  %1345 = vmatprep.subr.bf16.mxu0 0
  %1346 = vmatpush1.bf16.msra.mxu0 %v976
  %1347 = vmatprep.subr.bf16.mxu0 0
  %1348 = vmatpush1.bf16.msra.mxu0 %v977
  %1349 = vmatprep.subr.bf16.mxu0 0
  %1350 = vmatpush1.bf16.msra.mxu0 %v978
  %1351 = vmatprep.subr.bf16.mxu0 0
  %1352 = vmatpush1.bf16.msra.mxu0 %v979
  %1353 = vmatprep.subr.bf16.mxu0 0
  %1354 = vmatpush1.bf16.msra.mxu0 %v980
  %1355 = vmatprep.subr.bf16.mxu0 0
  %1356 = vmatpush1.bf16.msra.mxu0 %v981
  %1357 = vmatprep.subr.bf16.mxu0 0
  %1358 = vmatpush1.bf16.msra.mxu0 %v982
  %1359 = vmatprep.subr.bf16.mxu0 0
  %1360 = vmatpush1.bf16.msra.mxu0 %v983
  %1361 = vmatprep.subr.bf16.mxu0 0
  %1362 = vmatpush1.bf16.msra.mxu0 %v984
  %1363 = vmatprep.subr.bf16.mxu0 0
  %1364 = vmatpush1.bf16.msra.mxu0 %v985
  %1365 = vmatprep.mubr.bf16.mxu0 %v435
  %1366 = vmatmul.mubr.bf16.gmra.mrb[0].mxu0 %v434
  %v1367 = vpop.f32.mrb[0].mxu0
  %v1368 = vadd.f32 %v1303, %v1367
  %v1369 = vpop.f32.mrb[0].mxu0
  %v1370 = vpop.f32.mrb[0].mxu0
  %v1371 = vadd.f32 %v1306, %v1370
  %v1372 = vpop.f32.mrb[0].mxu0
  %1373 = vmatprep.mubr.bf16.mxu0 %v448
  %1374 = vmatmul.mubr.bf16.gmra.mrb[0].mxu0 %v447
  %v1375 = vpop.f32.mrb[0].mxu0
  %v1376 = vadd.f32 %v1311, %v1375
  %v1377 = vpop.f32.mrb[0].mxu0
  %v1378 = vpop.f32.mrb[0].mxu0
  %v1379 = vadd.f32 %v1314, %v1378
  %v1380 = vpop.f32.mrb[0].mxu0
  %1381 = vmatprep.mubr.bf16.mxu0 %v461
  %1382 = vmatmul.mubr.bf16.gmra.mrb[0].mxu0 %v460
  %v1383 = vpop.f32.mrb[0].mxu0
  %v1384 = vadd.f32 %v1319, %v1383
  %v1385 = vpop.f32.mrb[0].mxu0
  %v1386 = vpop.f32.mrb[0].mxu0
  %v1387 = vadd.f32 %v1322, %v1386
  %v1388 = vpop.f32.mrb[0].mxu0
  %1389 = vmatprep.mubr.bf16.mxu0 %v474
  %1390 = vmatmul.mubr.bf16.gmra.mrb[0].mxu0 %v473
  %v1391 = vpop.f32.mrb[0].mxu0
  %v1392 = vadd.f32 %v1327, %v1391
  %v1393 = vpop.f32.mrb[0].mxu0
  %v1394 = vpop.f32.mrb[0].mxu0
  %v1395 = vadd.f32 %v1330, %v1394
  %v1396 = vpop.f32.mrb[0].mxu0
  %1397 = vdwg.mxu0
  %1398 = vmatprep.subr.bf16.mxu0 0
  %1399 = vmatpush1.bf16.msra.mxu0 %v986
  %1400 = vmatprep.subr.bf16.mxu0 0
  %1401 = vmatpush1.bf16.msra.mxu0 %v987
  %1402 = vmatprep.subr.bf16.mxu0 0
  %1403 = vmatpush1.bf16.msra.mxu0 %v988
  %1404 = vmatprep.subr.bf16.mxu0 0
  %1405 = vmatpush1.bf16.msra.mxu0 %v989
  %1406 = vmatprep.subr.bf16.mxu0 0
  %1407 = vmatpush1.bf16.msra.mxu0 %v990
  %1408 = vmatprep.subr.bf16.mxu0 0
  %1409 = vmatpush1.bf16.msra.mxu0 %v991
  %1410 = vmatprep.subr.bf16.mxu0 0
  %1411 = vmatpush1.bf16.msra.mxu0 %v992
  %1412 = vmatprep.subr.bf16.mxu0 0
  %1413 = vmatpush1.bf16.msra.mxu0 %v993
  %1414 = vmatprep.subr.bf16.mxu0 0
  %1415 = vmatpush1.bf16.msra.mxu0 %v994
  %1416 = vmatprep.subr.bf16.mxu0 0
  %1417 = vmatpush1.bf16.msra.mxu0 %v995
  %1418 = vmatprep.subr.bf16.mxu0 0
  %1419 = vmatpush1.bf16.msra.mxu0 %v996
  %1420 = vmatprep.subr.bf16.mxu0 0
  %1421 = vmatpush1.bf16.msra.mxu0 %v997
  %1422 = vmatprep.subr.bf16.mxu0 0
  %1423 = vmatpush1.bf16.msra.mxu0 %v998
  %1424 = vmatprep.subr.bf16.mxu0 0
  %1425 = vmatpush1.bf16.msra.mxu0 %v999
  %1426 = vmatprep.subr.bf16.mxu0 0
  %1427 = vmatpush1.bf16.msra.mxu0 %v1000
  %1428 = vmatprep.subr.bf16.mxu0 0
  %1429 = vmatpush1.bf16.msra.mxu0 %v1001
  %1430 = vmatprep.mubr.bf16.mxu0 %v437
  %1431 = vmatmul.mubr.bf16.gmra.mrb[0].mxu0 %v436
  %v1432 = vpop.f32.mrb[0].mxu0
  %v1433 = vadd.f32 %v1368, %v1432
  %v1434 = vpop.f32.mrb[0].mxu0
  %v1435 = vpop.f32.mrb[0].mxu0
  %v1436 = vadd.f32 %v1371, %v1435
  %v1437 = vpop.f32.mrb[0].mxu0
  %1438 = vmatprep.mubr.bf16.mxu0 %v450
  %1439 = vmatmul.mubr.bf16.gmra.mrb[0].mxu0 %v449
  %v1440 = vpop.f32.mrb[0].mxu0
  %v1441 = vadd.f32 %v1376, %v1440
  %v1442 = vpop.f32.mrb[0].mxu0
  %v1443 = vpop.f32.mrb[0].mxu0
  %v1444 = vadd.f32 %v1379, %v1443
  %v1445 = vpop.f32.mrb[0].mxu0
  %1446 = vmatprep.mubr.bf16.mxu0 %v463
  %1447 = vmatmul.mubr.bf16.gmra.mrb[0].mxu0 %v462
  %v1448 = vpop.f32.mrb[0].mxu0
  %v1449 = vadd.f32 %v1384, %v1448
  %v1450 = vpop.f32.mrb[0].mxu0
  %v1451 = vpop.f32.mrb[0].mxu0
  %v1452 = vadd.f32 %v1387, %v1451
  %v1453 = vpop.f32.mrb[0].mxu0
  %1454 = vmatprep.mubr.bf16.mxu0 %v476
  %1455 = vmatmul.mubr.bf16.gmra.mrb[0].mxu0 %v475
  %v1456 = vpop.f32.mrb[0].mxu0
  %v1457 = vadd.f32 %v1392, %v1456
  %v1458 = vpop.f32.mrb[0].mxu0
  %v1459 = vpop.f32.mrb[0].mxu0
  %v1460 = vadd.f32 %v1395, %v1459
  %v1461 = vpop.f32.mrb[0].mxu0
  %1462 = vdwg.mxu0
  %1463 = vmatprep.subr.bf16.mxu0 0
  %1464 = vmatpush1.bf16.msra.mxu0 %v1002
  %1465 = vmatprep.subr.bf16.mxu0 0
  %1466 = vmatpush1.bf16.msra.mxu0 %v1003
  %1467 = vmatprep.subr.bf16.mxu0 0
  %1468 = vmatpush1.bf16.msra.mxu0 %v1004
  %1469 = vmatprep.subr.bf16.mxu0 0
  %1470 = vmatpush1.bf16.msra.mxu0 %v1005
  %1471 = vmatprep.subr.bf16.mxu0 0
  %1472 = vmatpush1.bf16.msra.mxu0 %v1006
  %1473 = vmatprep.subr.bf16.mxu0 0
  %1474 = vmatpush1.bf16.msra.mxu0 %v1007
  %1475 = vmatprep.subr.bf16.mxu0 0
  %1476 = vmatpush1.bf16.msra.mxu0 %v1008
  %1477 = vmatprep.subr.bf16.mxu0 0
  %1478 = vmatpush1.bf16.msra.mxu0 %v1009
  %1479 = vmatprep.subr.bf16.mxu0 0
  %1480 = vmatpush1.bf16.msra.mxu0 %v1010
  %1481 = vmatprep.subr.bf16.mxu0 0
  %1482 = vmatpush1.bf16.msra.mxu0 %v1011
  %1483 = vmatprep.subr.bf16.mxu0 0
  %1484 = vmatpush1.bf16.msra.mxu0 %v1012
  %1485 = vmatprep.subr.bf16.mxu0 0
  %1486 = vmatpush1.bf16.msra.mxu0 %v1013
  %1487 = vmatprep.subr.bf16.mxu0 0
  %1488 = vmatpush1.bf16.msra.mxu0 %v1014
  %1489 = vmatprep.subr.bf16.mxu0 0
  %1490 = vmatpush1.bf16.msra.mxu0 %v1015
  %1491 = vmatprep.subr.bf16.mxu0 0
  %1492 = vmatpush1.bf16.msra.mxu0 %v1016
  %1493 = vmatprep.subr.bf16.mxu0 0
  %1494 = vmatpush1.bf16.msra.mxu0 %v1017
  %1495 = vmatprep.mubr.bf16.mxu0 %v439
  %1496 = vmatmul.mubr.bf16.gmra.mrb[0].mxu0 %v438
  %v1497 = vpop.f32.mrb[0].mxu0
  %v1498 = vadd.f32 %v1433, %v1497
  %v1499 = vpop.f32.mrb[0].mxu0
  %v1500 = vpop.f32.mrb[0].mxu0
  %v1501 = vadd.f32 %v1436, %v1500
  %v1502 = vpop.f32.mrb[0].mxu0
  %1503 = vmatprep.mubr.bf16.mxu0 %v452
  %1504 = vmatmul.mubr.bf16.gmra.mrb[0].mxu0 %v451
  %v1505 = vpop.f32.mrb[0].mxu0
  %v1506 = vadd.f32 %v1441, %v1505
  %v1507 = vpop.f32.mrb[0].mxu0
  %v1508 = vpop.f32.mrb[0].mxu0
  %v1509 = vadd.f32 %v1444, %v1508
  %v1510 = vpop.f32.mrb[0].mxu0
  %1511 = vmatprep.mubr.bf16.mxu0 %v465
  %1512 = vmatmul.mubr.bf16.gmra.mrb[0].mxu0 %v464
  %v1513 = vpop.f32.mrb[0].mxu0
  %v1514 = vadd.f32 %v1449, %v1513
  %v1515 = vpop.f32.mrb[0].mxu0
  %v1516 = vpop.f32.mrb[0].mxu0
  %v1517 = vadd.f32 %v1452, %v1516
  %v1518 = vpop.f32.mrb[0].mxu0
  %1519 = vmatprep.mubr.bf16.mxu0 %v478
  %1520 = vmatmul.mubr.bf16.gmra.mrb[0].mxu0 %v477
  %v1521 = vpop.f32.mrb[0].mxu0
  %v1522 = vadd.f32 %v1457, %v1521
  %v1523 = vpop.f32.mrb[0].mxu0
  %v1524 = vpop.f32.mrb[0].mxu0
  %v1525 = vadd.f32 %v1460, %v1524
  %v1526 = vpop.f32.mrb[0].mxu0
  %1527 = vdwg.mxu0
  %1528 = vmatprep.subr.bf16.mxu0 0
  %1529 = vmatpush1.bf16.msra.mxu0 %v1018
  %1530 = vmatprep.subr.bf16.mxu0 0
  %1531 = vmatpush1.bf16.msra.mxu0 %v1019
  %1532 = vmatprep.subr.bf16.mxu0 0
  %1533 = vmatpush1.bf16.msra.mxu0 %v1136
  %1534 = vmatprep.subr.bf16.mxu0 0
  %1535 = vmatpush1.bf16.msra.mxu0 0
  %1536 = vmatprep.subr.bf16.mxu0 0
  %1537 = vmatpush1.bf16.msra.mxu0 0
  %1538 = vmatprep.subr.bf16.mxu0 0
  %1539 = vmatpush1.bf16.msra.mxu0 0
  %1540 = vmatprep.subr.bf16.mxu0 0
  %1541 = vmatpush1.bf16.msra.mxu0 0
  %1542 = vmatprep.subr.bf16.mxu0 0
  %1543 = vmatpush1.bf16.msra.mxu0 0
  %1544 = vmatprep.subr.bf16.mxu0 0
  %1545 = vmatpush1.bf16.msra.mxu0 0
  %1546 = vmatprep.subr.bf16.mxu0 0
  %1547 = vmatpush1.bf16.msra.mxu0 0
  %1548 = vmatprep.subr.bf16.mxu0 0
  %1549 = vmatpush1.bf16.msra.mxu0 0
  %1550 = vmatprep.subr.bf16.mxu0 0
  %1551 = vmatpush1.bf16.msra.mxu0 0
  %1552 = vmatprep.subr.bf16.mxu0 0
  %1553 = vmatpush1.bf16.msra.mxu0 0
  %1554 = vmatprep.subr.bf16.mxu0 0
  %1555 = vmatpush1.bf16.msra.mxu0 0
  %1556 = vmatprep.subr.bf16.mxu0 0
  %1557 = vmatpush1.bf16.msra.mxu0 0
  %1558 = vmatprep.subr.bf16.mxu0 0
  %1559 = vmatpush1.bf16.msra.mxu0 0
  %1560 = vmatprep.mubr.bf16.mxu0 0
  %1561 = vmatmul.mubr.bf16.gmra.mrb[0].mxu0 %v1121
  %v1562 = vpop.f32.mrb[0].mxu0
  %v1563 = vadd.f32 %v1498, %v1562
  %v1564 = vpop.f32.mrb[0].mxu0
  %v1565 = vpop.f32.mrb[0].mxu0
  %v1566 = vadd.f32 %v1501, %v1565
  %v1567 = vpop.f32.mrb[0].mxu0
  %1568 = vmatprep.mubr.bf16.mxu0 0
  %1569 = vmatmul.mubr.bf16.gmra.mrb[0].mxu0 %v1124
  %v1570 = vpop.f32.mrb[0].mxu0
  %v1571 = vadd.f32 %v1506, %v1570
  %v1572 = vpop.f32.mrb[0].mxu0
  %v1573 = vpop.f32.mrb[0].mxu0
  %v1574 = vadd.f32 %v1509, %v1573
  %v1575 = vpop.f32.mrb[0].mxu0
  %1576 = vmatprep.mubr.bf16.mxu0 0
  %1577 = vmatmul.mubr.bf16.gmra.mrb[0].mxu0 %v1127
  %v1578 = vpop.f32.mrb[0].mxu0
  %v1579 = vadd.f32 %v1514, %v1578
  %v1580 = vpop.f32.mrb[0].mxu0
  %v1581 = vpop.f32.mrb[0].mxu0
  %v1582 = vadd.f32 %v1517, %v1581
  %v1583 = vpop.f32.mrb[0].mxu0
  %1584 = vmatprep.mubr.bf16.mxu0 0
  %1585 = vmatmul.mubr.bf16.gmra.mrb[0].mxu0 %v1130
  %v1586 = vpop.f32.mrb[0].mxu0
  %v1587 = vadd.f32 %v1522, %v1586
  %v1588 = vpop.f32.mrb[0].mxu0
  %v1589 = vpop.f32.mrb[0].mxu0
  %v1590 = vadd.f32 %v1525, %v1589
  %v1591 = vpop.f32.mrb[0].mxu0
  %1592 = vdwg.mxu0
  %v1593 = vmax.f32 %v1563, 0.0
  %v1594 = vmax.f32 %v1566, 0.0
  %v1595 = vmax.f32 %v1571, 0.0
  %v1596 = vmax.f32 %v1574, 0.0
  %v1597 = vmax.f32 %v1579, 0.0
  %v1598 = vmax.f32 %v1582, 0.0
  %v1599 = vmax.f32 %v1587, 0.0
  %v1600 = vmax.f32 %v1590, 0.0
  %v1601 = vld [vmem:[%s2] sm:$0xff]
  %v1602 = vld [vmem:[%s2 + $0x8] sm:$0xff]
  %v1603 = vld [vmem:[%s2 + $0x10] sm:$0xff]
  %v1604 = vld [vmem:[%s2 + $0x18] sm:$0xff]
  %v1605 = vld [vmem:[%s2 + $0x20] sm:$0xff]
  %v1606 = vld [vmem:[%s2 + $0x28] sm:$0xff]
  %v1607 = vld [vmem:[%s2 + $0x30] sm:$0xff]
  %v1608 = vld [vmem:[%s2 + $0x38] sm:$0xff]
  %1610 = vset.pattern.permute.xlu0 0
  %1611 = vperm.xlu0 %1610, %v1601
  %v1612 = vpop.permute.xlu0 %1611
  %1615 = vset.pattern.permute.xlu0 0
  %1616 = vperm.xlu0 %1615, %v1602
  %v1617 = vpop.permute.xlu0 %1616
  %1620 = vset.pattern.permute.xlu0 0
  %1621 = vperm.xlu0 %1620, %v1603
  %v1622 = vpop.permute.xlu0 %1621
  %1625 = vset.pattern.permute.xlu0 0
  %1626 = vperm.xlu0 %1625, %v1604
  %v1627 = vpop.permute.xlu0 %1626
  %1630 = vset.pattern.permute.xlu0 0
  %1631 = vperm.xlu0 %1630, %v1605
  %v1632 = vpop.permute.xlu0 %1631
  %1635 = vset.pattern.permute.xlu0 0
  %1636 = vperm.xlu0 %1635, %v1606
  %v1637 = vpop.permute.xlu0 %1636
  %1640 = vset.pattern.permute.xlu0 0
  %1641 = vperm.xlu0 %1640, %v1607
  %v1642 = vpop.permute.xlu0 %1641
  %1645 = vset.pattern.permute.xlu0 0
  %1646 = vperm.xlu0 %1645, %v1608
  %v1647 = vpop.permute.xlu0 %1646
  %v1649 = vmul.f32 %v1593, %v1612
  %v1650 = vmul.f32 %v1594, %v1617
  %v1651 = vmul.f32 %v1595, %v1622
  %v1652 = vmul.f32 %v1596, %v1627
  %v1653 = vmul.f32 %v1597, %v1632
  %v1654 = vmul.f32 %v1598, %v1637
  %v1655 = vmul.f32 %v1599, %v1642
  %v1656 = vmul.f32 %v1600, %v1647
  %1657 = vset.pattern.permute.xlu0 1
  %1658 = vperm.xlu0 %1657, %v1601
  %v1659 = vpop.permute.xlu0 %1658
  %1661 = vset.pattern.permute.xlu0 1
  %1662 = vperm.xlu0 %1661, %v1602
  %v1663 = vpop.permute.xlu0 %1662
  %1665 = vset.pattern.permute.xlu0 1
  %1666 = vperm.xlu0 %1665, %v1603
  %v1667 = vpop.permute.xlu0 %1666
  %1669 = vset.pattern.permute.xlu0 1
  %1670 = vperm.xlu0 %1669, %v1604
  %v1671 = vpop.permute.xlu0 %1670
  %1673 = vset.pattern.permute.xlu0 1
  %1674 = vperm.xlu0 %1673, %v1605
  %v1675 = vpop.permute.xlu0 %1674
  %1677 = vset.pattern.permute.xlu0 1
  %1678 = vperm.xlu0 %1677, %v1606
  %v1679 = vpop.permute.xlu0 %1678
  %1681 = vset.pattern.permute.xlu0 1
  %1682 = vperm.xlu0 %1681, %v1607
  %v1683 = vpop.permute.xlu0 %1682
  %1685 = vset.pattern.permute.xlu0 1
  %1686 = vperm.xlu0 %1685, %v1608
  %v1687 = vpop.permute.xlu0 %1686
  %v1689 = vadd.f32 %v1649, %v1659
  %v1690 = vadd.f32 %v1650, %v1663
  %v1691 = vadd.f32 %v1651, %v1667
  %v1692 = vadd.f32 %v1652, %v1671
  %v1693 = vadd.f32 %v1653, %v1675
  %v1694 = vadd.f32 %v1654, %v1679
  %v1695 = vadd.f32 %v1655, %v1683
  %v1696 = vadd.f32 %v1656, %v1687
  %v1697 = vpack.c.bf16 %v1690, %v1689
  %v1698 = vpack.c.bf16 %v1692, %v1691
  %v1699 = vpack.c.bf16 %v1694, %v1693
  %v1700 = vpack.c.bf16 %v1696, %v1695
  %v1705 = vunpack.c.l.b16 %v1697
  %v1706 = vunpack.c.h.b16 %v1697
  %v1707 = vunpack.c.l.b16 %v1698
  %v1708 = vunpack.c.h.b16 %v1698
  %v1709 = vunpack.c.l.b16 %v1699
  %v1710 = vunpack.c.h.b16 %v1699
  %v1711 = vunpack.c.l.b16 %v1700
  %v1712 = vunpack.c.h.b16 %v1700
  %v1713 = vpack.c.b16 %v1705, %v1705
  %v1714 = vpack.c.b16 %v1706, %v1706
  %v1715 = vpack.c.b16 %v1707, %v1707
  %v1716 = vpack.c.b16 %v1708, %v1708
  %v1717 = vpack.c.b16 %v1709, %v1709
  %v1718 = vpack.c.b16 %v1710, %v1710
  %v1719 = vpack.c.b16 %v1711, %v1711
  %v1720 = vpack.c.b16 %v1712, %v1712
  %vm1729 = vcmask 60416
  %1730 = vst.msk [vmem:[%s3] sm:$0xf] %vm1729, %v1713
  %1731 = vst.msk [vmem:[%s3 + $0x4] sm:$0xf] %vm1729, %v1714
  %1732 = vst.msk [vmem:[%s3 + $0x8] sm:$0xf] %vm1729, %v1715
  %1733 = vst.msk [vmem:[%s3 + $0xc] sm:$0xf] %vm1729, %v1716
  %1734 = vst.msk [vmem:[%s3 + $0x10] sm:$0xf] %vm1729, %v1717
  %1735 = vst.msk [vmem:[%s3 + $0x14] sm:$0xf] %vm1729, %v1718
  %1736 = vst.msk [vmem:[%s3 + $0x18] sm:$0xf] %vm1729, %v1719
  %1737 = vst.msk [vmem:[%s3 + $0x1c] sm:$0xf] %vm1729, %v1720
  // Predicated region
  $region14: #{cnn_forward.5} parent=0 // pred_check
    _
  $region15: #{cnn_forward.5} parent=0 // pred_check_branch
    %1739 = sbr.rel (0) target = $region17
  $region16: #{cnn_forward.5} parent=0 // pred_region
    _
  $region17: #{cnn_forward.5} parent=0 // pred_fallthru
    _
  // Predicated region
  $region18: #{cnn_forward.5} parent=0 // pred_check
    _
  $region19: #{cnn_forward.5} parent=0 // pred_check_branch
    %1741 = sbr.rel (0) target = $region21
  $region20: #{cnn_forward.5} parent=0 // pred_region
    _
  $region21: #{cnn_forward.5} parent=0 // pred_fallthru
    _

</llo_original>
